<compile_context>
chip_gen: v6e
topology: v6e:2x2x1
jax: 0.10.0
libtpu: 0.0.40
codegen_flags: <defaults>
</compile_context>

<pallas_src>
import jax
import jax.numpy as jnp
from jax import lax
from jax.experimental import pallas as pl
from jax.experimental.pallas import tpu as pltpu

EPS = 1e-5
LRELU_SLOPE = 0.2


def _round_up(a, b):
    return ((a + b - 1) // b) * b


# ----------------------------- Pallas kernels ------------------------------

def _conv1_lrelu_kernel(p_ref, w_ref, o_ref):
    # p_ref: (TR, 32) bf16 im2col patches (27 real cols, col 27 = 1.0 for bias)
    # w_ref: (32, 128) bf16 resident weight (row 27 carries the conv bias)
    # o_ref: (TR, 128) bf16 hidden output
    h = jnp.dot(p_ref[...], w_ref[...], preferred_element_type=jnp.float32)
    o_ref[...] = jnp.where(h >= 0.0, h, LRELU_SLOPE * h).astype(o_ref.dtype)


def _spade_out_kernel(x_ref, h_ref, w_ref, b_ref, o_ref, pad_ref):
    # x_ref  : (1, C, H*(W+2))  f32  x, zero-padded along W to a W+2 row stride
    # h_ref  : (1, H, W, 128)   bf16 hidden feature map (unpadded)
    # w_ref  : (9, 128, 2C)     bf16 fused gamma|beta conv weights per 3x3 tap
    # b_ref  : (1, 2C)          f32  fused gamma|beta bias
    # o_ref  : (1, C, H*(W+2))  f32  modulated output, NCHW with W+2 row stride
    # pad_ref: (PROWS, 128)     f32  flat halo-padded hidden scratch (VMEM)
    H = h_ref.shape[1]
    W = h_ref.shape[2]
    Wp = W + 2
    HWp = H * Wp
    C = x_ref.shape[1]

    # ---- build the zero halo in VMEM (no padded hidden slab in HBM) ----
    pad_ref[...] = jnp.zeros_like(pad_ref)
    for i in range(H):
        pad_ref[pl.ds((i + 1) * Wp + 1, W), :] = h_ref[0, i].astype(jnp.float32)

    # ---- InstanceNorm2d(affine=False): exact two-pass stats per channel ----
    x = x_ref[0]                                    # (C, HWp); zeros in pad cols
    inv_hw = 1.0 / (H * W)
    mean = jnp.sum(x, axis=-1, keepdims=True) * inv_hw
    d = x - mean
    # the 2*H zero-padded columns each contribute mean^2 to sum(d^2); remove it
    ssq = jnp.sum(d * d, axis=-1, keepdims=True) - (2.0 * H) * mean * mean
    var = jnp.maximum(ssq * inv_hw, 0.0)
    normalized = d * lax.rsqrt(var + EPS)           # (C, HWp)

    # ---- conv_gamma|conv_beta: 9 contiguous shifted slices, value-accumulated ----
    acc = None
    for kh in range(3):
        for kw in range(3):
            lhs = pad_ref[pl.ds(kh * Wp + kw, HWp), :].astype(jnp.bfloat16)
            part = jnp.dot(lhs, w_ref[kh * 3 + kw],
                           preferred_element_type=jnp.float32)   # (HWp, 2C)
            acc = part if acc is None else acc + part

    # bias added pre-transpose; transpose touches only the 2C useful columns
    gb = (acc + b_ref[...]).T                       # (2C, HWp) f32
    gamma = gb[:C]
    beta = gb[C:2 * C]
    o_ref[0] = normalized * (1.0 + gamma) + beta


# ------------------------------- JAX glue ----------------------------------

def bilinear_resize_align_corners(y, out_h, out_w):
    # y: (N, C, Hin, Win) -> (N, C, out_h, out_w); matches F.interpolate(align_corners=True)
    N, C, Hin, Win = y.shape
    sh = (jnp.arange(out_h, dtype=jnp.float32) * ((Hin - 1) / (out_h - 1))
          if out_h > 1 else jnp.zeros((out_h,), jnp.float32))
    sw = (jnp.arange(out_w, dtype=jnp.float32) * ((Win - 1) / (out_w - 1))
          if out_w > 1 else jnp.zeros((out_w,), jnp.float32))
    h0 = jnp.floor(sh).astype(jnp.int32)
    w0 = jnp.floor(sw).astype(jnp.int32)
    h1 = jnp.minimum(h0 + 1, Hin - 1)
    w1 = jnp.minimum(w0 + 1, Win - 1)
    fh = (sh - h0.astype(jnp.float32))[:, None]
    fw = (sw - w0.astype(jnp.float32))[None, :]
    tl = y[:, :, h0][:, :, :, w0]
    tr = y[:, :, h0][:, :, :, w1]
    bl = y[:, :, h1][:, :, :, w0]
    br = y[:, :, h1][:, :, :, w1]
    top = tl * (1.0 - fw) + tr * fw
    bot = bl * (1.0 - fw) + br * fw
    return top * (1.0 - fh) + bot * fh


def im2col_3x3(x_nhwc):
    # (N, H, W, Cin) -> (N*H*W, 9*Cin), patch order = (kh, kw, cin)
    N, H, W, Cin = x_nhwc.shape
    xp = jnp.pad(x_nhwc, ((0, 0), (1, 1), (1, 1), (0, 0)))
    cols = [xp[:, ki:ki + H, kj:kj + W, :] for ki in range(3) for kj in range(3)]
    patches = jnp.stack(cols, axis=3)              # (N, H, W, 9, Cin)
    return patches.reshape(N * H * W, 9 * Cin)


def _conv_w_to_mat(w):
    # PyTorch conv weight (Cout, Cin, kh, kw) -> matmul matrix (kh*kw*Cin, Cout)
    cout = w.shape[0]
    return jnp.transpose(w, (2, 3, 1, 0)).reshape(-1, cout)


_CPARAMS_K1 = pltpu.CompilerParams(dimension_semantics=("parallel",),
                                   vmem_limit_bytes=32 * 1024 * 1024)
# Per-image blocks: allow a bigger scoped-VMEM budget on 128 MiB parts while
# staying under v7x's 64 MiB physical VMEM.  (Production sizes should H-tile.)
_CPARAMS_K2 = pltpu.CompilerParams(dimension_semantics=("parallel",),
                                   vmem_limit_bytes=48 * 1024 * 1024)


# ------------------------------ SPADE forward -------------------------------

def spade_forward(x, y, w_conv, b_conv, w_gamma, b_gamma, w_beta, b_beta):
    N, C, H, W = x.shape
    HW = H * W
    NHW = N * HW
    Wp = W + 2
    HWp = H * Wp

    # 1) Bilinear resize of the conditioning map (align_corners=True), JAX glue.
    y_up = bilinear_resize_align_corners(y.astype(jnp.float32), H, W)   # (N,3,H,W)
    y_nhwc = jnp.transpose(y_up, (0, 2, 3, 1))                          # (N,H,W,3)

    # 2) conv(3->128, k3, pad1) + LeakyReLU, row-gridded bf16 matmul kernel.
    #    Bias folded into the padded K dimension (column 27 of patches == 1.0).
    p1 = im2col_3x3(y_nhwc)                                             # (NHW, 27)
    p1 = jnp.concatenate(
        [p1, jnp.ones((NHW, 1), jnp.float32), jnp.zeros((NHW, 4), jnp.float32)],
        axis=1)                                                         # (NHW, 32)
    w1 = jnp.concatenate(
        [_conv_w_to_mat(w_conv), b_conv.reshape(1, 128),
         jnp.zeros((4, 128), jnp.float32)], axis=0)                     # (32, 128)
    w1 = w1.astype(jnp.bfloat16)

    tr = min(2048, _round_up(NHW, 8))
    rows_p = _round_up(NHW, tr)
    if rows_p != NHW:
        p1 = jnp.pad(p1, ((0, rows_p - NHW), (0, 0)))
    p1 = p1.astype(jnp.bfloat16)

    hidden = pl.pallas_call(
        _conv1_lrelu_kernel,
        out_shape=jax.ShapeDtypeStruct((rows_p, 128), jnp.bfloat16),
        grid=(rows_p // tr,),
        in_specs=[pl.BlockSpec((tr, 32), lambda i: (i, 0)),
                  pl.BlockSpec((32, 128), lambda i: (0, 0))],
        out_specs=pl.BlockSpec((tr, 128), lambda i: (i, 0)),
        compiler_params=_CPARAMS_K1,
    )(p1, w1)
    hidden = hidden[:NHW].reshape(N, H, W, 128)                         # bf16, unpadded

    # 3) Fused gamma|beta weights per 3x3 tap, kept at true width 2C (no 128 pad).
    wg = jnp.transpose(w_gamma, (2, 3, 1, 0)).reshape(9, 128, C)
    wb = jnp.transpose(w_beta, (2, 3, 1, 0)).reshape(9, 128, C)
    wgb = jnp.concatenate([wg, wb], axis=-1).astype(jnp.bfloat16)       # (9,128,2C)
    bgb = jnp.concatenate([b_gamma, b_beta]).astype(jnp.float32).reshape(1, 2 * C)

    # 4) x padded along W to the same W+2 row stride used by the conv-output rows.
    x_pad = jnp.pad(x.astype(jnp.float32),
                    ((0, 0), (0, 0), (0, 0), (0, 2))).reshape(N, C, HWp)

    # Flat halo scratch rows: (H+2)*(W+2) plus 2 slack rows for the last tap slice.
    prows = _round_up((H + 2) * Wp + 2, 8)

    # 5) Fused instance-norm + conv_gamma/conv_beta + modulation, one image/step.
    out_p = pl.pallas_call(
        _spade_out_kernel,
        out_shape=jax.ShapeDtypeStruct((N, C, HWp), jnp.float32),
        grid=(N,),
        in_specs=[pl.BlockSpec((1, C, HWp), lambda n: (n, 0, 0)),
                  pl.BlockSpec((1, H, W, 128), lambda n: (n, 0, 0, 0)),
                  pl.BlockSpec((9, 128, 2 * C), lambda n: (0, 0, 0)),
                  pl.BlockSpec((1, 2 * C), lambda n: (0, 0))],
        out_specs=pl.BlockSpec((1, C, HWp), lambda n: (n, 0, 0)),
        scratch_shapes=[pltpu.VMEM((prows, 128), jnp.float32)],
        compiler_params=_CPARAMS_K2,
    )(x_pad, hidden, wgb, bgb)

    # Drop the 2 garbage columns per row (flat-offset stride W+2 -> W).
    return out_p.reshape(N, C, H, Wp)[..., :W]


# ----------------------------- pure-JAX reference ---------------------------

def spade_reference(x, y, w_conv, b_conv, w_gamma, b_gamma, w_beta, b_beta):
    mean = jnp.mean(x, axis=(2, 3), keepdims=True)
    var = jnp.mean((x - mean) ** 2, axis=(2, 3), keepdims=True)
    normalized = (x - mean) * lax.rsqrt(var + EPS)

    y_up = bilinear_resize_align_corners(y, x.shape[2], x.shape[3])

    def conv(inp, w, b):
        o = lax.conv_general_dilated(inp, w, (1, 1), ((1, 1), (1, 1)),
                                     dimension_numbers=('NCHW', 'OIHW', 'NCHW'))
        return o + b[None, :, None, None]

    h = conv(y_up, w_conv, b_conv)
    h = jnp.where(h >= 0.0, h, LRELU_SLOPE * h)
    gamma = conv(h, w_gamma, b_gamma)
    beta = conv(h, w_beta, b_beta)
    return normalized * (1 + gamma) + beta


# ---------------------------------- main ------------------------------------

if __name__ == "__main__":
    key = jax.random.PRNGKey(0)
    kx, ky, k1, k2, k3, k4, k5, k6 = jax.random.split(key, 8)

    N, C, H, W = 2, 4, 16, 16           # num_features = 4
    x = jax.random.normal(kx, (N, C, H, W), jnp.float32)
    y = jax.random.normal(ky, (N, 3, 8, 8), jnp.float32)

    # Deterministic synthetic parameters (shapes from the module's __init__).
    w_conv = 0.1 * jax.random.normal(k1, (128, 3, 3, 3), jnp.float32)
    b_conv = 0.1 * jax.random.normal(k2, (128,), jnp.float32)
    w_gamma = 0.1 * jax.random.normal(k3, (C, 128, 3, 3), jnp.float32)
    b_gamma = 0.1 * jax.random.normal(k4, (C,), jnp.float32)
    w_beta = 0.1 * jax.random.normal(k5, (C, 128, 3, 3), jnp.float32)
    b_beta = 0.1 * jax.random.normal(k6, (C,), jnp.float32)

    fwd = jax.jit(spade_forward)
    out = fwd(x, y, w_conv, b_conv, w_gamma, b_gamma, w_beta, b_beta)
    out = jax.block_until_ready(out)

    ref = spade_reference(x, y, w_conv, b_conv, w_gamma, b_gamma, w_beta, b_beta)
    ref = jax.block_until_ready(ref)

    assert out.shape == (N, C, H, W), out.shape
    assert bool(jnp.all(jnp.isfinite(out)))
    # Loose tolerance: bf16 hidden / MXU inputs (f32 accumulation) vs XLA f32 conv.
    assert bool(jnp.allclose(out, ref, rtol=5e-2, atol=5e-2)), \
        float(jnp.max(jnp.abs(out - ref)))

    print("KERNEL_OK")
</pallas_src>

<mosaic_0001>
module attributes {stable_mosaic.version = 11 : i64} {
  func.func @_conv1_lrelu_kernel(%arg0: i32, %arg1: memref<512x32xbf16, #tpu.memory_space<vmem>>, %arg2: memref<32x128xbf16, #tpu.memory_space<vmem>>, %arg3: memref<512x128xbf16, #tpu.memory_space<vmem>>) attributes {dimension_semantics = [#tpu.dimension_semantics<parallel>], iteration_bounds = array<i64: 1>, scalar_prefetch = 0 : i64, scratch_operands = 0 : i64, tpu.core_type = #tpu.core_type<tc>, window_params = [{transform_indices = @transform_0, window_bounds = array<i64: 512, 32>}, {pipeline_mode = #tpu.pipeline_mode<synchronous>, transform_indices = @transform_1, window_bounds = array<i64: 32, 128>}, {transform_indices = @transform_2, window_bounds = array<i64: 512, 128>}]} {
    %c0 = arith.constant 0 : index
    %c0_0 = arith.constant 0 : index
    %0 = vector.load %arg1[%c0, %c0_0] : memref<512x32xbf16, #tpu.memory_space<vmem>>, vector<512x32xbf16>
    %c0_1 = arith.constant 0 : index
    %c0_2 = arith.constant 0 : index
    %1 = vector.load %arg2[%c0_1, %c0_2] : memref<32x128xbf16, #tpu.memory_space<vmem>>, vector<32x128xbf16>
    %cst = arith.constant dense<0.000000e+00> : vector<512x128xf32>
    %2 = tpu.matmul %0, %1, %cst {dimension_numbers = #tpu.dot_dimension_numbers<[1], [0], [0], [1], [0, 0, 1, 1], [], []>} : vector<512x32xbf16>, vector<32x128xbf16>, vector<512x128xf32> -> vector<512x128xf32>
    %cst_3 = arith.constant 0.000000e+00 : f32
    %3 = vector.broadcast %cst_3 : f32 to vector<512x128xf32>
    %4 = arith.cmpf oge, %2, %3 : vector<512x128xf32>
    %cst_4 = arith.constant 2.000000e-01 : f32
    %5 = vector.broadcast %cst_4 : f32 to vector<512x128xf32>
    %6 = arith.mulf %5, %2 : vector<512x128xf32>
    %7 = arith.select %4, %2, %6 : vector<512x128xi1>, vector<512x128xf32>
    %8 = arith.truncf %7 : vector<512x128xf32> to vector<512x128xbf16>
    %c0_5 = arith.constant 0 : index
    %c0_6 = arith.constant 0 : index
    %9 = vector.load %arg3[%c0_5, %c0_6] : memref<512x128xbf16, #tpu.memory_space<vmem>>, vector<512x128xbf16>
    tpu.vector_store %arg3[%c0_5, %c0_6], %8 {strides = array<i32>} : memref<512x128xbf16, #tpu.memory_space<vmem>>, vector<512x128xbf16>,
    return
  }
  func.func @transform_0(%arg0: i32) -> (i32, i32) {
    %c0_i32 = arith.constant 0 : i32
    %c0_i32_0 = arith.constant 0 : i32
    return %arg0, %c0_i32 : i32, i32
  }
  func.func @transform_1(%arg0: i32) -> (i32, i32) {
    %c0_i32 = arith.constant 0 : i32
    %c0_i32_0 = arith.constant 0 : i32
    %c0_i32_1 = arith.constant 0 : i32
    return %c0_i32, %c0_i32_0 : i32, i32
  }
  func.func @transform_2(%arg0: i32) -> (i32, i32) {
    %c0_i32 = arith.constant 0 : i32
    %c0_i32_0 = arith.constant 0 : i32
    return %arg0, %c0_i32 : i32, i32
  }
}

module attributes {stable_mosaic.version = 11 : i64} {
  func.func @_spade_out_kernel(%arg0: i32, %arg1: memref<1x4x288xf32, #tpu.memory_space<vmem>>, %arg2: memref<1x16x16x128xbf16, #tpu.memory_space<vmem>>, %arg3: memref<9x128x8xbf16, #tpu.memory_space<vmem>>, %arg4: memref<1x8xf32, #tpu.memory_space<vmem>>, %arg5: memref<1x4x288xf32, #tpu.memory_space<vmem>>, %arg6: memref<328x128xf32, #tpu.memory_space<vmem>>) attributes {dimension_semantics = [#tpu.dimension_semantics<parallel>], iteration_bounds = array<i64: 2>, scalar_prefetch = 0 : i64, scratch_operands = 1 : i64, tpu.core_type = #tpu.core_type<tc>, window_params = [{transform_indices = @transform_0, window_bounds = array<i64: 1, 4, 288>}, {transform_indices = @transform_1, window_bounds = array<i64: 1, 16, 16, 128>}, {pipeline_mode = #tpu.pipeline_mode<synchronous>, transform_indices = @transform_2, window_bounds = array<i64: 9, 128, 8>}, {pipeline_mode = #tpu.pipeline_mode<synchronous>, transform_indices = @transform_3, window_bounds = array<i64: 1, 8>}, {transform_indices = @transform_4, window_bounds = array<i64: 1, 4, 288>}]} {
    %cst = arith.constant 0.000000e+00 : f32
    %0 = vector.broadcast %cst : f32 to vector<328x128xf32>
    %c0 = arith.constant 0 : index
    %c0_0 = arith.constant 0 : index
    %1 = vector.load %arg6[%c0, %c0_0] : memref<328x128xf32, #tpu.memory_space<vmem>>, vector<328x128xf32>
    tpu.vector_store %arg6[%c0, %c0_0], %0 {strides = array<i32>} : memref<328x128xf32, #tpu.memory_space<vmem>>, vector<328x128xf32>,
    %c0_1 = arith.constant 0 : index
    %c0_2 = arith.constant 0 : index
    %c0_3 = arith.constant 0 : index
    %c0_4 = arith.constant 0 : index
    %2 = vector.load %arg2[%c0_1, %c0_2, %c0_3, %c0_4] : memref<1x16x16x128xbf16, #tpu.memory_space<vmem>>, vector<1x1x16x128xbf16>
    %3 = vector.shape_cast %2 : vector<1x1x16x128xbf16> to vector<16x128xbf16>
    %4 = arith.extf %3 : vector<16x128xbf16> to vector<16x128xf32>
    %c19 = arith.constant 19 : index
    %c0_5 = arith.constant 0 : index
    %5 = vector.load %arg6[%c19, %c0_5] : memref<328x128xf32, #tpu.memory_space<vmem>>, vector<16x128xf32>
    tpu.vector_store %arg6[%c19, %c0_5], %4 {strides = array<i32>} : memref<328x128xf32, #tpu.memory_space<vmem>>, vector<16x128xf32>,
    %c0_6 = arith.constant 0 : index
    %c1 = arith.constant 1 : index
    %c0_7 = arith.constant 0 : index
    %c0_8 = arith.constant 0 : index
    %6 = vector.load %arg2[%c0_6, %c1, %c0_7, %c0_8] : memref<1x16x16x128xbf16, #tpu.memory_space<vmem>>, vector<1x1x16x128xbf16>
    %7 = vector.shape_cast %6 : vector<1x1x16x128xbf16> to vector<16x128xbf16>
    %8 = arith.extf %7 : vector<16x128xbf16> to vector<16x128xf32>
    %c37 = arith.constant 37 : index
    %c0_9 = arith.constant 0 : index
    %9 = vector.load %arg6[%c37, %c0_9] : memref<328x128xf32, #tpu.memory_space<vmem>>, vector<16x128xf32>
    tpu.vector_store %arg6[%c37, %c0_9], %8 {strides = array<i32>} : memref<328x128xf32, #tpu.memory_space<vmem>>, vector<16x128xf32>,
    %c0_10 = arith.constant 0 : index
    %c2 = arith.constant 2 : index
    %c0_11 = arith.constant 0 : index
    %c0_12 = arith.constant 0 : index
    %10 = vector.load %arg2[%c0_10, %c2, %c0_11, %c0_12] : memref<1x16x16x128xbf16, #tpu.memory_space<vmem>>, vector<1x1x16x128xbf16>
    %11 = vector.shape_cast %10 : vector<1x1x16x128xbf16> to vector<16x128xbf16>
    %12 = arith.extf %11 : vector<16x128xbf16> to vector<16x128xf32>
    %c55 = arith.constant 55 : index
    %c0_13 = arith.constant 0 : index
    %13 = vector.load %arg6[%c55, %c0_13] : memref<328x128xf32, #tpu.memory_space<vmem>>, vector<16x128xf32>
    tpu.vector_store %arg6[%c55, %c0_13], %12 {strides = array<i32>} : memref<328x128xf32, #tpu.memory_space<vmem>>, vector<16x128xf32>,
    %c0_14 = arith.constant 0 : index
    %c3 = arith.constant 3 : index
    %c0_15 = arith.constant 0 : index
    %c0_16 = arith.constant 0 : index
    %14 = vector.load %arg2[%c0_14, %c3, %c0_15, %c0_16] : memref<1x16x16x128xbf16, #tpu.memory_space<vmem>>, vector<1x1x16x128xbf16>
    %15 = vector.shape_cast %14 : vector<1x1x16x128xbf16> to vector<16x128xbf16>
    %16 = arith.extf %15 : vector<16x128xbf16> to vector<16x128xf32>
    %c73 = arith.constant 73 : index
    %c0_17 = arith.constant 0 : index
    %17 = vector.load %arg6[%c73, %c0_17] : memref<328x128xf32, #tpu.memory_space<vmem>>, vector<16x128xf32>
    tpu.vector_store %arg6[%c73, %c0_17], %16 {strides = array<i32>} : memref<328x128xf32, #tpu.memory_space<vmem>>, vector<16x128xf32>,
    %c0_18 = arith.constant 0 : index
    %c4 = arith.constant 4 : index
    %c0_19 = arith.constant 0 : index
    %c0_20 = arith.constant 0 : index
    %18 = vector.load %arg2[%c0_18, %c4, %c0_19, %c0_20] : memref<1x16x16x128xbf16, #tpu.memory_space<vmem>>, vector<1x1x16x128xbf16>
    %19 = vector.shape_cast %18 : vector<1x1x16x128xbf16> to vector<16x128xbf16>
    %20 = arith.extf %19 : vector<16x128xbf16> to vector<16x128xf32>
    %c91 = arith.constant 91 : index
    %c0_21 = arith.constant 0 : index
    %21 = vector.load %arg6[%c91, %c0_21] : memref<328x128xf32, #tpu.memory_space<vmem>>, vector<16x128xf32>
    tpu.vector_store %arg6[%c91, %c0_21], %20 {strides = array<i32>} : memref<328x128xf32, #tpu.memory_space<vmem>>, vector<16x128xf32>,
    %c0_22 = arith.constant 0 : index
    %c5 = arith.constant 5 : index
    %c0_23 = arith.constant 0 : index
    %c0_24 = arith.constant 0 : index
    %22 = vector.load %arg2[%c0_22, %c5, %c0_23, %c0_24] : memref<1x16x16x128xbf16, #tpu.memory_space<vmem>>, vector<1x1x16x128xbf16>
    %23 = vector.shape_cast %22 : vector<1x1x16x128xbf16> to vector<16x128xbf16>
    %24 = arith.extf %23 : vector<16x128xbf16> to vector<16x128xf32>
    %c109 = arith.constant 109 : index
    %c0_25 = arith.constant 0 : index
    %25 = vector.load %arg6[%c109, %c0_25] : memref<328x128xf32, #tpu.memory_space<vmem>>, vector<16x128xf32>
    tpu.vector_store %arg6[%c109, %c0_25], %24 {strides = array<i32>} : memref<328x128xf32, #tpu.memory_space<vmem>>, vector<16x128xf32>,
    %c0_26 = arith.constant 0 : index
    %c6 = arith.constant 6 : index
    %c0_27 = arith.constant 0 : index
    %c0_28 = arith.constant 0 : index
    %26 = vector.load %arg2[%c0_26, %c6, %c0_27, %c0_28] : memref<1x16x16x128xbf16, #tpu.memory_space<vmem>>, vector<1x1x16x128xbf16>
    %27 = vector.shape_cast %26 : vector<1x1x16x128xbf16> to vector<16x128xbf16>
    %28 = arith.extf %27 : vector<16x128xbf16> to vector<16x128xf32>
    %c127 = arith.constant 127 : index
    %c0_29 = arith.constant 0 : index
    %29 = vector.load %arg6[%c127, %c0_29] : memref<328x128xf32, #tpu.memory_space<vmem>>, vector<16x128xf32>
    tpu.vector_store %arg6[%c127, %c0_29], %28 {strides = array<i32>} : memref<328x128xf32, #tpu.memory_space<vmem>>, vector<16x128xf32>,
    %c0_30 = arith.constant 0 : index
    %c7 = arith.constant 7 : index
    %c0_31 = arith.constant 0 : index
    %c0_32 = arith.constant 0 : index
    %30 = vector.load %arg2[%c0_30, %c7, %c0_31, %c0_32] : memref<1x16x16x128xbf16, #tpu.memory_space<vmem>>, vector<1x1x16x128xbf16>
    %31 = vector.shape_cast %30 : vector<1x1x16x128xbf16> to vector<16x128xbf16>
    %32 = arith.extf %31 : vector<16x128xbf16> to vector<16x128xf32>
    %c145 = arith.constant 145 : index
    %c0_33 = arith.constant 0 : index
    %33 = vector.load %arg6[%c145, %c0_33] : memref<328x128xf32, #tpu.memory_space<vmem>>, vector<16x128xf32>
    tpu.vector_store %arg6[%c145, %c0_33], %32 {strides = array<i32>} : memref<328x128xf32, #tpu.memory_space<vmem>>, vector<16x128xf32>,
    %c0_34 = arith.constant 0 : index
    %c8 = arith.constant 8 : index
    %c0_35 = arith.constant 0 : index
    %c0_36 = arith.constant 0 : index
    %34 = vector.load %arg2[%c0_34, %c8, %c0_35, %c0_36] : memref<1x16x16x128xbf16, #tpu.memory_space<vmem>>, vector<1x1x16x128xbf16>
    %35 = vector.shape_cast %34 : vector<1x1x16x128xbf16> to vector<16x128xbf16>
    %36 = arith.extf %35 : vector<16x128xbf16> to vector<16x128xf32>
    %c163 = arith.constant 163 : index
    %c0_37 = arith.constant 0 : index
    %37 = vector.load %arg6[%c163, %c0_37] : memref<328x128xf32, #tpu.memory_space<vmem>>, vector<16x128xf32>
    tpu.vector_store %arg6[%c163, %c0_37], %36 {strides = array<i32>} : memref<328x128xf32, #tpu.memory_space<vmem>>, vector<16x128xf32>,
    %c0_38 = arith.constant 0 : index
    %c9 = arith.constant 9 : index
    %c0_39 = arith.constant 0 : index
    %c0_40 = arith.constant 0 : index
    %38 = vector.load %arg2[%c0_38, %c9, %c0_39, %c0_40] : memref<1x16x16x128xbf16, #tpu.memory_space<vmem>>, vector<1x1x16x128xbf16>
    %39 = vector.shape_cast %38 : vector<1x1x16x128xbf16> to vector<16x128xbf16>
    %40 = arith.extf %39 : vector<16x128xbf16> to vector<16x128xf32>
    %c181 = arith.constant 181 : index
    %c0_41 = arith.constant 0 : index
    %41 = vector.load %arg6[%c181, %c0_41] : memref<328x128xf32, #tpu.memory_space<vmem>>, vector<16x128xf32>
    tpu.vector_store %arg6[%c181, %c0_41], %40 {strides = array<i32>} : memref<328x128xf32, #tpu.memory_space<vmem>>, vector<16x128xf32>,
    %c0_42 = arith.constant 0 : index
    %c10 = arith.constant 10 : index
    %c0_43 = arith.constant 0 : index
    %c0_44 = arith.constant 0 : index
    %42 = vector.load %arg2[%c0_42, %c10, %c0_43, %c0_44] : memref<1x16x16x128xbf16, #tpu.memory_space<vmem>>, vector<1x1x16x128xbf16>
    %43 = vector.shape_cast %42 : vector<1x1x16x128xbf16> to vector<16x128xbf16>
    %44 = arith.extf %43 : vector<16x128xbf16> to vector<16x128xf32>
    %c199 = arith.constant 199 : index
    %c0_45 = arith.constant 0 : index
    %45 = vector.load %arg6[%c199, %c0_45] : memref<328x128xf32, #tpu.memory_space<vmem>>, vector<16x128xf32>
    tpu.vector_store %arg6[%c199, %c0_45], %44 {strides = array<i32>} : memref<328x128xf32, #tpu.memory_space<vmem>>, vector<16x128xf32>,
    %c0_46 = arith.constant 0 : index
    %c11 = arith.constant 11 : index
    %c0_47 = arith.constant 0 : index
    %c0_48 = arith.constant 0 : index
    %46 = vector.load %arg2[%c0_46, %c11, %c0_47, %c0_48] : memref<1x16x16x128xbf16, #tpu.memory_space<vmem>>, vector<1x1x16x128xbf16>
    %47 = vector.shape_cast %46 : vector<1x1x16x128xbf16> to vector<16x128xbf16>
    %48 = arith.extf %47 : vector<16x128xbf16> to vector<16x128xf32>
    %c217 = arith.constant 217 : index
    %c0_49 = arith.constant 0 : index
    %49 = vector.load %arg6[%c217, %c0_49] : memref<328x128xf32, #tpu.memory_space<vmem>>, vector<16x128xf32>
    tpu.vector_store %arg6[%c217, %c0_49], %48 {strides = array<i32>} : memref<328x128xf32, #tpu.memory_space<vmem>>, vector<16x128xf32>,
    %c0_50 = arith.constant 0 : index
    %c12 = arith.constant 12 : index
    %c0_51 = arith.constant 0 : index
    %c0_52 = arith.constant 0 : index
    %50 = vector.load %arg2[%c0_50, %c12, %c0_51, %c0_52] : memref<1x16x16x128xbf16, #tpu.memory_space<vmem>>, vector<1x1x16x128xbf16>
    %51 = vector.shape_cast %50 : vector<1x1x16x128xbf16> to vector<16x128xbf16>
    %52 = arith.extf %51 : vector<16x128xbf16> to vector<16x128xf32>
    %c235 = arith.constant 235 : index
    %c0_53 = arith.constant 0 : index
    %53 = vector.load %arg6[%c235, %c0_53] : memref<328x128xf32, #tpu.memory_space<vmem>>, vector<16x128xf32>
    tpu.vector_store %arg6[%c235, %c0_53], %52 {strides = array<i32>} : memref<328x128xf32, #tpu.memory_space<vmem>>, vector<16x128xf32>,
    %c0_54 = arith.constant 0 : index
    %c13 = arith.constant 13 : index
    %c0_55 = arith.constant 0 : index
    %c0_56 = arith.constant 0 : index
    %54 = vector.load %arg2[%c0_54, %c13, %c0_55, %c0_56] : memref<1x16x16x128xbf16, #tpu.memory_space<vmem>>, vector<1x1x16x128xbf16>
    %55 = vector.shape_cast %54 : vector<1x1x16x128xbf16> to vector<16x128xbf16>
    %56 = arith.extf %55 : vector<16x128xbf16> to vector<16x128xf32>
    %c253 = arith.constant 253 : index
    %c0_57 = arith.constant 0 : index
    %57 = vector.load %arg6[%c253, %c0_57] : memref<328x128xf32, #tpu.memory_space<vmem>>, vector<16x128xf32>
    tpu.vector_store %arg6[%c253, %c0_57], %56 {strides = array<i32>} : memref<328x128xf32, #tpu.memory_space<vmem>>, vector<16x128xf32>,
    %c0_58 = arith.constant 0 : index
    %c14 = arith.constant 14 : index
    %c0_59 = arith.constant 0 : index
    %c0_60 = arith.constant 0 : index
    %58 = vector.load %arg2[%c0_58, %c14, %c0_59, %c0_60] : memref<1x16x16x128xbf16, #tpu.memory_space<vmem>>, vector<1x1x16x128xbf16>
    %59 = vector.shape_cast %58 : vector<1x1x16x128xbf16> to vector<16x128xbf16>
    %60 = arith.extf %59 : vector<16x128xbf16> to vector<16x128xf32>
    %c271 = arith.constant 271 : index
    %c0_61 = arith.constant 0 : index
    %61 = vector.load %arg6[%c271, %c0_61] : memref<328x128xf32, #tpu.memory_space<vmem>>, vector<16x128xf32>
    tpu.vector_store %arg6[%c271, %c0_61], %60 {strides = array<i32>} : memref<328x128xf32, #tpu.memory_space<vmem>>, vector<16x128xf32>,
    %c0_62 = arith.constant 0 : index
    %c15 = arith.constant 15 : index
    %c0_63 = arith.constant 0 : index
    %c0_64 = arith.constant 0 : index
    %62 = vector.load %arg2[%c0_62, %c15, %c0_63, %c0_64] : memref<1x16x16x128xbf16, #tpu.memory_space<vmem>>, vector<1x1x16x128xbf16>
    %63 = vector.shape_cast %62 : vector<1x1x16x128xbf16> to vector<16x128xbf16>
    %64 = arith.extf %63 : vector<16x128xbf16> to vector<16x128xf32>
    %c289 = arith.constant 289 : index
    %c0_65 = arith.constant 0 : index
    %65 = vector.load %arg6[%c289, %c0_65] : memref<328x128xf32, #tpu.memory_space<vmem>>, vector<16x128xf32>
    tpu.vector_store %arg6[%c289, %c0_65], %64 {strides = array<i32>} : memref<328x128xf32, #tpu.memory_space<vmem>>, vector<16x128xf32>,
    %c0_66 = arith.constant 0 : index
    %c0_67 = arith.constant 0 : index
    %c0_68 = arith.constant 0 : index
    %66 = vector.load %arg1[%c0_66, %c0_67, %c0_68] : memref<1x4x288xf32, #tpu.memory_space<vmem>>, vector<1x4x288xf32>
    %67 = vector.shape_cast %66 : vector<1x4x288xf32> to vector<4x288xf32>
    %cst_69 = arith.constant dense<0.000000e+00> : vector<4xf32>
    %68 = vector.multi_reduction <add>, %67, %cst_69 [1] : vector<4x288xf32> to vector<4xf32>
    %69 = vector.shape_cast %68 : vector<4xf32> to vector<4x1xf32>
    %cst_70 = arith.constant 3.906250e-03 : f32
    %70 = vector.broadcast %cst_70 : f32 to vector<4x1xf32>
    %71 = arith.mulf %69, %70 : vector<4x1xf32>
    %72 = vector.broadcast %71 : vector<4x1xf32> to vector<4x288xf32>
    %73 = arith.subf %67, %72 : vector<4x288xf32>
    %74 = arith.mulf %73, %73 : vector<4x288xf32>
    %cst_71 = arith.constant dense<0.000000e+00> : vector<4xf32>
    %75 = vector.multi_reduction <add>, %74, %cst_71 [1] : vector<4x288xf32> to vector<4xf32>
    %76 = vector.shape_cast %75 : vector<4xf32> to vector<4x1xf32>
    %cst_72 = arith.constant 3.200000e+01 : f32
    %77 = vector.broadcast %cst_72 : f32 to vector<4x1xf32>
    %78 = arith.mulf %77, %71 : vector<4x1xf32>
    %79 = arith.mulf %78, %71 : vector<4x1xf32>
    %80 = arith.subf %76, %79 : vector<4x1xf32>
    %cst_73 = arith.constant 3.906250e-03 : f32
    %81 = vector.broadcast %cst_73 : f32 to vector<4x1xf32>
    %82 = arith.mulf %80, %81 : vector<4x1xf32>
    %cst_74 = arith.constant 0.000000e+00 : f32
    %83 = vector.broadcast %cst_74 : f32 to vector<4x1xf32>
    %84 = arith.maximumf %82, %83 : vector<4x1xf32>
    %cst_75 = arith.constant 9.99999974E-6 : f32
    %85 = vector.broadcast %cst_75 : f32 to vector<4x1xf32>
    %86 = arith.addf %84, %85 : vector<4x1xf32>
    %87 = math.rsqrt %86 : vector<4x1xf32>
    %88 = vector.broadcast %87 : vector<4x1xf32> to vector<4x288xf32>
    %89 = arith.mulf %73, %88 : vector<4x288xf32>
    %c0_76 = arith.constant 0 : index
    %c0_77 = arith.constant 0 : index
    %90 = vector.load %arg6[%c0_76, %c0_77] : memref<328x128xf32, #tpu.memory_space<vmem>>, vector<288x128xf32>
    %91 = arith.truncf %90 : vector<288x128xf32> to vector<288x128xbf16>
    %c0_78 = arith.constant 0 : index
    %c0_79 = arith.constant 0 : index
    %c0_80 = arith.constant 0 : index
    %92 = vector.load %arg3[%c0_78, %c0_79, %c0_80] : memref<9x128x8xbf16, #tpu.memory_space<vmem>>, vector<1x128x8xbf16>
    %93 = vector.shape_cast %92 : vector<1x128x8xbf16> to vector<128x8xbf16>
    %cst_81 = arith.constant dense<0.000000e+00> : vector<288x8xf32>
    %94 = tpu.matmul %91, %93, %cst_81 {dimension_numbers = #tpu.dot_dimension_numbers<[1], [0], [0], [1], [0, 0, 1, 1], [], []>} : vector<288x128xbf16>, vector<128x8xbf16>, vector<288x8xf32> -> vector<288x8xf32>
    %c1_82 = arith.constant 1 : index
    %c0_83 = arith.constant 0 : index
    %95 = vector.load %arg6[%c1_82, %c0_83] : memref<328x128xf32, #tpu.memory_space<vmem>>, vector<288x128xf32>
    %96 = arith.truncf %95 : vector<288x128xf32> to vector<288x128xbf16>
    %c1_84 = arith.constant 1 : index
    %c0_85 = arith.constant 0 : index
    %c0_86 = arith.constant 0 : index
    %97 = vector.load %arg3[%c1_84, %c0_85, %c0_86] : memref<9x128x8xbf16, #tpu.memory_space<vmem>>, vector<1x128x8xbf16>
    %98 = vector.shape_cast %97 : vector<1x128x8xbf16> to vector<128x8xbf16>
    %cst_87 = arith.constant dense<0.000000e+00> : vector<288x8xf32>
    %99 = tpu.matmul %96, %98, %cst_87 {dimension_numbers = #tpu.dot_dimension_numbers<[1], [0], [0], [1], [0, 0, 1, 1], [], []>} : vector<288x128xbf16>, vector<128x8xbf16>, vector<288x8xf32> -> vector<288x8xf32>
    %100 = arith.addf %94, %99 : vector<288x8xf32>
    %c2_88 = arith.constant 2 : index
    %c0_89 = arith.constant 0 : index
    %101 = vector.load %arg6[%c2_88, %c0_89] : memref<328x128xf32, #tpu.memory_space<vmem>>, vector<288x128xf32>
    %102 = arith.truncf %101 : vector<288x128xf32> to vector<288x128xbf16>
    %c2_90 = arith.constant 2 : index
    %c0_91 = arith.constant 0 : index
    %c0_92 = arith.constant 0 : index
    %103 = vector.load %arg3[%c2_90, %c0_91, %c0_92] : memref<9x128x8xbf16, #tpu.memory_space<vmem>>, vector<1x128x8xbf16>
    %104 = vector.shape_cast %103 : vector<1x128x8xbf16> to vector<128x8xbf16>
    %cst_93 = arith.constant dense<0.000000e+00> : vector<288x8xf32>
    %105 = tpu.matmul %102, %104, %cst_93 {dimension_numbers = #tpu.dot_dimension_numbers<[1], [0], [0], [1], [0, 0, 1, 1], [], []>} : vector<288x128xbf16>, vector<128x8xbf16>, vector<288x8xf32> -> vector<288x8xf32>
    %106 = arith.addf %100, %105 : vector<288x8xf32>
    %c18 = arith.constant 18 : index
    %c0_94 = arith.constant 0 : index
    %107 = vector.load %arg6[%c18, %c0_94] : memref<328x128xf32, #tpu.memory_space<vmem>>, vector<288x128xf32>
    %108 = arith.truncf %107 : vector<288x128xf32> to vector<288x128xbf16>
    %c3_95 = arith.constant 3 : index
    %c0_96 = arith.constant 0 : index
    %c0_97 = arith.constant 0 : index
    %109 = vector.load %arg3[%c3_95, %c0_96, %c0_97] : memref<9x128x8xbf16, #tpu.memory_space<vmem>>, vector<1x128x8xbf16>
    %110 = vector.shape_cast %109 : vector<1x128x8xbf16> to vector<128x8xbf16>
    %cst_98 = arith.constant dense<0.000000e+00> : vector<288x8xf32>
    %111 = tpu.matmul %108, %110, %cst_98 {dimension_numbers = #tpu.dot_dimension_numbers<[1], [0], [0], [1], [0, 0, 1, 1], [], []>} : vector<288x128xbf16>, vector<128x8xbf16>, vector<288x8xf32> -> vector<288x8xf32>
    %112 = arith.addf %106, %111 : vector<288x8xf32>
    %c19_99 = arith.constant 19 : index
    %c0_100 = arith.constant 0 : index
    %113 = vector.load %arg6[%c19_99, %c0_100] : memref<328x128xf32, #tpu.memory_space<vmem>>, vector<288x128xf32>
    %114 = arith.truncf %113 : vector<288x128xf32> to vector<288x128xbf16>
    %c4_101 = arith.constant 4 : index
    %c0_102 = arith.constant 0 : index
    %c0_103 = arith.constant 0 : index
    %115 = vector.load %arg3[%c4_101, %c0_102, %c0_103] : memref<9x128x8xbf16, #tpu.memory_space<vmem>>, vector<1x128x8xbf16>
    %116 = vector.shape_cast %115 : vector<1x128x8xbf16> to vector<128x8xbf16>
    %cst_104 = arith.constant dense<0.000000e+00> : vector<288x8xf32>
    %117 = tpu.matmul %114, %116, %cst_104 {dimension_numbers = #tpu.dot_dimension_numbers<[1], [0], [0], [1], [0, 0, 1, 1], [], []>} : vector<288x128xbf16>, vector<128x8xbf16>, vector<288x8xf32> -> vector<288x8xf32>
    %118 = arith.addf %112, %117 : vector<288x8xf32>
    %c20 = arith.constant 20 : index
    %c0_105 = arith.constant 0 : index
    %119 = vector.load %arg6[%c20, %c0_105] : memref<328x128xf32, #tpu.memory_space<vmem>>, vector<288x128xf32>
    %120 = arith.truncf %119 : vector<288x128xf32> to vector<288x128xbf16>
    %c5_106 = arith.constant 5 : index
    %c0_107 = arith.constant 0 : index
    %c0_108 = arith.constant 0 : index
    %121 = vector.load %arg3[%c5_106, %c0_107, %c0_108] : memref<9x128x8xbf16, #tpu.memory_space<vmem>>, vector<1x128x8xbf16>
    %122 = vector.shape_cast %121 : vector<1x128x8xbf16> to vector<128x8xbf16>
    %cst_109 = arith.constant dense<0.000000e+00> : vector<288x8xf32>
    %123 = tpu.matmul %120, %122, %cst_109 {dimension_numbers = #tpu.dot_dimension_numbers<[1], [0], [0], [1], [0, 0, 1, 1], [], []>} : vector<288x128xbf16>, vector<128x8xbf16>, vector<288x8xf32> -> vector<288x8xf32>
    %124 = arith.addf %118, %123 : vector<288x8xf32>
    %c36 = arith.constant 36 : index
    %c0_110 = arith.constant 0 : index
    %125 = vector.load %arg6[%c36, %c0_110] : memref<328x128xf32, #tpu.memory_space<vmem>>, vector<288x128xf32>
    %126 = arith.truncf %125 : vector<288x128xf32> to vector<288x128xbf16>
    %c6_111 = arith.constant 6 : index
    %c0_112 = arith.constant 0 : index
    %c0_113 = arith.constant 0 : index
    %127 = vector.load %arg3[%c6_111, %c0_112, %c0_113] : memref<9x128x8xbf16, #tpu.memory_space<vmem>>, vector<1x128x8xbf16>
    %128 = vector.shape_cast %127 : vector<1x128x8xbf16> to vector<128x8xbf16>
    %cst_114 = arith.constant dense<0.000000e+00> : vector<288x8xf32>
    %129 = tpu.matmul %126, %128, %cst_114 {dimension_numbers = #tpu.dot_dimension_numbers<[1], [0], [0], [1], [0, 0, 1, 1], [], []>} : vector<288x128xbf16>, vector<128x8xbf16>, vector<288x8xf32> -> vector<288x8xf32>
    %130 = arith.addf %124, %129 : vector<288x8xf32>
    %c37_115 = arith.constant 37 : index
    %c0_116 = arith.constant 0 : index
    %131 = vector.load %arg6[%c37_115, %c0_116] : memref<328x128xf32, #tpu.memory_space<vmem>>, vector<288x128xf32>
    %132 = arith.truncf %131 : vector<288x128xf32> to vector<288x128xbf16>
    %c7_117 = arith.constant 7 : index
    %c0_118 = arith.constant 0 : index
    %c0_119 = arith.constant 0 : index
    %133 = vector.load %arg3[%c7_117, %c0_118, %c0_119] : memref<9x128x8xbf16, #tpu.memory_space<vmem>>, vector<1x128x8xbf16>
    %134 = vector.shape_cast %133 : vector<1x128x8xbf16> to vector<128x8xbf16>
    %cst_120 = arith.constant dense<0.000000e+00> : vector<288x8xf32>
    %135 = tpu.matmul %132, %134, %cst_120 {dimension_numbers = #tpu.dot_dimension_numbers<[1], [0], [0], [1], [0, 0, 1, 1], [], []>} : vector<288x128xbf16>, vector<128x8xbf16>, vector<288x8xf32> -> vector<288x8xf32>
    %136 = arith.addf %130, %135 : vector<288x8xf32>
    %c38 = arith.constant 38 : index
    %c0_121 = arith.constant 0 : index
    %137 = vector.load %arg6[%c38, %c0_121] : memref<328x128xf32, #tpu.memory_space<vmem>>, vector<288x128xf32>
    %138 = arith.truncf %137 : vector<288x128xf32> to vector<288x128xbf16>
    %c8_122 = arith.constant 8 : index
    %c0_123 = arith.constant 0 : index
    %c0_124 = arith.constant 0 : index
    %139 = vector.load %arg3[%c8_122, %c0_123, %c0_124] : memref<9x128x8xbf16, #tpu.memory_space<vmem>>, vector<1x128x8xbf16>
    %140 = vector.shape_cast %139 : vector<1x128x8xbf16> to vector<128x8xbf16>
    %cst_125 = arith.constant dense<0.000000e+00> : vector<288x8xf32>
    %141 = tpu.matmul %138, %140, %cst_125 {dimension_numbers = #tpu.dot_dimension_numbers<[1], [0], [0], [1], [0, 0, 1, 1], [], []>} : vector<288x128xbf16>, vector<128x8xbf16>, vector<288x8xf32> -> vector<288x8xf32>
    %142 = arith.addf %136, %141 : vector<288x8xf32>
    %c0_126 = arith.constant 0 : index
    %c0_127 = arith.constant 0 : index
    %143 = vector.load %arg4[%c0_126, %c0_127] : memref<1x8xf32, #tpu.memory_space<vmem>>, vector<1x8xf32>
    %144 = vector.broadcast %143 : vector<1x8xf32> to vector<288x8xf32>
    %145 = arith.addf %142, %144 : vector<288x8xf32>
    %146 = tpu.transpose %145, [1, 0] : vector<288x8xf32> -> vector<8x288xf32>
    %147 = vector.extract_strided_slice %146 {offsets = [0, 0], sizes = [4, 288], strides = [1, 1]} : vector<8x288xf32> to vector<4x288xf32>
    %148 = vector.extract_strided_slice %146 {offsets = [4, 0], sizes = [4, 288], strides = [1, 1]} : vector<8x288xf32> to vector<4x288xf32>
    %cst_128 = arith.constant 1.000000e+00 : f32
    %149 = vector.broadcast %cst_128 : f32 to vector<4x288xf32>
    %150 = arith.addf %149, %147 : vector<4x288xf32>
    %151 = arith.mulf %89, %150 : vector<4x288xf32>
    %152 = arith.addf %151, %148 : vector<4x288xf32>
    %c0_129 = arith.constant 0 : index
    %c0_130 = arith.constant 0 : index
    %c0_131 = arith.constant 0 : index
    %153 = vector.load %arg5[%c0_129, %c0_130, %c0_131] : memref<1x4x288xf32, #tpu.memory_space<vmem>>, vector<1x4x288xf32>
    %154 = vector.shape_cast %153 : vector<1x4x288xf32> to vector<4x288xf32>
    %155 = vector.shape_cast %152 : vector<4x288xf32> to vector<1x4x288xf32>
    tpu.vector_store %arg5[%c0_129, %c0_130, %c0_131], %155 {strides = array<i32>} : memref<1x4x288xf32, #tpu.memory_space<vmem>>, vector<1x4x288xf32>,
    return
  }
  func.func @transform_0(%arg0: i32) -> (i32, i32, i32) {
    %c0_i32 = arith.constant 0 : i32
    %c0_i32_0 = arith.constant 0 : i32
    %c0_i32_1 = arith.constant 0 : i32
    return %arg0, %c0_i32, %c0_i32_0 : i32, i32, i32
  }
  func.func @transform_1(%arg0: i32) -> (i32, i32, i32, i32) {
    %c0_i32 = arith.constant 0 : i32
    %c0_i32_0 = arith.constant 0 : i32
    %c0_i32_1 = arith.constant 0 : i32
    %c0_i32_2 = arith.constant 0 : i32
    return %arg0, %c0_i32, %c0_i32_0, %c0_i32_1 : i32, i32, i32, i32
  }
  func.func @transform_2(%arg0: i32) -> (i32, i32, i32) {
    %c0_i32 = arith.constant 0 : i32
    %c0_i32_0 = arith.constant 0 : i32
    %c0_i32_1 = arith.constant 0 : i32
    %c0_i32_2 = arith.constant 0 : i32
    return %c0_i32, %c0_i32_0, %c0_i32_1 : i32, i32, i32
  }
  func.func @transform_3(%arg0: i32) -> (i32, i32) {
    %c0_i32 = arith.constant 0 : i32
    %c0_i32_0 = arith.constant 0 : i32
    %c0_i32_1 = arith.constant 0 : i32
    return %c0_i32, %c0_i32_0 : i32, i32
  }
  func.func @transform_4(%arg0: i32) -> (i32, i32, i32) {
    %c0_i32 = arith.constant 0 : i32
    %c0_i32_0 = arith.constant 0 : i32
    %c0_i32_1 = arith.constant 0 : i32
    return %arg0, %c0_i32, %c0_i32_0 : i32, i32, i32
  }
}

</mosaic_0001>

<llo_original>
// kernel: spade_forward.2
$region0: #{spade_forward.2}
  #allocation0 [shape = 'u32[]', space=smem, size = 0x4, offset = 0x4, fixed_abs, tag = 'smem constant byte address 0x4 - core index']
  #allocation1 [shape = 'u32[144,128]{1,0:T(1,128)}', space=vmem, size = 0x12000, scoped, tag = 'internal scratch']
  %s0 = inlined_call_operand.vmem [shape: bf16[512,32], index: 0, kind: input, shape index: {}]
  %s1 = inlined_call_operand.vmem [shape: bf16[32,128], index: 1, kind: input, shape index: {}]
  %s2 = inlined_call_operand.vmem [shape: bf16[512,128], index: 2, kind: output, shape index: {}]
  %s3 = sld [smem:[#allocation0]]
  $region18: #{spade_forward.2} parent=0
    _
  %s5 = ssub.s32 1, %s3
  %s6 = scalar_select 0, %s5, %s3
  // Predicated region
  $region2: #{spade_forward.2} parent=0 // pred_check
    _
  $region3: #{spade_forward.2} parent=0 // pred_check_branch
    %8 = sbr.rel (0) target = $region5
  $region4: #{spade_forward.2} parent=0 // pred_region
    _
  $region5: #{spade_forward.2} parent=0 // pred_fallthru
    _
  // Predicated region
  $region6: #{spade_forward.2} parent=0 // pred_check
    _
  $region7: #{spade_forward.2} parent=0 // pred_check_branch
    %10 = sbr.rel (0) target = $region9
  $region8: #{spade_forward.2} parent=0 // pred_region
    _
  $region9: #{spade_forward.2} parent=0 // pred_fallthru
    _
  %v12 = vld [vmem:[%s0] sm:$0xf]
  %v13 = vld [vmem:[%s0 + $0x4] sm:$0xf]
  %v14 = vld [vmem:[%s0 + $0x8] sm:$0xf]
  %v15 = vld [vmem:[%s0 + $0xc] sm:$0xf]
  %v16 = vld [vmem:[%s0 + $0x10] sm:$0xf]
  %v17 = vld [vmem:[%s0 + $0x14] sm:$0xf]
  %v18 = vld [vmem:[%s0 + $0x18] sm:$0xf]
  %v19 = vld [vmem:[%s0 + $0x1c] sm:$0xf]
  %v20 = vld [vmem:[%s0 + $0x20] sm:$0xf]
  %v21 = vld [vmem:[%s0 + $0x24] sm:$0xf]
  %v22 = vld [vmem:[%s0 + $0x28] sm:$0xf]
  %v23 = vld [vmem:[%s0 + $0x2c] sm:$0xf]
  %v24 = vld [vmem:[%s0 + $0x30] sm:$0xf]
  %v25 = vld [vmem:[%s0 + $0x34] sm:$0xf]
  %v26 = vld [vmem:[%s0 + $0x38] sm:$0xf]
  %v27 = vld [vmem:[%s0 + $0x3c] sm:$0xf]
  %v28 = vld [vmem:[%s0 + $0x40] sm:$0xf]
  %v29 = vld [vmem:[%s0 + $0x44] sm:$0xf]
  %v30 = vld [vmem:[%s0 + $0x48] sm:$0xf]
  %v31 = vld [vmem:[%s0 + $0x4c] sm:$0xf]
  %v32 = vld [vmem:[%s0 + $0x50] sm:$0xf]
  %v33 = vld [vmem:[%s0 + $0x54] sm:$0xf]
  %v34 = vld [vmem:[%s0 + $0x58] sm:$0xf]
  %v35 = vld [vmem:[%s0 + $0x5c] sm:$0xf]
  %v36 = vld [vmem:[%s0 + $0x60] sm:$0xf]
  %v37 = vld [vmem:[%s0 + $0x64] sm:$0xf]
  %v38 = vld [vmem:[%s0 + $0x68] sm:$0xf]
  %v39 = vld [vmem:[%s0 + $0x6c] sm:$0xf]
  %v40 = vld [vmem:[%s0 + $0x70] sm:$0xf]
  %v41 = vld [vmem:[%s0 + $0x74] sm:$0xf]
  %v42 = vld [vmem:[%s0 + $0x78] sm:$0xf]
  %v43 = vld [vmem:[%s0 + $0x7c] sm:$0xf]
  %v44 = vld [vmem:[%s0 + $0x80] sm:$0xf]
  %v45 = vld [vmem:[%s0 + $0x84] sm:$0xf]
  %v46 = vld [vmem:[%s0 + $0x88] sm:$0xf]
  %v47 = vld [vmem:[%s0 + $0x8c] sm:$0xf]
  %v48 = vld [vmem:[%s0 + $0x90] sm:$0xf]
  %v49 = vld [vmem:[%s0 + $0x94] sm:$0xf]
  %v50 = vld [vmem:[%s0 + $0x98] sm:$0xf]
  %v51 = vld [vmem:[%s0 + $0x9c] sm:$0xf]
  %v52 = vld [vmem:[%s0 + $0xa0] sm:$0xf]
  %v53 = vld [vmem:[%s0 + $0xa4] sm:$0xf]
  %v54 = vld [vmem:[%s0 + $0xa8] sm:$0xf]
  %v55 = vld [vmem:[%s0 + $0xac] sm:$0xf]
  %v56 = vld [vmem:[%s0 + $0xb0] sm:$0xf]
  %v57 = vld [vmem:[%s0 + $0xb4] sm:$0xf]
  %v58 = vld [vmem:[%s0 + $0xb8] sm:$0xf]
  %v59 = vld [vmem:[%s0 + $0xbc] sm:$0xf]
  %v60 = vld [vmem:[%s0 + $0xc0] sm:$0xf]
  %v61 = vld [vmem:[%s0 + $0xc4] sm:$0xf]
  %v62 = vld [vmem:[%s0 + $0xc8] sm:$0xf]
  %v63 = vld [vmem:[%s0 + $0xcc] sm:$0xf]
  %v64 = vld [vmem:[%s0 + $0xd0] sm:$0xf]
  %v65 = vld [vmem:[%s0 + $0xd4] sm:$0xf]
  %v66 = vld [vmem:[%s0 + $0xd8] sm:$0xf]
  %v67 = vld [vmem:[%s0 + $0xdc] sm:$0xf]
  %v68 = vld [vmem:[%s0 + $0xe0] sm:$0xf]
  %v69 = vld [vmem:[%s0 + $0xe4] sm:$0xf]
  %v70 = vld [vmem:[%s0 + $0xe8] sm:$0xf]
  %v71 = vld [vmem:[%s0 + $0xec] sm:$0xf]
  %v72 = vld [vmem:[%s0 + $0xf0] sm:$0xf]
  %v73 = vld [vmem:[%s0 + $0xf4] sm:$0xf]
  %v74 = vld [vmem:[%s0 + $0xf8] sm:$0xf]
  %v75 = vld [vmem:[%s0 + $0xfc] sm:$0xf]
  %v76 = vld [vmem:[%s1] sm:$0xf]
  %v77 = vld [vmem:[%s1 + $0x4] sm:$0xf]
  %v78 = vld [vmem:[%s1 + $0x8] sm:$0xf]
  %v79 = vld [vmem:[%s1 + $0xc] sm:$0xf]
  %v144 = vunpack.c.l.b16 %v12
  %v145 = vunpack.c.l.b16 %v13
  %v146 = vunpack.c.l.b16 %v14
  %v147 = vunpack.c.l.b16 %v15
  %v148 = vunpack.c.l.b16 %v16
  %v149 = vunpack.c.l.b16 %v17
  %v150 = vunpack.c.l.b16 %v18
  %v151 = vunpack.c.l.b16 %v19
  %v152 = vunpack.c.l.b16 %v20
  %v153 = vunpack.c.l.b16 %v21
  %v154 = vunpack.c.l.b16 %v22
  %v155 = vunpack.c.l.b16 %v23
  %v156 = vunpack.c.l.b16 %v24
  %v157 = vunpack.c.l.b16 %v25
  %v158 = vunpack.c.l.b16 %v26
  %v159 = vunpack.c.l.b16 %v27
  %v160 = vunpack.c.l.b16 %v28
  %v161 = vunpack.c.l.b16 %v29
  %v162 = vunpack.c.l.b16 %v30
  %v163 = vunpack.c.l.b16 %v31
  %v164 = vunpack.c.l.b16 %v32
  %v165 = vunpack.c.l.b16 %v33
  %v166 = vunpack.c.l.b16 %v34
  %v167 = vunpack.c.l.b16 %v35
  %v168 = vunpack.c.l.b16 %v36
  %v169 = vunpack.c.l.b16 %v37
  %v170 = vunpack.c.l.b16 %v38
  %v171 = vunpack.c.l.b16 %v39
  %v172 = vunpack.c.l.b16 %v40
  %v173 = vunpack.c.l.b16 %v41
  %v174 = vunpack.c.l.b16 %v42
  %v175 = vunpack.c.l.b16 %v43
  %v176 = vunpack.c.l.b16 %v44
  %v177 = vunpack.c.l.b16 %v45
  %v178 = vunpack.c.l.b16 %v46
  %v179 = vunpack.c.l.b16 %v47
  %v180 = vunpack.c.l.b16 %v48
  %v181 = vunpack.c.l.b16 %v49
  %v182 = vunpack.c.l.b16 %v50
  %v183 = vunpack.c.l.b16 %v51
  %v184 = vunpack.c.l.b16 %v52
  %v185 = vunpack.c.l.b16 %v53
  %v186 = vunpack.c.l.b16 %v54
  %v187 = vunpack.c.l.b16 %v55
  %v188 = vunpack.c.l.b16 %v56
  %v189 = vunpack.c.l.b16 %v57
  %v190 = vunpack.c.l.b16 %v58
  %v191 = vunpack.c.l.b16 %v59
  %v192 = vunpack.c.l.b16 %v60
  %v193 = vunpack.c.l.b16 %v61
  %v194 = vunpack.c.l.b16 %v62
  %v195 = vunpack.c.l.b16 %v63
  %v196 = vunpack.c.l.b16 %v64
  %v197 = vunpack.c.l.b16 %v65
  %v198 = vunpack.c.l.b16 %v66
  %v199 = vunpack.c.l.b16 %v67
  %v200 = vunpack.c.l.b16 %v68
  %v201 = vunpack.c.l.b16 %v69
  %v202 = vunpack.c.l.b16 %v70
  %v203 = vunpack.c.l.b16 %v71
  %v204 = vunpack.c.l.b16 %v72
  %v205 = vunpack.c.l.b16 %v73
  %v206 = vunpack.c.l.b16 %v74
  %v207 = vunpack.c.l.b16 %v75
  %v208 = vpack.c.b16 %v145, %v144
  %v209 = vpack.c.b16 %v147, %v146
  %v210 = vpack.c.b16 %v149, %v148
  %v211 = vpack.c.b16 %v151, %v150
  %v212 = vpack.c.b16 %v153, %v152
  %v213 = vpack.c.b16 %v155, %v154
  %v214 = vpack.c.b16 %v157, %v156
  %v215 = vpack.c.b16 %v159, %v158
  %v216 = vpack.c.b16 %v161, %v160
  %v217 = vpack.c.b16 %v163, %v162
  %v218 = vpack.c.b16 %v165, %v164
  %v219 = vpack.c.b16 %v167, %v166
  %v220 = vpack.c.b16 %v169, %v168
  %v221 = vpack.c.b16 %v171, %v170
  %v222 = vpack.c.b16 %v173, %v172
  %v223 = vpack.c.b16 %v175, %v174
  %v224 = vpack.c.b16 %v177, %v176
  %v225 = vpack.c.b16 %v179, %v178
  %v226 = vpack.c.b16 %v181, %v180
  %v227 = vpack.c.b16 %v183, %v182
  %v228 = vpack.c.b16 %v185, %v184
  %v229 = vpack.c.b16 %v187, %v186
  %v230 = vpack.c.b16 %v189, %v188
  %v231 = vpack.c.b16 %v191, %v190
  %v232 = vpack.c.b16 %v193, %v192
  %v233 = vpack.c.b16 %v195, %v194
  %v234 = vpack.c.b16 %v197, %v196
  %v235 = vpack.c.b16 %v199, %v198
  %v236 = vpack.c.b16 %v201, %v200
  %v237 = vpack.c.b16 %v203, %v202
  %v238 = vpack.c.b16 %v205, %v204
  %v239 = vpack.c.b16 %v207, %v206
  %v244 = vunpack.c.l.b16 %v76
  %v245 = vunpack.c.l.b16 %v77
  %v246 = vunpack.c.l.b16 %v78
  %v247 = vunpack.c.l.b16 %v79
  %v248 = vpack.c.b16 %v245, %v244
  %v249 = vpack.c.b16 %v247, %v246
  %vm252 = vcmask 261120
  %v254 = vsel %vm252, %v208, 0
  %v257 = vsel %vm252, %v209, 0
  %v260 = vsel %vm252, %v210, 0
  %v263 = vsel %vm252, %v211, 0
  %v266 = vsel %vm252, %v212, 0
  %v269 = vsel %vm252, %v213, 0
  %v272 = vsel %vm252, %v214, 0
  %v275 = vsel %vm252, %v215, 0
  %v278 = vsel %vm252, %v216, 0
  %v281 = vsel %vm252, %v217, 0
  %v284 = vsel %vm252, %v218, 0
  %v287 = vsel %vm252, %v219, 0
  %v290 = vsel %vm252, %v220, 0
  %v293 = vsel %vm252, %v221, 0
  %v296 = vsel %vm252, %v222, 0
  %v299 = vsel %vm252, %v223, 0
  %v302 = vsel %vm252, %v224, 0
  %v305 = vsel %vm252, %v225, 0
  %v308 = vsel %vm252, %v226, 0
  %v311 = vsel %vm252, %v227, 0
  %v314 = vsel %vm252, %v228, 0
  %v317 = vsel %vm252, %v229, 0
  %v320 = vsel %vm252, %v230, 0
  %v323 = vsel %vm252, %v231, 0
  %v326 = vsel %vm252, %v232, 0
  %v329 = vsel %vm252, %v233, 0
  %v332 = vsel %vm252, %v234, 0
  %v335 = vsel %vm252, %v235, 0
  %v338 = vsel %vm252, %v236, 0
  %v341 = vsel %vm252, %v237, 0
  %v344 = vsel %vm252, %v238, 0
  %v347 = vsel %vm252, %v239, 0
  %349 = vmatprep.subr.bf16.mxu0 0
  %350 = vmatpush1.bf16.msra.mxu0 0
  %351 = vmatprep.subr.bf16.mxu0 0
  %352 = vmatpush1.bf16.msra.mxu0 0
  %353 = vmatprep.subr.bf16.mxu0 0
  %354 = vmatpush1.bf16.msra.mxu0 0
  %355 = vmatprep.subr.bf16.mxu0 0
  %356 = vmatpush1.bf16.msra.mxu0 0
  %357 = vmatprep.subr.bf16.mxu0 0
  %358 = vmatpush1.bf16.msra.mxu0 0
  %359 = vmatprep.subr.bf16.mxu0 0
  %360 = vmatpush1.bf16.msra.mxu0 0
  %361 = vmatprep.subr.bf16.mxu0 0
  %362 = vmatpush1.bf16.msra.mxu0 %v249
  %363 = vmatprep.subr.bf16.mxu0 0
  %364 = vmatpush1.bf16.msra.mxu0 %v248
  %365 = vmatprep.subr.bf16.mxu0 0
  %366 = vmatpush2.bf16.msra.mxu0 0
  %367 = vmatprep.subr.bf16.mxu0 0
  %368 = vmatpush2.bf16.msra.mxu0 0
  %369 = vmatprep.subr.bf16.mxu0 0
  %370 = vmatpush2.bf16.msra.mxu0 0
  %371 = vmatprep.subr.bf16.mxu0 0
  %372 = vmatpush2.bf16.msra.mxu0 0
  %373 = vmatprep.subr.bf16.mxu0 0
  %374 = vmatpush2.bf16.msra.mxu0 0
  %375 = vmatprep.subr.bf16.mxu0 0
  %376 = vmatpush2.bf16.msra.mxu0 0
  %377 = vmatprep.subr.bf16.mxu0 0
  %378 = vmatpush2.bf16.msra.mxu0 0
  %379 = vmatprep.subr.bf16.mxu0 0
  %380 = vmatpush2.bf16.msra.mxu0 0
  %381 = vmatprep.mubr.bf16.mxu0 0
  %382 = vmatmul.mubr.bf16.gmra.mxu0 %v254
  %v383 = vpop.f32.mrf.mxu0
  %v384 = vadd.f32 0.0, %v383
  %v385 = vpop.f32.mrf.mxu0
  %v386 = vpop.f32.mrf.mxu0
  %v387 = vadd.f32 0.0, %v386
  %v388 = vpop.f32.mrf.mxu0
  %389 = vmatprep.mubr.bf16.mxu0 0
  %390 = vmatmul.mubr.bf16.gmra.mxu0 %v257
  %v391 = vpop.f32.mrf.mxu0
  %v392 = vadd.f32 0.0, %v391
  %v393 = vpop.f32.mrf.mxu0
  %v394 = vpop.f32.mrf.mxu0
  %v395 = vadd.f32 0.0, %v394
  %v396 = vpop.f32.mrf.mxu0
  %397 = vmatprep.mubr.bf16.mxu0 0
  %398 = vmatmul.mubr.bf16.gmra.mxu0 %v260
  %v399 = vpop.f32.mrf.mxu0
  %v400 = vadd.f32 0.0, %v399
  %v401 = vpop.f32.mrf.mxu0
  %v402 = vpop.f32.mrf.mxu0
  %v403 = vadd.f32 0.0, %v402
  %v404 = vpop.f32.mrf.mxu0
  %405 = vmatprep.mubr.bf16.mxu0 0
  %406 = vmatmul.mubr.bf16.gmra.mxu0 %v263
  %v407 = vpop.f32.mrf.mxu0
  %v408 = vadd.f32 0.0, %v407
  %v409 = vpop.f32.mrf.mxu0
  %v410 = vpop.f32.mrf.mxu0
  %v411 = vadd.f32 0.0, %v410
  %v412 = vpop.f32.mrf.mxu0
  %413 = vmatprep.mubr.bf16.mxu0 0
  %414 = vmatmul.mubr.bf16.gmra.mxu0 %v266
  %v415 = vpop.f32.mrf.mxu0
  %v416 = vadd.f32 0.0, %v415
  %v417 = vpop.f32.mrf.mxu0
  %v418 = vpop.f32.mrf.mxu0
  %v419 = vadd.f32 0.0, %v418
  %v420 = vpop.f32.mrf.mxu0
  %421 = vmatprep.mubr.bf16.mxu0 0
  %422 = vmatmul.mubr.bf16.gmra.mxu0 %v269
  %v423 = vpop.f32.mrf.mxu0
  %v424 = vadd.f32 0.0, %v423
  %v425 = vpop.f32.mrf.mxu0
  %v426 = vpop.f32.mrf.mxu0
  %v427 = vadd.f32 0.0, %v426
  %v428 = vpop.f32.mrf.mxu0
  %429 = vmatprep.mubr.bf16.mxu0 0
  %430 = vmatmul.mubr.bf16.gmra.mxu0 %v272
  %v431 = vpop.f32.mrf.mxu0
  %v432 = vadd.f32 0.0, %v431
  %v433 = vpop.f32.mrf.mxu0
  %v434 = vpop.f32.mrf.mxu0
  %v435 = vadd.f32 0.0, %v434
  %v436 = vpop.f32.mrf.mxu0
  %437 = vmatprep.mubr.bf16.mxu0 0
  %438 = vmatmul.mubr.bf16.gmra.mxu0 %v275
  %v439 = vpop.f32.mrf.mxu0
  %v440 = vadd.f32 0.0, %v439
  %v441 = vpop.f32.mrf.mxu0
  %v442 = vpop.f32.mrf.mxu0
  %v443 = vadd.f32 0.0, %v442
  %v444 = vpop.f32.mrf.mxu0
  %445 = vmatprep.mubr.bf16.mxu0 0
  %446 = vmatmul.mubr.bf16.gmra.mxu0 %v278
  %v447 = vpop.f32.mrf.mxu0
  %v448 = vadd.f32 0.0, %v447
  %v449 = vpop.f32.mrf.mxu0
  %v450 = vpop.f32.mrf.mxu0
  %v451 = vadd.f32 0.0, %v450
  %v452 = vpop.f32.mrf.mxu0
  %453 = vmatprep.mubr.bf16.mxu0 0
  %454 = vmatmul.mubr.bf16.gmra.mxu0 %v281
  %v455 = vpop.f32.mrf.mxu0
  %v456 = vadd.f32 0.0, %v455
  %v457 = vpop.f32.mrf.mxu0
  %v458 = vpop.f32.mrf.mxu0
  %v459 = vadd.f32 0.0, %v458
  %v460 = vpop.f32.mrf.mxu0
  %461 = vmatprep.mubr.bf16.mxu0 0
  %462 = vmatmul.mubr.bf16.gmra.mxu0 %v284
  %v463 = vpop.f32.mrf.mxu0
  %v464 = vadd.f32 0.0, %v463
  %v465 = vpop.f32.mrf.mxu0
  %v466 = vpop.f32.mrf.mxu0
  %v467 = vadd.f32 0.0, %v466
  %v468 = vpop.f32.mrf.mxu0
  %469 = vmatprep.mubr.bf16.mxu0 0
  %470 = vmatmul.mubr.bf16.gmra.mxu0 %v287
  %v471 = vpop.f32.mrf.mxu0
  %v472 = vadd.f32 0.0, %v471
  %v473 = vpop.f32.mrf.mxu0
  %v474 = vpop.f32.mrf.mxu0
  %v475 = vadd.f32 0.0, %v474
  %v476 = vpop.f32.mrf.mxu0
  %477 = vmatprep.mubr.bf16.mxu0 0
  %478 = vmatmul.mubr.bf16.gmra.mxu0 %v290
  %v479 = vpop.f32.mrf.mxu0
  %v480 = vadd.f32 0.0, %v479
  %v481 = vpop.f32.mrf.mxu0
  %v482 = vpop.f32.mrf.mxu0
  %v483 = vadd.f32 0.0, %v482
  %v484 = vpop.f32.mrf.mxu0
  %485 = vmatprep.mubr.bf16.mxu0 0
  %486 = vmatmul.mubr.bf16.gmra.mxu0 %v293
  %v487 = vpop.f32.mrf.mxu0
  %v488 = vadd.f32 0.0, %v487
  %v489 = vpop.f32.mrf.mxu0
  %v490 = vpop.f32.mrf.mxu0
  %v491 = vadd.f32 0.0, %v490
  %v492 = vpop.f32.mrf.mxu0
  %493 = vmatprep.mubr.bf16.mxu0 0
  %494 = vmatmul.mubr.bf16.gmra.mxu0 %v296
  %v495 = vpop.f32.mrf.mxu0
  %v496 = vadd.f32 0.0, %v495
  %v497 = vpop.f32.mrf.mxu0
  %v498 = vpop.f32.mrf.mxu0
  %v499 = vadd.f32 0.0, %v498
  %v500 = vpop.f32.mrf.mxu0
  %501 = vmatprep.mubr.bf16.mxu0 0
  %502 = vmatmul.mubr.bf16.gmra.mxu0 %v299
  %v503 = vpop.f32.mrf.mxu0
  %v504 = vadd.f32 0.0, %v503
  %v505 = vpop.f32.mrf.mxu0
  %v506 = vpop.f32.mrf.mxu0
  %v507 = vadd.f32 0.0, %v506
  %v508 = vpop.f32.mrf.mxu0
  %509 = vmatprep.mubr.bf16.mxu0 0
  %510 = vmatmul.mubr.bf16.gmra.mxu0 %v302
  %v511 = vpop.f32.mrf.mxu0
  %v512 = vadd.f32 0.0, %v511
  %v513 = vpop.f32.mrf.mxu0
  %v514 = vpop.f32.mrf.mxu0
  %v515 = vadd.f32 0.0, %v514
  %v516 = vpop.f32.mrf.mxu0
  %517 = vmatprep.mubr.bf16.mxu0 0
  %518 = vmatmul.mubr.bf16.gmra.mxu0 %v305
  %v519 = vpop.f32.mrf.mxu0
  %v520 = vadd.f32 0.0, %v519
  %v521 = vpop.f32.mrf.mxu0
  %v522 = vpop.f32.mrf.mxu0
  %v523 = vadd.f32 0.0, %v522
  %v524 = vpop.f32.mrf.mxu0
  %525 = vmatprep.mubr.bf16.mxu0 0
  %526 = vmatmul.mubr.bf16.gmra.mxu0 %v308
  %v527 = vpop.f32.mrf.mxu0
  %v528 = vadd.f32 0.0, %v527
  %v529 = vpop.f32.mrf.mxu0
  %v530 = vpop.f32.mrf.mxu0
  %v531 = vadd.f32 0.0, %v530
  %v532 = vpop.f32.mrf.mxu0
  %533 = vmatprep.mubr.bf16.mxu0 0
  %534 = vmatmul.mubr.bf16.gmra.mxu0 %v311
  %v535 = vpop.f32.mrf.mxu0
  %v536 = vadd.f32 0.0, %v535
  %v537 = vpop.f32.mrf.mxu0
  %v538 = vpop.f32.mrf.mxu0
  %v539 = vadd.f32 0.0, %v538
  %v540 = vpop.f32.mrf.mxu0
  %541 = vmatprep.mubr.bf16.mxu0 0
  %542 = vmatmul.mubr.bf16.gmra.mxu0 %v314
  %v543 = vpop.f32.mrf.mxu0
  %v544 = vadd.f32 0.0, %v543
  %v545 = vpop.f32.mrf.mxu0
  %v546 = vpop.f32.mrf.mxu0
  %v547 = vadd.f32 0.0, %v546
  %v548 = vpop.f32.mrf.mxu0
  %549 = vmatprep.mubr.bf16.mxu0 0
  %550 = vmatmul.mubr.bf16.gmra.mxu0 %v317
  %v551 = vpop.f32.mrf.mxu0
  %v552 = vadd.f32 0.0, %v551
  %v553 = vpop.f32.mrf.mxu0
  %v554 = vpop.f32.mrf.mxu0
  %v555 = vadd.f32 0.0, %v554
  %v556 = vpop.f32.mrf.mxu0
  %557 = vmatprep.mubr.bf16.mxu0 0
  %558 = vmatmul.mubr.bf16.gmra.mxu0 %v320
  %v559 = vpop.f32.mrf.mxu0
  %v560 = vadd.f32 0.0, %v559
  %v561 = vpop.f32.mrf.mxu0
  %v562 = vpop.f32.mrf.mxu0
  %v563 = vadd.f32 0.0, %v562
  %v564 = vpop.f32.mrf.mxu0
  %565 = vmatprep.mubr.bf16.mxu0 0
  %566 = vmatmul.mubr.bf16.gmra.mxu0 %v323
  %v567 = vpop.f32.mrf.mxu0
  %v568 = vadd.f32 0.0, %v567
  %v569 = vpop.f32.mrf.mxu0
  %v570 = vpop.f32.mrf.mxu0
  %v571 = vadd.f32 0.0, %v570
  %v572 = vpop.f32.mrf.mxu0
  %573 = vmatprep.mubr.bf16.mxu0 0
  %574 = vmatmul.mubr.bf16.gmra.mxu0 %v326
  %v575 = vpop.f32.mrf.mxu0
  %v576 = vadd.f32 0.0, %v575
  %v577 = vpop.f32.mrf.mxu0
  %v578 = vpop.f32.mrf.mxu0
  %v579 = vadd.f32 0.0, %v578
  %v580 = vpop.f32.mrf.mxu0
  %581 = vmatprep.mubr.bf16.mxu0 0
  %582 = vmatmul.mubr.bf16.gmra.mxu0 %v329
  %v583 = vpop.f32.mrf.mxu0
  %v584 = vadd.f32 0.0, %v583
  %v585 = vpop.f32.mrf.mxu0
  %v586 = vpop.f32.mrf.mxu0
  %v587 = vadd.f32 0.0, %v586
  %v588 = vpop.f32.mrf.mxu0
  %589 = vmatprep.mubr.bf16.mxu0 0
  %590 = vmatmul.mubr.bf16.gmra.mxu0 %v332
  %v591 = vpop.f32.mrf.mxu0
  %v592 = vadd.f32 0.0, %v591
  %v593 = vpop.f32.mrf.mxu0
  %v594 = vpop.f32.mrf.mxu0
  %v595 = vadd.f32 0.0, %v594
  %v596 = vpop.f32.mrf.mxu0
  %597 = vmatprep.mubr.bf16.mxu0 0
  %598 = vmatmul.mubr.bf16.gmra.mxu0 %v335
  %v599 = vpop.f32.mrf.mxu0
  %v600 = vadd.f32 0.0, %v599
  %v601 = vpop.f32.mrf.mxu0
  %v602 = vpop.f32.mrf.mxu0
  %v603 = vadd.f32 0.0, %v602
  %v604 = vpop.f32.mrf.mxu0
  %605 = vmatprep.mubr.bf16.mxu0 0
  %606 = vmatmul.mubr.bf16.gmra.mxu0 %v338
  %v607 = vpop.f32.mrf.mxu0
  %v608 = vadd.f32 0.0, %v607
  %v609 = vpop.f32.mrf.mxu0
  %v610 = vpop.f32.mrf.mxu0
  %v611 = vadd.f32 0.0, %v610
  %v612 = vpop.f32.mrf.mxu0
  %613 = vmatprep.mubr.bf16.mxu0 0
  %614 = vmatmul.mubr.bf16.gmra.mxu0 %v341
  %v615 = vpop.f32.mrf.mxu0
  %v616 = vadd.f32 0.0, %v615
  %v617 = vpop.f32.mrf.mxu0
  %v618 = vpop.f32.mrf.mxu0
  %v619 = vadd.f32 0.0, %v618
  %v620 = vpop.f32.mrf.mxu0
  %621 = vmatprep.mubr.bf16.mxu0 0
  %622 = vmatmul.mubr.bf16.gmra.mxu0 %v344
  %v623 = vpop.f32.mrf.mxu0
  %v624 = vadd.f32 0.0, %v623
  %v625 = vpop.f32.mrf.mxu0
  %v626 = vpop.f32.mrf.mxu0
  %v627 = vadd.f32 0.0, %v626
  %v628 = vpop.f32.mrf.mxu0
  %629 = vmatprep.mubr.bf16.mxu0 0
  %630 = vmatmul.mubr.bf16.gmra.mxu0 %v347
  %v631 = vpop.f32.mrf.mxu0
  %v632 = vadd.f32 0.0, %v631
  %v633 = vpop.f32.mrf.mxu0
  %v634 = vpop.f32.mrf.mxu0
  %v635 = vadd.f32 0.0, %v634
  %v636 = vpop.f32.mrf.mxu0
  %637 = vdwg.mxu0
  %vm638 = vcmp.ge.f32.partialorder %v384, 0.0
  %vm639 = vcmp.ge.f32.partialorder %v387, 0.0
  %vm640 = vcmp.ge.f32.partialorder %v392, 0.0
  %vm641 = vcmp.ge.f32.partialorder %v395, 0.0
  %vm642 = vcmp.ge.f32.partialorder %v400, 0.0
  %vm643 = vcmp.ge.f32.partialorder %v403, 0.0
  %vm644 = vcmp.ge.f32.partialorder %v408, 0.0
  %vm645 = vcmp.ge.f32.partialorder %v411, 0.0
  %vm646 = vcmp.ge.f32.partialorder %v416, 0.0
  %vm647 = vcmp.ge.f32.partialorder %v419, 0.0
  %vm648 = vcmp.ge.f32.partialorder %v424, 0.0
  %vm649 = vcmp.ge.f32.partialorder %v427, 0.0
  %vm650 = vcmp.ge.f32.partialorder %v432, 0.0
  %vm651 = vcmp.ge.f32.partialorder %v435, 0.0
  %vm652 = vcmp.ge.f32.partialorder %v440, 0.0
  %vm653 = vcmp.ge.f32.partialorder %v443, 0.0
  %vm654 = vcmp.ge.f32.partialorder %v448, 0.0
  %vm655 = vcmp.ge.f32.partialorder %v451, 0.0
  %vm656 = vcmp.ge.f32.partialorder %v456, 0.0
  %vm657 = vcmp.ge.f32.partialorder %v459, 0.0
  %vm658 = vcmp.ge.f32.partialorder %v464, 0.0
  %vm659 = vcmp.ge.f32.partialorder %v467, 0.0
  %vm660 = vcmp.ge.f32.partialorder %v472, 0.0
  %vm661 = vcmp.ge.f32.partialorder %v475, 0.0
  %vm662 = vcmp.ge.f32.partialorder %v480, 0.0
  %vm663 = vcmp.ge.f32.partialorder %v483, 0.0
  %vm664 = vcmp.ge.f32.partialorder %v488, 0.0
  %vm665 = vcmp.ge.f32.partialorder %v491, 0.0
  %vm666 = vcmp.ge.f32.partialorder %v496, 0.0
  %vm667 = vcmp.ge.f32.partialorder %v499, 0.0
  %vm668 = vcmp.ge.f32.partialorder %v504, 0.0
  %vm669 = vcmp.ge.f32.partialorder %v507, 0.0
  %vm670 = vcmp.ge.f32.partialorder %v512, 0.0
  %vm671 = vcmp.ge.f32.partialorder %v515, 0.0
  %vm672 = vcmp.ge.f32.partialorder %v520, 0.0
  %vm673 = vcmp.ge.f32.partialorder %v523, 0.0
  %vm674 = vcmp.ge.f32.partialorder %v528, 0.0
  %vm675 = vcmp.ge.f32.partialorder %v531, 0.0
  %vm676 = vcmp.ge.f32.partialorder %v536, 0.0
  %vm677 = vcmp.ge.f32.partialorder %v539, 0.0
  %vm678 = vcmp.ge.f32.partialorder %v544, 0.0
  %vm679 = vcmp.ge.f32.partialorder %v547, 0.0
  %vm680 = vcmp.ge.f32.partialorder %v552, 0.0
  %vm681 = vcmp.ge.f32.partialorder %v555, 0.0
  %vm682 = vcmp.ge.f32.partialorder %v560, 0.0
  %vm683 = vcmp.ge.f32.partialorder %v563, 0.0
  %vm684 = vcmp.ge.f32.partialorder %v568, 0.0
  %vm685 = vcmp.ge.f32.partialorder %v571, 0.0
  %vm686 = vcmp.ge.f32.partialorder %v576, 0.0
  %vm687 = vcmp.ge.f32.partialorder %v579, 0.0
  %vm688 = vcmp.ge.f32.partialorder %v584, 0.0
  %vm689 = vcmp.ge.f32.partialorder %v587, 0.0
  %vm690 = vcmp.ge.f32.partialorder %v592, 0.0
  %vm691 = vcmp.ge.f32.partialorder %v595, 0.0
  %vm692 = vcmp.ge.f32.partialorder %v600, 0.0
  %vm693 = vcmp.ge.f32.partialorder %v603, 0.0
  %vm694 = vcmp.ge.f32.partialorder %v608, 0.0
  %vm695 = vcmp.ge.f32.partialorder %v611, 0.0
  %vm696 = vcmp.ge.f32.partialorder %v616, 0.0
  %vm697 = vcmp.ge.f32.partialorder %v619, 0.0
  %vm698 = vcmp.ge.f32.partialorder %v624, 0.0
  %vm699 = vcmp.ge.f32.partialorder %v627, 0.0
  %vm700 = vcmp.ge.f32.partialorder %v632, 0.0
  %vm701 = vcmp.ge.f32.partialorder %v635, 0.0
  %v702 = vmul.f32 %v384, 0.2
  %v703 = vmul.f32 %v387, 0.2
  %v704 = vmul.f32 %v392, 0.2
  %v705 = vmul.f32 %v395, 0.2
  %v706 = vmul.f32 %v400, 0.2
  %v707 = vmul.f32 %v403, 0.2
  %v708 = vmul.f32 %v408, 0.2
  %v709 = vmul.f32 %v411, 0.2
  %v710 = vmul.f32 %v416, 0.2
  %v711 = vmul.f32 %v419, 0.2
  %v712 = vmul.f32 %v424, 0.2
  %v713 = vmul.f32 %v427, 0.2
  %v714 = vmul.f32 %v432, 0.2
  %v715 = vmul.f32 %v435, 0.2
  %v716 = vmul.f32 %v440, 0.2
  %v717 = vmul.f32 %v443, 0.2
  %v718 = vmul.f32 %v448, 0.2
  %v719 = vmul.f32 %v451, 0.2
  %v720 = vmul.f32 %v456, 0.2
  %v721 = vmul.f32 %v459, 0.2
  %v722 = vmul.f32 %v464, 0.2
  %v723 = vmul.f32 %v467, 0.2
  %v724 = vmul.f32 %v472, 0.2
  %v725 = vmul.f32 %v475, 0.2
  %v726 = vmul.f32 %v480, 0.2
  %v727 = vmul.f32 %v483, 0.2
  %v728 = vmul.f32 %v488, 0.2
  %v729 = vmul.f32 %v491, 0.2
  %v730 = vmul.f32 %v496, 0.2
  %v731 = vmul.f32 %v499, 0.2
  %v732 = vmul.f32 %v504, 0.2
  %v733 = vmul.f32 %v507, 0.2
  %v734 = vmul.f32 %v512, 0.2
  %v735 = vmul.f32 %v515, 0.2
  %v736 = vmul.f32 %v520, 0.2
  %v737 = vmul.f32 %v523, 0.2
  %v738 = vmul.f32 %v528, 0.2
  %v739 = vmul.f32 %v531, 0.2
  %v740 = vmul.f32 %v536, 0.2
  %v741 = vmul.f32 %v539, 0.2
  %v742 = vmul.f32 %v544, 0.2
  %v743 = vmul.f32 %v547, 0.2
  %v744 = vmul.f32 %v552, 0.2
  %v745 = vmul.f32 %v555, 0.2
  %v746 = vmul.f32 %v560, 0.2
  %v747 = vmul.f32 %v563, 0.2
  %v748 = vmul.f32 %v568, 0.2
  %v749 = vmul.f32 %v571, 0.2
  %v750 = vmul.f32 %v576, 0.2
  %v751 = vmul.f32 %v579, 0.2
  %v752 = vmul.f32 %v584, 0.2
  %v753 = vmul.f32 %v587, 0.2
  %v754 = vmul.f32 %v592, 0.2
  %v755 = vmul.f32 %v595, 0.2
  %v756 = vmul.f32 %v600, 0.2
  %v757 = vmul.f32 %v603, 0.2
  %v758 = vmul.f32 %v608, 0.2
  %v759 = vmul.f32 %v611, 0.2
  %v760 = vmul.f32 %v616, 0.2
  %v761 = vmul.f32 %v619, 0.2
  %v762 = vmul.f32 %v624, 0.2
  %v763 = vmul.f32 %v627, 0.2
  %v764 = vmul.f32 %v632, 0.2
  %v765 = vmul.f32 %v635, 0.2
  %v766 = vsel %vm638, %v384, %v702
  %v767 = vsel %vm639, %v387, %v703
  %v768 = vsel %vm640, %v392, %v704
  %v769 = vsel %vm641, %v395, %v705
  %v770 = vsel %vm642, %v400, %v706
  %v771 = vsel %vm643, %v403, %v707
  %v772 = vsel %vm644, %v408, %v708
  %v773 = vsel %vm645, %v411, %v709
  %v774 = vsel %vm646, %v416, %v710
  %v775 = vsel %vm647, %v419, %v711
  %v776 = vsel %vm648, %v424, %v712
  %v777 = vsel %vm649, %v427, %v713
  %v778 = vsel %vm650, %v432, %v714
  %v779 = vsel %vm651, %v435, %v715
  %v780 = vsel %vm652, %v440, %v716
  %v781 = vsel %vm653, %v443, %v717
  %v782 = vsel %vm654, %v448, %v718
  %v783 = vsel %vm655, %v451, %v719
  %v784 = vsel %vm656, %v456, %v720
  %v785 = vsel %vm657, %v459, %v721
  %v786 = vsel %vm658, %v464, %v722
  %v787 = vsel %vm659, %v467, %v723
  %v788 = vsel %vm660, %v472, %v724
  %v789 = vsel %vm661, %v475, %v725
  %v790 = vsel %vm662, %v480, %v726
  %v791 = vsel %vm663, %v483, %v727
  %v792 = vsel %vm664, %v488, %v728
  %v793 = vsel %vm665, %v491, %v729
  %v794 = vsel %vm666, %v496, %v730
  %v795 = vsel %vm667, %v499, %v731
  %v796 = vsel %vm668, %v504, %v732
  %v797 = vsel %vm669, %v507, %v733
  %v798 = vsel %vm670, %v512, %v734
  %v799 = vsel %vm671, %v515, %v735
  %v800 = vsel %vm672, %v520, %v736
  %v801 = vsel %vm673, %v523, %v737
  %v802 = vsel %vm674, %v528, %v738
  %v803 = vsel %vm675, %v531, %v739
  %v804 = vsel %vm676, %v536, %v740
  %v805 = vsel %vm677, %v539, %v741
  %v806 = vsel %vm678, %v544, %v742
  %v807 = vsel %vm679, %v547, %v743
  %v808 = vsel %vm680, %v552, %v744
  %v809 = vsel %vm681, %v555, %v745
  %v810 = vsel %vm682, %v560, %v746
  %v811 = vsel %vm683, %v563, %v747
  %v812 = vsel %vm684, %v568, %v748
  %v813 = vsel %vm685, %v571, %v749
  %v814 = vsel %vm686, %v576, %v750
  %v815 = vsel %vm687, %v579, %v751
  %v816 = vsel %vm688, %v584, %v752
  %v817 = vsel %vm689, %v587, %v753
  %v818 = vsel %vm690, %v592, %v754
  %v819 = vsel %vm691, %v595, %v755
  %v820 = vsel %vm692, %v600, %v756
  %v821 = vsel %vm693, %v603, %v757
  %v822 = vsel %vm694, %v608, %v758
  %v823 = vsel %vm695, %v611, %v759
  %v824 = vsel %vm696, %v616, %v760
  %v825 = vsel %vm697, %v619, %v761
  %v826 = vsel %vm698, %v624, %v762
  %v827 = vsel %vm699, %v627, %v763
  %v828 = vsel %vm700, %v632, %v764
  %v829 = vsel %vm701, %v635, %v765
  %v830 = vpack.c.bf16 %v767, %v766
  %v831 = vpack.c.bf16 %v769, %v768
  %v832 = vpack.c.bf16 %v771, %v770
  %v833 = vpack.c.bf16 %v773, %v772
  %v834 = vpack.c.bf16 %v775, %v774
  %v835 = vpack.c.bf16 %v777, %v776
  %v836 = vpack.c.bf16 %v779, %v778
  %v837 = vpack.c.bf16 %v781, %v780
  %v838 = vpack.c.bf16 %v783, %v782
  %v839 = vpack.c.bf16 %v785, %v784
  %v840 = vpack.c.bf16 %v787, %v786
  %v841 = vpack.c.bf16 %v789, %v788
  %v842 = vpack.c.bf16 %v791, %v790
  %v843 = vpack.c.bf16 %v793, %v792
  %v844 = vpack.c.bf16 %v795, %v794
  %v845 = vpack.c.bf16 %v797, %v796
  %v846 = vpack.c.bf16 %v799, %v798
  %v847 = vpack.c.bf16 %v801, %v800
  %v848 = vpack.c.bf16 %v803, %v802
  %v849 = vpack.c.bf16 %v805, %v804
  %v850 = vpack.c.bf16 %v807, %v806
  %v851 = vpack.c.bf16 %v809, %v808
  %v852 = vpack.c.bf16 %v811, %v810
  %v853 = vpack.c.bf16 %v813, %v812
  %v854 = vpack.c.bf16 %v815, %v814
  %v855 = vpack.c.bf16 %v817, %v816
  %v856 = vpack.c.bf16 %v819, %v818
  %v857 = vpack.c.bf16 %v821, %v820
  %v858 = vpack.c.bf16 %v823, %v822
  %v859 = vpack.c.bf16 %v825, %v824
  %v860 = vpack.c.bf16 %v827, %v826
  %v861 = vpack.c.bf16 %v829, %v828
  %v894 = vunpack.c.l.b16 %v830
  %v895 = vunpack.c.h.b16 %v830
  %v896 = vunpack.c.l.b16 %v831
  %v897 = vunpack.c.h.b16 %v831
  %v898 = vunpack.c.l.b16 %v832
  %v899 = vunpack.c.h.b16 %v832
  %v900 = vunpack.c.l.b16 %v833
  %v901 = vunpack.c.h.b16 %v833
  %v902 = vunpack.c.l.b16 %v834
  %v903 = vunpack.c.h.b16 %v834
  %v904 = vunpack.c.l.b16 %v835
  %v905 = vunpack.c.h.b16 %v835
  %v906 = vunpack.c.l.b16 %v836
  %v907 = vunpack.c.h.b16 %v836
  %v908 = vunpack.c.l.b16 %v837
  %v909 = vunpack.c.h.b16 %v837
  %v910 = vunpack.c.l.b16 %v838
  %v911 = vunpack.c.h.b16 %v838
  %v912 = vunpack.c.l.b16 %v839
  %v913 = vunpack.c.h.b16 %v839
  %v914 = vunpack.c.l.b16 %v840
  %v915 = vunpack.c.h.b16 %v840
  %v916 = vunpack.c.l.b16 %v841
  %v917 = vunpack.c.h.b16 %v841
  %v918 = vunpack.c.l.b16 %v842
  %v919 = vunpack.c.h.b16 %v842
  %v920 = vunpack.c.l.b16 %v843
  %v921 = vunpack.c.h.b16 %v843
  %v922 = vunpack.c.l.b16 %v844
  %v923 = vunpack.c.h.b16 %v844
  %v924 = vunpack.c.l.b16 %v845
  %v925 = vunpack.c.h.b16 %v845
  %v926 = vunpack.c.l.b16 %v846
  %v927 = vunpack.c.h.b16 %v846
  %v928 = vunpack.c.l.b16 %v847
  %v929 = vunpack.c.h.b16 %v847
  %v930 = vunpack.c.l.b16 %v848
  %v931 = vunpack.c.h.b16 %v848
  %v932 = vunpack.c.l.b16 %v849
  %v933 = vunpack.c.h.b16 %v849
  %v934 = vunpack.c.l.b16 %v850
  %v935 = vunpack.c.h.b16 %v850
  %v936 = vunpack.c.l.b16 %v851
  %v937 = vunpack.c.h.b16 %v851
  %v938 = vunpack.c.l.b16 %v852
  %v939 = vunpack.c.h.b16 %v852
  %v940 = vunpack.c.l.b16 %v853
  %v941 = vunpack.c.h.b16 %v853
  %v942 = vunpack.c.l.b16 %v854
  %v943 = vunpack.c.h.b16 %v854
  %v944 = vunpack.c.l.b16 %v855
  %v945 = vunpack.c.h.b16 %v855
  %v946 = vunpack.c.l.b16 %v856
  %v947 = vunpack.c.h.b16 %v856
  %v948 = vunpack.c.l.b16 %v857
  %v949 = vunpack.c.h.b16 %v857
  %v950 = vunpack.c.l.b16 %v858
  %v951 = vunpack.c.h.b16 %v858
  %v952 = vunpack.c.l.b16 %v859
  %v953 = vunpack.c.h.b16 %v859
  %v954 = vunpack.c.l.b16 %v860
  %v955 = vunpack.c.h.b16 %v860
  %v956 = vunpack.c.l.b16 %v861
  %v957 = vunpack.c.h.b16 %v861
  %v958 = vpack.c.b16 %v894, %v894
  %v959 = vpack.c.b16 %v895, %v895
  %v960 = vpack.c.b16 %v896, %v896
  %v961 = vpack.c.b16 %v897, %v897
  %v962 = vpack.c.b16 %v898, %v898
  %v963 = vpack.c.b16 %v899, %v899
  %v964 = vpack.c.b16 %v900, %v900
  %v965 = vpack.c.b16 %v901, %v901
  %v966 = vpack.c.b16 %v902, %v902
  %v967 = vpack.c.b16 %v903, %v903
  %v968 = vpack.c.b16 %v904, %v904
  %v969 = vpack.c.b16 %v905, %v905
  %v970 = vpack.c.b16 %v906, %v906
  %v971 = vpack.c.b16 %v907, %v907
  %v972 = vpack.c.b16 %v908, %v908
  %v973 = vpack.c.b16 %v909, %v909
  %v974 = vpack.c.b16 %v910, %v910
  %v975 = vpack.c.b16 %v911, %v911
  %v976 = vpack.c.b16 %v912, %v912
  %v977 = vpack.c.b16 %v913, %v913
  %v978 = vpack.c.b16 %v914, %v914
  %v979 = vpack.c.b16 %v915, %v915
  %v980 = vpack.c.b16 %v916, %v916
  %v981 = vpack.c.b16 %v917, %v917
  %v982 = vpack.c.b16 %v918, %v918
  %v983 = vpack.c.b16 %v919, %v919
  %v984 = vpack.c.b16 %v920, %v920
  %v985 = vpack.c.b16 %v921, %v921
  %v986 = vpack.c.b16 %v922, %v922
  %v987 = vpack.c.b16 %v923, %v923
  %v988 = vpack.c.b16 %v924, %v924
  %v989 = vpack.c.b16 %v925, %v925
  %v990 = vpack.c.b16 %v926, %v926
  %v991 = vpack.c.b16 %v927, %v927
  %v992 = vpack.c.b16 %v928, %v928
  %v993 = vpack.c.b16 %v929, %v929
  %v994 = vpack.c.b16 %v930, %v930
  %v995 = vpack.c.b16 %v931, %v931
  %v996 = vpack.c.b16 %v932, %v932
  %v997 = vpack.c.b16 %v933, %v933
  %v998 = vpack.c.b16 %v934, %v934
  %v999 = vpack.c.b16 %v935, %v935
  %v1000 = vpack.c.b16 %v936, %v936
  %v1001 = vpack.c.b16 %v937, %v937
  %v1002 = vpack.c.b16 %v938, %v938
  %v1003 = vpack.c.b16 %v939, %v939
  %v1004 = vpack.c.b16 %v940, %v940
  %v1005 = vpack.c.b16 %v941, %v941
  %v1006 = vpack.c.b16 %v942, %v942
  %v1007 = vpack.c.b16 %v943, %v943
  %v1008 = vpack.c.b16 %v944, %v944
  %v1009 = vpack.c.b16 %v945, %v945
  %v1010 = vpack.c.b16 %v946, %v946
  %v1011 = vpack.c.b16 %v947, %v947
  %v1012 = vpack.c.b16 %v948, %v948
  %v1013 = vpack.c.b16 %v949, %v949
  %v1014 = vpack.c.b16 %v950, %v950
  %v1015 = vpack.c.b16 %v951, %v951
  %v1016 = vpack.c.b16 %v952, %v952
  %v1017 = vpack.c.b16 %v953, %v953
  %v1018 = vpack.c.b16 %v954, %v954
  %v1019 = vpack.c.b16 %v955, %v955
  %v1020 = vpack.c.b16 %v956, %v956
  %v1021 = vpack.c.b16 %v957, %v957
  %1086 = vst [vmem:[%s2] sm:$0xf] %v958
  %1087 = vst [vmem:[%s2 + $0x4] sm:$0xf] %v959
  %1088 = vst [vmem:[%s2 + $0x8] sm:$0xf] %v960
  %1089 = vst [vmem:[%s2 + $0xc] sm:$0xf] %v961
  %1090 = vst [vmem:[%s2 + $0x10] sm:$0xf] %v962
  %1091 = vst [vmem:[%s2 + $0x14] sm:$0xf] %v963
  %1092 = vst [vmem:[%s2 + $0x18] sm:$0xf] %v964
  %1093 = vst [vmem:[%s2 + $0x1c] sm:$0xf] %v965
  %1094 = vst [vmem:[%s2 + $0x20] sm:$0xf] %v966
  %1095 = vst [vmem:[%s2 + $0x24] sm:$0xf] %v967
  %1096 = vst [vmem:[%s2 + $0x28] sm:$0xf] %v968
  %1097 = vst [vmem:[%s2 + $0x2c] sm:$0xf] %v969
  %1098 = vst [vmem:[%s2 + $0x30] sm:$0xf] %v970
  %1099 = vst [vmem:[%s2 + $0x34] sm:$0xf] %v971
  %1100 = vst [vmem:[%s2 + $0x38] sm:$0xf] %v972
  %1101 = vst [vmem:[%s2 + $0x3c] sm:$0xf] %v973
  %1102 = vst [vmem:[%s2 + $0x40] sm:$0xf] %v974
  %1103 = vst [vmem:[%s2 + $0x44] sm:$0xf] %v975
  %1104 = vst [vmem:[%s2 + $0x48] sm:$0xf] %v976
  %1105 = vst [vmem:[%s2 + $0x4c] sm:$0xf] %v977
  %1106 = vst [vmem:[%s2 + $0x50] sm:$0xf] %v978
  %1107 = vst [vmem:[%s2 + $0x54] sm:$0xf] %v979
  %1108 = vst [vmem:[%s2 + $0x58] sm:$0xf] %v980
  %1109 = vst [vmem:[%s2 + $0x5c] sm:$0xf] %v981
  %1110 = vst [vmem:[%s2 + $0x60] sm:$0xf] %v982
  %1111 = vst [vmem:[%s2 + $0x64] sm:$0xf] %v983
  %1112 = vst [vmem:[%s2 + $0x68] sm:$0xf] %v984
  %1113 = vst [vmem:[%s2 + $0x6c] sm:$0xf] %v985
  %1114 = vst [vmem:[%s2 + $0x70] sm:$0xf] %v986
  %1115 = vst [vmem:[%s2 + $0x74] sm:$0xf] %v987
  %1116 = vst [vmem:[%s2 + $0x78] sm:$0xf] %v988
  %1117 = vst [vmem:[%s2 + $0x7c] sm:$0xf] %v989
  %1118 = vst [vmem:[%s2 + $0x80] sm:$0xf] %v990
  %1119 = vst [vmem:[%s2 + $0x84] sm:$0xf] %v991
  %1120 = vst [vmem:[%s2 + $0x88] sm:$0xf] %v992
  %1121 = vst [vmem:[%s2 + $0x8c] sm:$0xf] %v993
  %1122 = vst [vmem:[%s2 + $0x90] sm:$0xf] %v994
  %1123 = vst [vmem:[%s2 + $0x94] sm:$0xf] %v995
  %1124 = vst [vmem:[%s2 + $0x98] sm:$0xf] %v996
  %1125 = vst [vmem:[%s2 + $0x9c] sm:$0xf] %v997
  %1126 = vst [vmem:[%s2 + $0xa0] sm:$0xf] %v998
  %1127 = vst [vmem:[%s2 + $0xa4] sm:$0xf] %v999
  %1128 = vst [vmem:[%s2 + $0xa8] sm:$0xf] %v1000
  %1129 = vst [vmem:[%s2 + $0xac] sm:$0xf] %v1001
  %1130 = vst [vmem:[%s2 + $0xb0] sm:$0xf] %v1002
  %1131 = vst [vmem:[%s2 + $0xb4] sm:$0xf] %v1003
  %1132 = vst [vmem:[%s2 + $0xb8] sm:$0xf] %v1004
  %1133 = vst [vmem:[%s2 + $0xbc] sm:$0xf] %v1005
  %1134 = vst [vmem:[%s2 + $0xc0] sm:$0xf] %v1006
  %1135 = vst [vmem:[%s2 + $0xc4] sm:$0xf] %v1007
  %1136 = vst [vmem:[%s2 + $0xc8] sm:$0xf] %v1008
  %1137 = vst [vmem:[%s2 + $0xcc] sm:$0xf] %v1009
  %1138 = vst [vmem:[%s2 + $0xd0] sm:$0xf] %v1010
  %1139 = vst [vmem:[%s2 + $0xd4] sm:$0xf] %v1011
  %1140 = vst [vmem:[%s2 + $0xd8] sm:$0xf] %v1012
  %1141 = vst [vmem:[%s2 + $0xdc] sm:$0xf] %v1013
  %1142 = vst [vmem:[%s2 + $0xe0] sm:$0xf] %v1014
  %1143 = vst [vmem:[%s2 + $0xe4] sm:$0xf] %v1015
  %1144 = vst [vmem:[%s2 + $0xe8] sm:$0xf] %v1016
  %1145 = vst [vmem:[%s2 + $0xec] sm:$0xf] %v1017
  %1146 = vst [vmem:[%s2 + $0xf0] sm:$0xf] %v1018
  %1147 = vst [vmem:[%s2 + $0xf4] sm:$0xf] %v1019
  %1148 = vst [vmem:[%s2 + $0xf8] sm:$0xf] %v1020
  %1149 = vst [vmem:[%s2 + $0xfc] sm:$0xf] %v1021
  // Predicated region
  $region10: #{spade_forward.2} parent=0 // pred_check
    _
  $region11: #{spade_forward.2} parent=0 // pred_check_branch
    %1151 = sbr.rel (0) target = $region13
  $region12: #{spade_forward.2} parent=0 // pred_region
    _
  $region13: #{spade_forward.2} parent=0 // pred_fallthru
    _
  // Predicated region
  $region14: #{spade_forward.2} parent=0 // pred_check
    _
  $region15: #{spade_forward.2} parent=0 // pred_check_branch
    %1153 = sbr.rel (0) target = $region17
  $region16: #{spade_forward.2} parent=0 // pred_region
    _
  $region17: #{spade_forward.2} parent=0 // pred_fallthru
    _

// kernel: spade_forward.3
$region0: #{spade_forward.3}
  #allocation0 [shape = 'u32[]', space=smem, size = 0x4, offset = 0x4, fixed_abs, tag = 'smem constant byte address 0x4 - core index']
  #allocation1 [shape = 'u32[144,128]{1,0:T(1,128)}', space=vmem, size = 0x12000, scoped, tag = 'internal scratch']
  #allocation2 [shape = 'f32[328,128]{1,0:T(8,128)}', space=vmem, size = 0x29000, scoped, tag = 'scratch operand']
  %s0 = inlined_call_operand.vmem [shape: f32[2,4,288], index: 0, kind: input, shape index: {}]
  %s1 = inlined_call_operand.vmem [shape: bf16[2,16,16,128], index: 1, kind: input, shape index: {}]
  %s2 = inlined_call_operand.vmem [shape: bf16[9,128,8], index: 2, kind: input, shape index: {}]
  %s3 = inlined_call_operand.vmem [shape: f32[1,8], index: 3, kind: input, shape index: {}]
  %s4 = inlined_call_operand.vmem [shape: f32[2,4,288], index: 4, kind: output, shape index: {}]
  %s5 = sld [smem:[#allocation0]]
  $region49: #{spade_forward.3} parent=0
    _
  %s7 = ssub.s32 1, %s5
  %s8 = scalar_select 0, %s7, %s5
  loop: start=0, step=1, limit=4
  $region2: #{spade_forward.3} parent=0 // loop_pre_header
    _
  $region3: #{spade_forward.3} parent=0 // loop_header
    %s10 = sphi 0, %s14
    %p11 = scmp.ge.s32.totalorder %s10, 4
    %s20 = sphi 0, %s22
    %s23 = sphi 0, %s20
    %s24 = sphi 0, %s23
    %s40 = sphi 0, %s24
    %s46 = sphi 0, %s48
    %s49 = sphi 0, %s46
    %s50 = sphi 0, %s49
    %s66 = sphi 0, %s50
    %s70 = sphi 0, %s70
    %s72 = sphi 0, %s70
    %s73 = sphi 0, %s72
    %s87 = sphi 0, %s73
    %s91 = sphi 0, %s91
    %s93 = sphi 0, %s91
    %s94 = sphi 0, %s93
    %s108 = sphi 0, %s94
    %s114 = sphi 0, %s116
    %s117 = sphi 0, %s114
    %s118 = sphi 0, %s117
    %s134 = sphi 0, %s118
  $region4: #{spade_forward.3} parent=0 // loop_header_branch
    %13 = sbr.rel (%p11) target = $region8
  $region5: #{spade_forward.3} parent=0 // loop_body
    %s15 = ssub.s32 %s10, 1
    %s16 = ssub.s32 %s10, 2
    %s17 = sadd.s32 %s10, 1
    %s18 = ssub.s32 %s10, %s17
    %p19 = scmp.eq.s32.totalorder %s18, 0
    %s21 = sadd.s32 %s20, 1
    %s22 = scalar_select %p19, %s20, %s21
    %p25 = pneg %p19
    %p26 = scmp.eq.s32.totalorder %s10, 1
    %p27 = por %p25, %p26
    %p28 = scmp.ne.s32.totalorder %s20, %s23
    %p29 = scmp.eq.s32.totalorder %s10, 0
    %p30 = por %p28, %p29
    %p31 = scmp.ne.s32.totalorder %s20, %s23
    %p32 = scmp.eq.s32.totalorder %s15, 1
    %p33 = por %p31, %p32
    %p34 = scmp.ne.s32.totalorder %s23, %s24
    %p35 = scmp.eq.s32.totalorder %s15, 0
    %p36 = por %p34, %p35
    %p37 = scmp.ne.s32.totalorder %s23, %s24
    %p38 = scmp.eq.s32.totalorder %s16, 1
    %p39 = por %p37, %p38
    %p41 = scmp.ne.s32.totalorder %s24, %s40
    %p42 = scmp.eq.s32.totalorder %s16, 0
    %p43 = por %p41, %p42
    %s44 = ssub.s32 %s10, %s17
    %p45 = scmp.eq.s32.totalorder %s44, 0
    %s47 = sadd.s32 %s46, 1
    %s48 = scalar_select %p45, %s46, %s47
    %p51 = pneg %p45
    %p52 = scmp.eq.s32.totalorder %s10, 1
    %p53 = por %p51, %p52
    %p54 = scmp.ne.s32.totalorder %s46, %s49
    %p55 = scmp.eq.s32.totalorder %s10, 0
    %p56 = por %p54, %p55
    %p57 = scmp.ne.s32.totalorder %s46, %s49
    %p58 = scmp.eq.s32.totalorder %s15, 1
    %p59 = por %p57, %p58
    %p60 = scmp.ne.s32.totalorder %s49, %s50
    %p61 = scmp.eq.s32.totalorder %s15, 0
    %p62 = por %p60, %p61
    %p63 = scmp.ne.s32.totalorder %s49, %s50
    %p64 = scmp.eq.s32.totalorder %s16, 1
    %p65 = por %p63, %p64
    %p67 = scmp.ne.s32.totalorder %s50, %s66
    %p68 = scmp.eq.s32.totalorder %s16, 0
    %p69 = por %p67, %p68
    %s71 = sadd.s32 %s70, 1
    %p74 = scmp.eq.s32.totalorder %s10, 1
    %p75 = scmp.ne.s32.totalorder %s70, %s72
    %p76 = scmp.eq.s32.totalorder %s10, 0
    %p77 = por %p75, %p76
    %p78 = scmp.ne.s32.totalorder %s70, %s72
    %p79 = scmp.eq.s32.totalorder %s15, 1
    %p80 = por %p78, %p79
    %p81 = scmp.ne.s32.totalorder %s72, %s73
    %p82 = scmp.eq.s32.totalorder %s15, 0
    %p83 = por %p81, %p82
    %p84 = scmp.ne.s32.totalorder %s72, %s73
    %p85 = scmp.eq.s32.totalorder %s16, 1
    %p86 = por %p84, %p85
    %p88 = scmp.ne.s32.totalorder %s73, %s87
    %p89 = scmp.eq.s32.totalorder %s16, 0
    %p90 = por %p88, %p89
    %s92 = sadd.s32 %s91, 1
    %p95 = scmp.eq.s32.totalorder %s10, 1
    %p96 = scmp.ne.s32.totalorder %s91, %s93
    %p97 = scmp.eq.s32.totalorder %s10, 0
    %p98 = por %p96, %p97
    %p99 = scmp.ne.s32.totalorder %s91, %s93
    %p100 = scmp.eq.s32.totalorder %s15, 1
    %p101 = por %p99, %p100
    %p102 = scmp.ne.s32.totalorder %s93, %s94
    %p103 = scmp.eq.s32.totalorder %s15, 0
    %p104 = por %p102, %p103
    %p105 = scmp.ne.s32.totalorder %s93, %s94
    %p106 = scmp.eq.s32.totalorder %s16, 1
    %p107 = por %p105, %p106
    %p109 = scmp.ne.s32.totalorder %s94, %s108
    %p110 = scmp.eq.s32.totalorder %s16, 0
    %p111 = por %p109, %p110
    %s112 = ssub.s32 %s10, %s17
    %p113 = scmp.eq.s32.totalorder %s112, 0
    %s115 = sadd.s32 %s114, 1
    %s116 = scalar_select %p113, %s114, %s115
    %p119 = pneg %p113
    %p120 = scmp.eq.s32.totalorder %s10, 1
    %p121 = por %p119, %p120
    %p122 = scmp.ne.s32.totalorder %s114, %s117
    %p123 = scmp.eq.s32.totalorder %s10, 0
    %p124 = por %p122, %p123
    %p125 = scmp.ne.s32.totalorder %s114, %s117
    %p126 = scmp.eq.s32.totalorder %s15, 1
    %p127 = por %p125, %p126
    %p128 = scmp.ne.s32.totalorder %s117, %s118
    %p129 = scmp.eq.s32.totalorder %s15, 0
    %p130 = por %p128, %p129
    %p131 = scmp.ne.s32.totalorder %s117, %s118
    %p132 = scmp.eq.s32.totalorder %s16, 1
    %p133 = por %p131, %p132
    %p135 = scmp.ne.s32.totalorder %s118, %s134
    %p136 = scmp.eq.s32.totalorder %s16, 0
    %p137 = por %p135, %p136
    %p138 = scmp.le.s32.totalorder 1, %s10
    %p139 = scmp.lt.s32.totalorder %s10, 3
    %p140 = pnand %p138, %p139
    %p141 = pneg %p140
    // Predicated region
    $region9: #{spade_forward.3} parent=5 // pred_check
      _
    $region10: #{spade_forward.3} parent=5 // pred_check_branch
      %143 = sbr.rel (%p140) target = $region12
    $region11: #{spade_forward.3} parent=5 // pred_region
      %s144 = ssub.s32 %s10, 1
      // Predicated region
      $region13: #{spade_forward.3} parent=11 // pred_check
        %p145 = pneg %p83
      $region14: #{spade_forward.3} parent=11 // pred_check_branch
        %147 = sbr.rel (%p145) target = $region16
      $region15: #{spade_forward.3} parent=11 // pred_region
        _
      $region16: #{spade_forward.3} parent=11 // pred_fallthru
        _
      // Predicated region
      $region17: #{spade_forward.3} parent=11 // pred_check
        %p148 = pneg %p104
      $region18: #{spade_forward.3} parent=11 // pred_check_branch
        %150 = sbr.rel (%p148) target = $region20
      $region19: #{spade_forward.3} parent=11 // pred_region
        _
      $region20: #{spade_forward.3} parent=11 // pred_fallthru
        _
    $region12: #{spade_forward.3} parent=5 // pred_fallthru
      _
    %p151 = scmp.lt.s32.totalorder %s10, 2
    // Predicated region
    $region21: #{spade_forward.3} parent=5 // pred_check
      %p152 = pneg %p151
    $region22: #{spade_forward.3} parent=5 // pred_check_branch
      %154 = sbr.rel (%p152) target = $region24
    $region23: #{spade_forward.3} parent=5 // pred_region
      // Predicated region
      $region25: #{spade_forward.3} parent=23 // pred_check
        %p155 = pneg %p30
      $region26: #{spade_forward.3} parent=23 // pred_check_branch
        %157 = sbr.rel (%p155) target = $region28
      $region27: #{spade_forward.3} parent=23 // pred_region
        %p158 = scmp.lt.s32.totalorder %s10, 1
        %s159 = scalar_select %p158, %s10, 1
        %s160 = smul.addr %s159, 3
        %s161 = smul.addr %s160, 4
        %s162 = scalar_lea.vmem %s0, %s161
      $region28: #{spade_forward.3} parent=23 // pred_fallthru
        _
      // Predicated region
      $region29: #{spade_forward.3} parent=23 // pred_check
        %p163 = pneg %p56
      $region30: #{spade_forward.3} parent=23 // pred_check_branch
        %165 = sbr.rel (%p163) target = $region32
      $region31: #{spade_forward.3} parent=23 // pred_region
        %p166 = scmp.lt.s32.totalorder %s10, 1
        %s167 = scalar_select %p166, %s10, 1
        %s168 = smul.addr %s167, 32
        %s169 = smul.addr %s168, 4
        %s170 = scalar_lea.vmem %s1, %s169
      $region32: #{spade_forward.3} parent=23 // pred_fallthru
        _
    $region24: #{spade_forward.3} parent=5 // pred_fallthru
      _
    %p171 = scmp.le.s32.totalorder 1, %s10
    %p172 = scmp.lt.s32.totalorder %s10, 3
    %p173 = pnand %p171, %p172
    %p174 = pneg %p173
    // Predicated region
    $region33: #{spade_forward.3} parent=5 // pred_check
      _
    $region34: #{spade_forward.3} parent=5 // pred_check_branch
      %176 = sbr.rel (%p173) target = $region36
    $region35: #{spade_forward.3} parent=5 // pred_region
      %s177 = ssub.s32 %s10, 1
      %p178 = scmp.lt.s32.totalorder %s15, 1
      %s179 = scalar_select %p178, %s15, 1
      %s180 = smul.addr %s179, 3
      %s181 = smul.addr %s180, 4
      %s182 = scalar_lea.vmem %s0, %s181
      %p183 = pneg %p36
      %p184 = pneg %p33
      %p185 = scmp.lt.s32.totalorder %s15, 1
      %s186 = scalar_select %p185, %s15, 1
      %s187 = smul.addr %s186, 32
      %s188 = smul.addr %s187, 4
      %s189 = scalar_lea.vmem %s1, %s188
      %p190 = pneg %p62
      %p191 = pneg %p59
      %p192 = pneg %p83
      %p193 = pneg %p80
      %p194 = pneg %p104
      %p195 = pneg %p101
      %p196 = pneg %p130
      %p197 = pneg %p127
      %p198 = scmp.lt.s32.totalorder %s15, 1
      %s199 = scalar_select %p198, %s15, 1
      %s200 = smul.addr %s199, 3
      %s201 = smul.addr %s200, 4
      %s202 = scalar_lea.vmem %s4, %s201
      %p203 = scmp.lt.s32.totalorder %s15, 1
      %s204 = scalar_select %p203, %s15, 1
      %s205 = smul.addr %s204, 3
      %s206 = smul.addr %s205, 4
      %s207 = scalar_lea.vmem %s0, %s206
      %p208 = scmp.lt.s32.totalorder %s15, 1
      %s209 = scalar_select %p208, %s15, 1
      %s210 = smul.addr %s209, 32
      %s211 = smul.addr %s210, 4
      %s212 = scalar_lea.vmem %s1, %s211
      %p213 = scmp.lt.s32.totalorder %s15, 1
      %s214 = scalar_select %p213, %s15, 1
      %s215 = smul.addr %s214, 3
      %s216 = smul.addr %s215, 4
      %s217 = scalar_lea.vmem %s4, %s216
      %219 = vst [vmem:[#allocation2] sm:$0xff] 0.0
      %220 = vst [vmem:[#allocation2 + $0x8] sm:$0xff] 0.0
      %221 = vst [vmem:[#allocation2 + $0x10] sm:$0xff] 0.0
      %222 = vst [vmem:[#allocation2 + $0x18] sm:$0xff] 0.0
      %223 = vst [vmem:[#allocation2 + $0x20] sm:$0xff] 0.0
      %224 = vst [vmem:[#allocation2 + $0x28] sm:$0xff] 0.0
      %225 = vst [vmem:[#allocation2 + $0x30] sm:$0xff] 0.0
      %226 = vst [vmem:[#allocation2 + $0x38] sm:$0xff] 0.0
      %227 = vst [vmem:[#allocation2 + $0x40] sm:$0xff] 0.0
      %228 = vst [vmem:[#allocation2 + $0x48] sm:$0xff] 0.0
      %229 = vst [vmem:[#allocation2 + $0x50] sm:$0xff] 0.0
      %230 = vst [vmem:[#allocation2 + $0x58] sm:$0xff] 0.0
      %231 = vst [vmem:[#allocation2 + $0x60] sm:$0xff] 0.0
      %232 = vst [vmem:[#allocation2 + $0x68] sm:$0xff] 0.0
      %233 = vst [vmem:[#allocation2 + $0x70] sm:$0xff] 0.0
      %234 = vst [vmem:[#allocation2 + $0x78] sm:$0xff] 0.0
      %235 = vst [vmem:[#allocation2 + $0x80] sm:$0xff] 0.0
      %236 = vst [vmem:[#allocation2 + $0x88] sm:$0xff] 0.0
      %237 = vst [vmem:[#allocation2 + $0x90] sm:$0xff] 0.0
      %238 = vst [vmem:[#allocation2 + $0x98] sm:$0xff] 0.0
      %239 = vst [vmem:[#allocation2 + $0xa0] sm:$0xff] 0.0
      %240 = vst [vmem:[#allocation2 + $0xa8] sm:$0xff] 0.0
      %241 = vst [vmem:[#allocation2 + $0xb0] sm:$0xff] 0.0
      %242 = vst [vmem:[#allocation2 + $0xb8] sm:$0xff] 0.0
      %243 = vst [vmem:[#allocation2 + $0xc0] sm:$0xff] 0.0
      %244 = vst [vmem:[#allocation2 + $0xc8] sm:$0xff] 0.0
      %245 = vst [vmem:[#allocation2 + $0xd0] sm:$0xff] 0.0
      %246 = vst [vmem:[#allocation2 + $0xd8] sm:$0xff] 0.0
      %247 = vst [vmem:[#allocation2 + $0xe0] sm:$0xff] 0.0
      %248 = vst [vmem:[#allocation2 + $0xe8] sm:$0xff] 0.0
      %249 = vst [vmem:[#allocation2 + $0xf0] sm:$0xff] 0.0
      %250 = vst [vmem:[#allocation2 + $0xf8] sm:$0xff] 0.0
      %251 = vst [vmem:[#allocation2 + $0x100] sm:$0xff] 0.0
      %252 = vst [vmem:[#allocation2 + $0x108] sm:$0xff] 0.0
      %253 = vst [vmem:[#allocation2 + $0x110] sm:$0xff] 0.0
      %254 = vst [vmem:[#allocation2 + $0x118] sm:$0xff] 0.0
      %255 = vst [vmem:[#allocation2 + $0x120] sm:$0xff] 0.0
      %256 = vst [vmem:[#allocation2 + $0x128] sm:$0xff] 0.0
      %257 = vst [vmem:[#allocation2 + $0x130] sm:$0xff] 0.0
      %258 = vst [vmem:[#allocation2 + $0x138] sm:$0xff] 0.0
      %259 = vst [vmem:[#allocation2 + $0x140] sm:$0xff] 0.0
      %v260 = vld [vmem:[%s212] sm:$0xf]
      %v261 = vld [vmem:[%s212 + $0x4] sm:$0xf]
      %v262 = vunpack.c.l.bf16 %v260
      %v263 = vunpack.c.l.bf16 %v261
      %264 = vst [vmem:[#allocation2 + $0x13] sm:$0xff] %v262
      %265 = vst [vmem:[#allocation2 + $0x1b] sm:$0xff] %v263
      %s266 = scalar_lea.vmem %s212, 8
      %v267 = vld [vmem:[%s266] sm:$0xf]
      %v268 = vld [vmem:[%s266 + $0x4] sm:$0xf]
      %v269 = vunpack.c.l.bf16 %v267
      %v270 = vunpack.c.l.bf16 %v268
      %271 = vst [vmem:[#allocation2 + $0x25] sm:$0xff] %v269
      %272 = vst [vmem:[#allocation2 + $0x2d] sm:$0xff] %v270
      %s273 = scalar_lea.vmem %s212, 16
      %v274 = vld [vmem:[%s273] sm:$0xf]
      %v275 = vld [vmem:[%s273 + $0x4] sm:$0xf]
      %v276 = vunpack.c.l.bf16 %v274
      %v277 = vunpack.c.l.bf16 %v275
      %278 = vst [vmem:[#allocation2 + $0x37] sm:$0xff] %v276
      %279 = vst [vmem:[#allocation2 + $0x3f] sm:$0xff] %v277
      %s280 = scalar_lea.vmem %s212, 24
      %v281 = vld [vmem:[%s280] sm:$0xf]
      %v282 = vld [vmem:[%s280 + $0x4] sm:$0xf]
      %v283 = vunpack.c.l.bf16 %v281
      %v284 = vunpack.c.l.bf16 %v282
      %285 = vst [vmem:[#allocation2 + $0x49] sm:$0xff] %v283
      %286 = vst [vmem:[#allocation2 + $0x51] sm:$0xff] %v284
      %s287 = scalar_lea.vmem %s212, 32
      %v288 = vld [vmem:[%s287] sm:$0xf]
      %v289 = vld [vmem:[%s287 + $0x4] sm:$0xf]
      %v290 = vunpack.c.l.bf16 %v288
      %v291 = vunpack.c.l.bf16 %v289
      %292 = vst [vmem:[#allocation2 + $0x5b] sm:$0xff] %v290
      %293 = vst [vmem:[#allocation2 + $0x63] sm:$0xff] %v291
      %s294 = scalar_lea.vmem %s212, 40
      %v295 = vld [vmem:[%s294] sm:$0xf]
      %v296 = vld [vmem:[%s294 + $0x4] sm:$0xf]
      %v297 = vunpack.c.l.bf16 %v295
      %v298 = vunpack.c.l.bf16 %v296
      %299 = vst [vmem:[#allocation2 + $0x6d] sm:$0xff] %v297
      %300 = vst [vmem:[#allocation2 + $0x75] sm:$0xff] %v298
      %s301 = scalar_lea.vmem %s212, 48
      %v302 = vld [vmem:[%s301] sm:$0xf]
      %v303 = vld [vmem:[%s301 + $0x4] sm:$0xf]
      %v304 = vunpack.c.l.bf16 %v302
      %v305 = vunpack.c.l.bf16 %v303
      %306 = vst [vmem:[#allocation2 + $0x7f] sm:$0xff] %v304
      %307 = vst [vmem:[#allocation2 + $0x87] sm:$0xff] %v305
      %s308 = scalar_lea.vmem %s212, 56
      %v309 = vld [vmem:[%s308] sm:$0xf]
      %v310 = vld [vmem:[%s308 + $0x4] sm:$0xf]
      %v311 = vunpack.c.l.bf16 %v309
      %v312 = vunpack.c.l.bf16 %v310
      %313 = vst [vmem:[#allocation2 + $0x91] sm:$0xff] %v311
      %314 = vst [vmem:[#allocation2 + $0x99] sm:$0xff] %v312
      %s315 = scalar_lea.vmem %s212, 64
      %v316 = vld [vmem:[%s315] sm:$0xf]
      %v317 = vld [vmem:[%s315 + $0x4] sm:$0xf]
      %v318 = vunpack.c.l.bf16 %v316
      %v319 = vunpack.c.l.bf16 %v317
      %320 = vst [vmem:[#allocation2 + $0xa3] sm:$0xff] %v318
      %321 = vst [vmem:[#allocation2 + $0xab] sm:$0xff] %v319
      %s322 = scalar_lea.vmem %s212, 72
      %v323 = vld [vmem:[%s322] sm:$0xf]
      %v324 = vld [vmem:[%s322 + $0x4] sm:$0xf]
      %v325 = vunpack.c.l.bf16 %v323
      %v326 = vunpack.c.l.bf16 %v324
      %327 = vst [vmem:[#allocation2 + $0xb5] sm:$0xff] %v325
      %328 = vst [vmem:[#allocation2 + $0xbd] sm:$0xff] %v326
      %s329 = scalar_lea.vmem %s212, 80
      %v330 = vld [vmem:[%s329] sm:$0xf]
      %v331 = vld [vmem:[%s329 + $0x4] sm:$0xf]
      %v332 = vunpack.c.l.bf16 %v330
      %v333 = vunpack.c.l.bf16 %v331
      %334 = vst [vmem:[#allocation2 + $0xc7] sm:$0xff] %v332
      %335 = vst [vmem:[#allocation2 + $0xcf] sm:$0xff] %v333
      %s336 = scalar_lea.vmem %s212, 88
      %v337 = vld [vmem:[%s336] sm:$0xf]
      %v338 = vld [vmem:[%s336 + $0x4] sm:$0xf]
      %v339 = vunpack.c.l.bf16 %v337
      %v340 = vunpack.c.l.bf16 %v338
      %341 = vst [vmem:[#allocation2 + $0xd9] sm:$0xff] %v339
      %342 = vst [vmem:[#allocation2 + $0xe1] sm:$0xff] %v340
      %s343 = scalar_lea.vmem %s212, 96
      %v344 = vld [vmem:[%s343] sm:$0xf]
      %v345 = vld [vmem:[%s343 + $0x4] sm:$0xf]
      %v346 = vunpack.c.l.bf16 %v344
      %v347 = vunpack.c.l.bf16 %v345
      %348 = vst [vmem:[#allocation2 + $0xeb] sm:$0xff] %v346
      %349 = vst [vmem:[#allocation2 + $0xf3] sm:$0xff] %v347
      %s350 = scalar_lea.vmem %s212, 104
      %v351 = vld [vmem:[%s350] sm:$0xf]
      %v352 = vld [vmem:[%s350 + $0x4] sm:$0xf]
      %v353 = vunpack.c.l.bf16 %v351
      %v354 = vunpack.c.l.bf16 %v352
      %355 = vst [vmem:[#allocation2 + $0xfd] sm:$0xff] %v353
      %356 = vst [vmem:[#allocation2 + $0x105] sm:$0xff] %v354
      %s357 = scalar_lea.vmem %s212, 112
      %v358 = vld [vmem:[%s357] sm:$0xf]
      %v359 = vld [vmem:[%s357 + $0x4] sm:$0xf]
      %v360 = vunpack.c.l.bf16 %v358
      %v361 = vunpack.c.l.bf16 %v359
      %362 = vst [vmem:[#allocation2 + $0x10f] sm:$0xff] %v360
      %363 = vst [vmem:[#allocation2 + $0x117] sm:$0xff] %v361
      %s364 = scalar_lea.vmem %s212, 120
      %v365 = vld [vmem:[%s364] sm:$0xf]
      %v366 = vld [vmem:[%s364 + $0x4] sm:$0xf]
      %v367 = vunpack.c.l.bf16 %v365
      %v368 = vunpack.c.l.bf16 %v366
      %369 = vst [vmem:[#allocation2 + $0x121] sm:$0xff] %v367
      %370 = vst [vmem:[#allocation2 + $0x129] sm:$0xff] %v368
      %v371 = vld [vmem:[%s207] sm:$0xff]
      %v372 = vld [vmem:[%s207 + $0x8] sm:$0xf]
      %v374 = vcombine.high %v371, %v371
      %vm376 = vcmask 1043456
      %v377 = vsel %vm376, %v371, 0.0
      %v378 = vsel %vm376, %v374, 0.0
      %v379 = vadd.f32 %v377, %v378
      %vm380 = vcmask 257024
      %v381 = vsel %vm380, %v372, 0.0
      %v382 = vadd.f32 %v379, %v381
      %383 = vadd.xlane.f32.xlu0 %v382
      %v384 = vpop.xlane.xlu0 %383
      %v385 = vmul.f32 %v384, 0.00390625
      %v388 = vunpack.c.l.s4 839922192
      %v389 = vunpack.c.0.s8 %v388
      %v390 = vlaneseq
      %v391 = vshrl.u32 %v390, 7
      %v392 = vsub.s32 %v389, %v391
      %v393 = vrot.slane %v385, %v392
      %v395 = vsub.f32 %v371, %v393
      %v396 = vsub.f32 %v372, %v393
      %v397 = vmul.f32 %v395, %v395
      %v398 = vmul.f32 %v396, %v396
      %v400 = vcombine.high %v397, %v397
      %v402 = vsel %vm376, %v397, 0.0
      %v403 = vsel %vm376, %v400, 0.0
      %v404 = vadd.f32 %v402, %v403
      %v405 = vsel %vm380, %v398, 0.0
      %v406 = vadd.f32 %v404, %v405
      %407 = vadd.xlane.f32.xlu0 %v406
      %v408 = vpop.xlane.xlu0 %407
      %v409 = vmul.f32 %v385, 32.0
      %v410 = vmul.f32 %v409, %v385
      %v411 = vsub.f32 %v408, %v410
      %v412 = vmul.f32 %v411, 0.00390625
      %v413 = vmax.f32 %v412, 0.0
      %v414 = vadd.f32 %v413, 1e-05
      %v415 = vrsqrt.pop %v414
      %v418 = vunpack.c.l.s4 839922192
      %v419 = vunpack.c.0.s8 %v418
      %v420 = vlaneseq
      %v421 = vshrl.u32 %v420, 7
      %v422 = vsub.s32 %v419, %v421
      %v423 = vrot.slane %v415, %v422
      %v425 = vmul.f32 %v395, %v423
      %v426 = vmul.f32 %v396, %v423
      %v427 = vld [vmem:[#allocation2] sm:$0xff]
      %v428 = vld [vmem:[#allocation2 + $0x8] sm:$0xff]
      %v429 = vld [vmem:[#allocation2 + $0x10] sm:$0xff]
      %v430 = vld [vmem:[#allocation2 + $0x18] sm:$0xff]
      %v431 = vld [vmem:[#allocation2 + $0x20] sm:$0xff]
      %v432 = vld [vmem:[#allocation2 + $0x28] sm:$0xff]
      %v433 = vld [vmem:[#allocation2 + $0x30] sm:$0xff]
      %v434 = vld [vmem:[#allocation2 + $0x38] sm:$0xff]
      %v435 = vld [vmem:[#allocation2 + $0x40] sm:$0xff]
      %v436 = vld [vmem:[#allocation2 + $0x48] sm:$0xff]
      %v437 = vld [vmem:[#allocation2 + $0x50] sm:$0xff]
      %v438 = vld [vmem:[#allocation2 + $0x58] sm:$0xff]
      %v439 = vld [vmem:[#allocation2 + $0x60] sm:$0xff]
      %v440 = vld [vmem:[#allocation2 + $0x68] sm:$0xff]
      %v441 = vld [vmem:[#allocation2 + $0x70] sm:$0xff]
      %v442 = vld [vmem:[#allocation2 + $0x78] sm:$0xff]
      %v443 = vld [vmem:[#allocation2 + $0x80] sm:$0xff]
      %v444 = vld [vmem:[#allocation2 + $0x88] sm:$0xff]
      %v445 = vld [vmem:[#allocation2 + $0x90] sm:$0xff]
      %v446 = vld [vmem:[#allocation2 + $0x98] sm:$0xff]
      %v447 = vld [vmem:[#allocation2 + $0xa0] sm:$0xff]
      %v448 = vld [vmem:[#allocation2 + $0xa8] sm:$0xff]
      %v449 = vld [vmem:[#allocation2 + $0xb0] sm:$0xff]
      %v450 = vld [vmem:[#allocation2 + $0xb8] sm:$0xff]
      %v451 = vld [vmem:[#allocation2 + $0xc0] sm:$0xff]
      %v452 = vld [vmem:[#allocation2 + $0xc8] sm:$0xff]
      %v453 = vld [vmem:[#allocation2 + $0xd0] sm:$0xff]
      %v454 = vld [vmem:[#allocation2 + $0xd8] sm:$0xff]
      %v455 = vld [vmem:[#allocation2 + $0xe0] sm:$0xff]
      %v456 = vld [vmem:[#allocation2 + $0xe8] sm:$0xff]
      %v457 = vld [vmem:[#allocation2 + $0xf0] sm:$0xff]
      %v458 = vld [vmem:[#allocation2 + $0xf8] sm:$0xff]
      %v459 = vld [vmem:[#allocation2 + $0x100] sm:$0xff]
      %v460 = vld [vmem:[#allocation2 + $0x108] sm:$0xff]
      %v461 = vld [vmem:[#allocation2 + $0x110] sm:$0xff]
      %v462 = vld [vmem:[#allocation2 + $0x118] sm:$0xff]
      %v463 = vpack.c.bf16 %v428, %v427
      %v464 = vpack.c.bf16 %v430, %v429
      %v465 = vpack.c.bf16 %v432, %v431
      %v466 = vpack.c.bf16 %v434, %v433
      %v467 = vpack.c.bf16 %v436, %v435
      %v468 = vpack.c.bf16 %v438, %v437
      %v469 = vpack.c.bf16 %v440, %v439
      %v470 = vpack.c.bf16 %v442, %v441
      %v471 = vpack.c.bf16 %v444, %v443
      %v472 = vpack.c.bf16 %v446, %v445
      %v473 = vpack.c.bf16 %v448, %v447
      %v474 = vpack.c.bf16 %v450, %v449
      %v475 = vpack.c.bf16 %v452, %v451
      %v476 = vpack.c.bf16 %v454, %v453
      %v477 = vpack.c.bf16 %v456, %v455
      %v478 = vpack.c.bf16 %v458, %v457
      %v479 = vpack.c.bf16 %v460, %v459
      %v480 = vpack.c.bf16 %v462, %v461
      %v481 = vld [vmem:[%s2] sm:$0xf]
      %v482 = vld [vmem:[%s2 + $0x4] sm:$0xf]
      %v483 = vld [vmem:[%s2 + $0x8] sm:$0xf]
      %v484 = vld [vmem:[%s2 + $0xc] sm:$0xf]
      %v485 = vld [vmem:[%s2 + $0x10] sm:$0xf]
      %v486 = vld [vmem:[%s2 + $0x14] sm:$0xf]
      %v487 = vld [vmem:[%s2 + $0x18] sm:$0xf]
      %v488 = vld [vmem:[%s2 + $0x1c] sm:$0xf]
      %v489 = vld [vmem:[%s2 + $0x20] sm:$0xf]
      %v490 = vld [vmem:[%s2 + $0x24] sm:$0xf]
      %v491 = vld [vmem:[%s2 + $0x28] sm:$0xf]
      %v492 = vld [vmem:[%s2 + $0x2c] sm:$0xf]
      %v493 = vld [vmem:[%s2 + $0x30] sm:$0xf]
      %v494 = vld [vmem:[%s2 + $0x34] sm:$0xf]
      %v495 = vld [vmem:[%s2 + $0x38] sm:$0xf]
      %v496 = vld [vmem:[%s2 + $0x3c] sm:$0xf]
      %v497 = vld [vmem:[#allocation2 + $0x1] sm:$0xff]
      %v498 = vld [vmem:[#allocation2 + $0x9] sm:$0xff]
      %v499 = vld [vmem:[#allocation2 + $0x11] sm:$0xff]
      %v500 = vld [vmem:[#allocation2 + $0x19] sm:$0xff]
      %v501 = vld [vmem:[#allocation2 + $0x21] sm:$0xff]
      %v502 = vld [vmem:[#allocation2 + $0x29] sm:$0xff]
      %v503 = vld [vmem:[#allocation2 + $0x31] sm:$0xff]
      %v504 = vld [vmem:[#allocation2 + $0x39] sm:$0xff]
      %v505 = vld [vmem:[#allocation2 + $0x41] sm:$0xff]
      %v506 = vld [vmem:[#allocation2 + $0x49] sm:$0xff]
      %v507 = vld [vmem:[#allocation2 + $0x51] sm:$0xff]
      %v508 = vld [vmem:[#allocation2 + $0x59] sm:$0xff]
      %v509 = vld [vmem:[#allocation2 + $0x61] sm:$0xff]
      %v510 = vld [vmem:[#allocation2 + $0x69] sm:$0xff]
      %v511 = vld [vmem:[#allocation2 + $0x71] sm:$0xff]
      %v512 = vld [vmem:[#allocation2 + $0x79] sm:$0xff]
      %v513 = vld [vmem:[#allocation2 + $0x81] sm:$0xff]
      %v514 = vld [vmem:[#allocation2 + $0x89] sm:$0xff]
      %v515 = vld [vmem:[#allocation2 + $0x91] sm:$0xff]
      %v516 = vld [vmem:[#allocation2 + $0x99] sm:$0xff]
      %v517 = vld [vmem:[#allocation2 + $0xa1] sm:$0xff]
      %v518 = vld [vmem:[#allocation2 + $0xa9] sm:$0xff]
      %v519 = vld [vmem:[#allocation2 + $0xb1] sm:$0xff]
      %v520 = vld [vmem:[#allocation2 + $0xb9] sm:$0xff]
      %v521 = vld [vmem:[#allocation2 + $0xc1] sm:$0xff]
      %v522 = vld [vmem:[#allocation2 + $0xc9] sm:$0xff]
      %v523 = vld [vmem:[#allocation2 + $0xd1] sm:$0xff]
      %v524 = vld [vmem:[#allocation2 + $0xd9] sm:$0xff]
      %v525 = vld [vmem:[#allocation2 + $0xe1] sm:$0xff]
      %v526 = vld [vmem:[#allocation2 + $0xe9] sm:$0xff]
      %v527 = vld [vmem:[#allocation2 + $0xf1] sm:$0xff]
      %v528 = vld [vmem:[#allocation2 + $0xf9] sm:$0xff]
      %v529 = vld [vmem:[#allocation2 + $0x101] sm:$0xff]
      %v530 = vld [vmem:[#allocation2 + $0x109] sm:$0xff]
      %v531 = vld [vmem:[#allocation2 + $0x111] sm:$0xff]
      %v532 = vld [vmem:[#allocation2 + $0x119] sm:$0xff]
      %v533 = vpack.c.bf16 %v498, %v497
      %v534 = vpack.c.bf16 %v500, %v499
      %v535 = vpack.c.bf16 %v502, %v501
      %v536 = vpack.c.bf16 %v504, %v503
      %v537 = vpack.c.bf16 %v506, %v505
      %v538 = vpack.c.bf16 %v508, %v507
      %v539 = vpack.c.bf16 %v510, %v509
      %v540 = vpack.c.bf16 %v512, %v511
      %v541 = vpack.c.bf16 %v514, %v513
      %v542 = vpack.c.bf16 %v516, %v515
      %v543 = vpack.c.bf16 %v518, %v517
      %v544 = vpack.c.bf16 %v520, %v519
      %v545 = vpack.c.bf16 %v522, %v521
      %v546 = vpack.c.bf16 %v524, %v523
      %v547 = vpack.c.bf16 %v526, %v525
      %v548 = vpack.c.bf16 %v528, %v527
      %v549 = vpack.c.bf16 %v530, %v529
      %v550 = vpack.c.bf16 %v532, %v531
      %s551 = scalar_lea.vmem %s2, 64
      %v552 = vld [vmem:[%s551] sm:$0xf]
      %v553 = vld [vmem:[%s551 + $0x4] sm:$0xf]
      %v554 = vld [vmem:[%s551 + $0x8] sm:$0xf]
      %v555 = vld [vmem:[%s551 + $0xc] sm:$0xf]
      %v556 = vld [vmem:[%s551 + $0x10] sm:$0xf]
      %v557 = vld [vmem:[%s551 + $0x14] sm:$0xf]
      %v558 = vld [vmem:[%s551 + $0x18] sm:$0xf]
      %v559 = vld [vmem:[%s551 + $0x1c] sm:$0xf]
      %v560 = vld [vmem:[%s551 + $0x20] sm:$0xf]
      %v561 = vld [vmem:[%s551 + $0x24] sm:$0xf]
      %v562 = vld [vmem:[%s551 + $0x28] sm:$0xf]
      %v563 = vld [vmem:[%s551 + $0x2c] sm:$0xf]
      %v564 = vld [vmem:[%s551 + $0x30] sm:$0xf]
      %v565 = vld [vmem:[%s551 + $0x34] sm:$0xf]
      %v566 = vld [vmem:[%s551 + $0x38] sm:$0xf]
      %v567 = vld [vmem:[%s551 + $0x3c] sm:$0xf]
      %v584 = vunpack.c.l.b16 %v552
      %v585 = vunpack.c.l.b16 %v553
      %v586 = vunpack.c.l.b16 %v554
      %v587 = vunpack.c.l.b16 %v555
      %v588 = vunpack.c.l.b16 %v556
      %v589 = vunpack.c.l.b16 %v557
      %v590 = vunpack.c.l.b16 %v558
      %v591 = vunpack.c.l.b16 %v559
      %v592 = vunpack.c.l.b16 %v560
      %v593 = vunpack.c.l.b16 %v561
      %v594 = vunpack.c.l.b16 %v562
      %v595 = vunpack.c.l.b16 %v563
      %v596 = vunpack.c.l.b16 %v564
      %v597 = vunpack.c.l.b16 %v565
      %v598 = vunpack.c.l.b16 %v566
      %v599 = vunpack.c.l.b16 %v567
      %v600 = vpack.c.b16 %v585, %v584
      %v601 = vpack.c.b16 %v587, %v586
      %v602 = vpack.c.b16 %v589, %v588
      %v603 = vpack.c.b16 %v591, %v590
      %v604 = vpack.c.b16 %v593, %v592
      %v605 = vpack.c.b16 %v595, %v594
      %v606 = vpack.c.b16 %v597, %v596
      %v607 = vpack.c.b16 %v599, %v598
      %616 = vmatprep.subr.bf16.mxu0 0
      %617 = vmatpush1.bf16.msra.mxu0 %v607
      %618 = vmatprep.subr.bf16.mxu0 0
      %619 = vmatpush1.bf16.msra.mxu0 %v606
      %620 = vmatprep.subr.bf16.mxu0 0
      %621 = vmatpush1.bf16.msra.mxu0 %v605
      %622 = vmatprep.subr.bf16.mxu0 0
      %623 = vmatpush1.bf16.msra.mxu0 %v604
      %624 = vmatprep.subr.bf16.mxu0 0
      %625 = vmatpush1.bf16.msra.mxu0 %v603
      %626 = vmatprep.subr.bf16.mxu0 0
      %627 = vmatpush1.bf16.msra.mxu0 %v602
      %628 = vmatprep.subr.bf16.mxu0 0
      %629 = vmatpush1.bf16.msra.mxu0 %v601
      %630 = vmatprep.subr.bf16.mxu0 0
      %631 = vmatpush1.bf16.msra.mxu0 %v600
      %632 = vmatprep.subr.bf16.mxu0 0
      %633 = vmatpush2.bf16.msra.mxu0 0
      %634 = vmatprep.subr.bf16.mxu0 0
      %635 = vmatpush2.bf16.msra.mxu0 0
      %636 = vmatprep.subr.bf16.mxu0 0
      %637 = vmatpush2.bf16.msra.mxu0 0
      %638 = vmatprep.subr.bf16.mxu0 0
      %639 = vmatpush2.bf16.msra.mxu0 0
      %640 = vmatprep.subr.bf16.mxu0 0
      %641 = vmatpush2.bf16.msra.mxu0 0
      %642 = vmatprep.subr.bf16.mxu0 0
      %643 = vmatpush2.bf16.msra.mxu0 0
      %644 = vmatprep.subr.bf16.mxu0 0
      %645 = vmatpush2.bf16.msra.mxu0 0
      %646 = vmatprep.subr.bf16.mxu0 0
      %647 = vmatpush2.bf16.msra.mxu0 0
      %648 = vmatprep.mubr.bf16.mxu0 0
      %649 = vmatmul.mubr.bf16.gmra.mxu0 %v533
      %v650 = vpop.f32.mrf.mxu0
      %v651 = vadd.f32 0.0, %v650
      %v652 = vpop.f32.mrf.mxu0
      %v653 = vpop.f32.mrf.mxu0
      %v654 = vadd.f32 0.0, %v653
      %v655 = vpop.f32.mrf.mxu0
      %656 = vmatprep.mubr.bf16.mxu0 0
      %657 = vmatmul.mubr.bf16.gmra.mxu0 %v534
      %v658 = vpop.f32.mrf.mxu0
      %v659 = vadd.f32 0.0, %v658
      %v660 = vpop.f32.mrf.mxu0
      %v661 = vpop.f32.mrf.mxu0
      %v662 = vadd.f32 0.0, %v661
      %v663 = vpop.f32.mrf.mxu0
      %664 = vmatprep.mubr.bf16.mxu0 0
      %665 = vmatmul.mubr.bf16.gmra.mxu0 %v535
      %v666 = vpop.f32.mrf.mxu0
      %v667 = vadd.f32 0.0, %v666
      %v668 = vpop.f32.mrf.mxu0
      %v669 = vpop.f32.mrf.mxu0
      %v670 = vadd.f32 0.0, %v669
      %v671 = vpop.f32.mrf.mxu0
      %672 = vmatprep.mubr.bf16.mxu0 0
      %673 = vmatmul.mubr.bf16.gmra.mxu0 %v536
      %v674 = vpop.f32.mrf.mxu0
      %v675 = vadd.f32 0.0, %v674
      %v676 = vpop.f32.mrf.mxu0
      %v677 = vpop.f32.mrf.mxu0
      %v678 = vadd.f32 0.0, %v677
      %v679 = vpop.f32.mrf.mxu0
      %680 = vmatprep.mubr.bf16.mxu0 0
      %681 = vmatmul.mubr.bf16.gmra.mxu0 %v537
      %v682 = vpop.f32.mrf.mxu0
      %v683 = vadd.f32 0.0, %v682
      %v684 = vpop.f32.mrf.mxu0
      %v685 = vpop.f32.mrf.mxu0
      %v686 = vadd.f32 0.0, %v685
      %v687 = vpop.f32.mrf.mxu0
      %688 = vmatprep.mubr.bf16.mxu0 0
      %689 = vmatmul.mubr.bf16.gmra.mxu0 %v538
      %v690 = vpop.f32.mrf.mxu0
      %v691 = vadd.f32 0.0, %v690
      %v692 = vpop.f32.mrf.mxu0
      %v693 = vpop.f32.mrf.mxu0
      %v694 = vadd.f32 0.0, %v693
      %v695 = vpop.f32.mrf.mxu0
      %696 = vmatprep.mubr.bf16.mxu0 0
      %697 = vmatmul.mubr.bf16.gmra.mxu0 %v539
      %v698 = vpop.f32.mrf.mxu0
      %v699 = vadd.f32 0.0, %v698
      %v700 = vpop.f32.mrf.mxu0
      %v701 = vpop.f32.mrf.mxu0
      %v702 = vadd.f32 0.0, %v701
      %v703 = vpop.f32.mrf.mxu0
      %704 = vmatprep.mubr.bf16.mxu0 0
      %705 = vmatmul.mubr.bf16.gmra.mxu0 %v540
      %v706 = vpop.f32.mrf.mxu0
      %v707 = vadd.f32 0.0, %v706
      %v708 = vpop.f32.mrf.mxu0
      %v709 = vpop.f32.mrf.mxu0
      %v710 = vadd.f32 0.0, %v709
      %v711 = vpop.f32.mrf.mxu0
      %712 = vmatprep.mubr.bf16.mxu0 0
      %713 = vmatmul.mubr.bf16.gmra.mxu0 %v541
      %v714 = vpop.f32.mrf.mxu0
      %v715 = vadd.f32 0.0, %v714
      %v716 = vpop.f32.mrf.mxu0
      %v717 = vpop.f32.mrf.mxu0
      %v718 = vadd.f32 0.0, %v717
      %v719 = vpop.f32.mrf.mxu0
      %720 = vmatprep.mubr.bf16.mxu0 0
      %721 = vmatmul.mubr.bf16.gmra.mxu0 %v542
      %v722 = vpop.f32.mrf.mxu0
      %v723 = vadd.f32 0.0, %v722
      %v724 = vpop.f32.mrf.mxu0
      %v725 = vpop.f32.mrf.mxu0
      %v726 = vadd.f32 0.0, %v725
      %v727 = vpop.f32.mrf.mxu0
      %728 = vmatprep.mubr.bf16.mxu0 0
      %729 = vmatmul.mubr.bf16.gmra.mxu0 %v543
      %v730 = vpop.f32.mrf.mxu0
      %v731 = vadd.f32 0.0, %v730
      %v732 = vpop.f32.mrf.mxu0
      %v733 = vpop.f32.mrf.mxu0
      %v734 = vadd.f32 0.0, %v733
      %v735 = vpop.f32.mrf.mxu0
      %736 = vmatprep.mubr.bf16.mxu0 0
      %737 = vmatmul.mubr.bf16.gmra.mxu0 %v544
      %v738 = vpop.f32.mrf.mxu0
      %v739 = vadd.f32 0.0, %v738
      %v740 = vpop.f32.mrf.mxu0
      %v741 = vpop.f32.mrf.mxu0
      %v742 = vadd.f32 0.0, %v741
      %v743 = vpop.f32.mrf.mxu0
      %744 = vmatprep.mubr.bf16.mxu0 0
      %745 = vmatmul.mubr.bf16.gmra.mxu0 %v545
      %v746 = vpop.f32.mrf.mxu0
      %v747 = vadd.f32 0.0, %v746
      %v748 = vpop.f32.mrf.mxu0
      %v749 = vpop.f32.mrf.mxu0
      %v750 = vadd.f32 0.0, %v749
      %v751 = vpop.f32.mrf.mxu0
      %752 = vmatprep.mubr.bf16.mxu0 0
      %753 = vmatmul.mubr.bf16.gmra.mxu0 %v546
      %v754 = vpop.f32.mrf.mxu0
      %v755 = vadd.f32 0.0, %v754
      %v756 = vpop.f32.mrf.mxu0
      %v757 = vpop.f32.mrf.mxu0
      %v758 = vadd.f32 0.0, %v757
      %v759 = vpop.f32.mrf.mxu0
      %760 = vmatprep.mubr.bf16.mxu0 0
      %761 = vmatmul.mubr.bf16.gmra.mxu0 %v547
      %v762 = vpop.f32.mrf.mxu0
      %v763 = vadd.f32 0.0, %v762
      %v764 = vpop.f32.mrf.mxu0
      %v765 = vpop.f32.mrf.mxu0
      %v766 = vadd.f32 0.0, %v765
      %v767 = vpop.f32.mrf.mxu0
      %768 = vmatprep.mubr.bf16.mxu0 0
      %769 = vmatmul.mubr.bf16.gmra.mxu0 %v548
      %v770 = vpop.f32.mrf.mxu0
      %v771 = vadd.f32 0.0, %v770
      %v772 = vpop.f32.mrf.mxu0
      %v773 = vpop.f32.mrf.mxu0
      %v774 = vadd.f32 0.0, %v773
      %v775 = vpop.f32.mrf.mxu0
      %776 = vmatprep.mubr.bf16.mxu0 0
      %777 = vmatmul.mubr.bf16.gmra.mxu0 %v549
      %v778 = vpop.f32.mrf.mxu0
      %v779 = vadd.f32 0.0, %v778
      %v780 = vpop.f32.mrf.mxu0
      %v781 = vpop.f32.mrf.mxu0
      %v782 = vadd.f32 0.0, %v781
      %v783 = vpop.f32.mrf.mxu0
      %784 = vmatprep.mubr.bf16.mxu0 0
      %785 = vmatmul.mubr.bf16.gmra.mxu0 %v550
      %v786 = vpop.f32.mrf.mxu0
      %v787 = vadd.f32 0.0, %v786
      %v788 = vpop.f32.mrf.mxu0
      %v789 = vpop.f32.mrf.mxu0
      %v790 = vadd.f32 0.0, %v789
      %v791 = vpop.f32.mrf.mxu0
      %792 = vdwg.mxu0
      %v809 = vunpack.c.l.b16 %v481
      %v810 = vunpack.c.l.b16 %v482
      %v811 = vunpack.c.l.b16 %v483
      %v812 = vunpack.c.l.b16 %v484
      %v813 = vunpack.c.l.b16 %v485
      %v814 = vunpack.c.l.b16 %v486
      %v815 = vunpack.c.l.b16 %v487
      %v816 = vunpack.c.l.b16 %v488
      %v817 = vunpack.c.l.b16 %v489
      %v818 = vunpack.c.l.b16 %v490
      %v819 = vunpack.c.l.b16 %v491
      %v820 = vunpack.c.l.b16 %v492
      %v821 = vunpack.c.l.b16 %v493
      %v822 = vunpack.c.l.b16 %v494
      %v823 = vunpack.c.l.b16 %v495
      %v824 = vunpack.c.l.b16 %v496
      %v825 = vpack.c.b16 %v810, %v809
      %v826 = vpack.c.b16 %v812, %v811
      %v827 = vpack.c.b16 %v814, %v813
      %v828 = vpack.c.b16 %v816, %v815
      %v829 = vpack.c.b16 %v818, %v817
      %v830 = vpack.c.b16 %v820, %v819
      %v831 = vpack.c.b16 %v822, %v821
      %v832 = vpack.c.b16 %v824, %v823
      %841 = vmatprep.subr.bf16.mxu0 0
      %842 = vmatpush1.bf16.msra.mxu0 %v832
      %843 = vmatprep.subr.bf16.mxu0 0
      %844 = vmatpush1.bf16.msra.mxu0 %v831
      %845 = vmatprep.subr.bf16.mxu0 0
      %846 = vmatpush1.bf16.msra.mxu0 %v830
      %847 = vmatprep.subr.bf16.mxu0 0
      %848 = vmatpush1.bf16.msra.mxu0 %v829
      %849 = vmatprep.subr.bf16.mxu0 0
      %850 = vmatpush1.bf16.msra.mxu0 %v828
      %851 = vmatprep.subr.bf16.mxu0 0
      %852 = vmatpush1.bf16.msra.mxu0 %v827
      %853 = vmatprep.subr.bf16.mxu0 0
      %854 = vmatpush1.bf16.msra.mxu0 %v826
      %855 = vmatprep.subr.bf16.mxu0 0
      %856 = vmatpush1.bf16.msra.mxu0 %v825
      %857 = vmatprep.subr.bf16.mxu0 0
      %858 = vmatpush2.bf16.msra.mxu0 0
      %859 = vmatprep.subr.bf16.mxu0 0
      %860 = vmatpush2.bf16.msra.mxu0 0
      %861 = vmatprep.subr.bf16.mxu0 0
      %862 = vmatpush2.bf16.msra.mxu0 0
      %863 = vmatprep.subr.bf16.mxu0 0
      %864 = vmatpush2.bf16.msra.mxu0 0
      %865 = vmatprep.subr.bf16.mxu0 0
      %866 = vmatpush2.bf16.msra.mxu0 0
      %867 = vmatprep.subr.bf16.mxu0 0
      %868 = vmatpush2.bf16.msra.mxu0 0
      %869 = vmatprep.subr.bf16.mxu0 0
      %870 = vmatpush2.bf16.msra.mxu0 0
      %871 = vmatprep.subr.bf16.mxu0 0
      %872 = vmatpush2.bf16.msra.mxu0 0
      %873 = vmatprep.mubr.bf16.mxu0 0
      %874 = vmatmul.mubr.bf16.gmra.mxu0 %v463
      %v875 = vpop.f32.mrf.mxu0
      %v876 = vadd.f32 %v651, %v875
      %v877 = vpop.f32.mrf.mxu0
      %v878 = vpop.f32.mrf.mxu0
      %v879 = vadd.f32 %v654, %v878
      %v880 = vpop.f32.mrf.mxu0
      %881 = vmatprep.mubr.bf16.mxu0 0
      %882 = vmatmul.mubr.bf16.gmra.mxu0 %v464
      %v883 = vpop.f32.mrf.mxu0
      %v884 = vadd.f32 %v659, %v883
      %v885 = vpop.f32.mrf.mxu0
      %v886 = vpop.f32.mrf.mxu0
      %v887 = vadd.f32 %v662, %v886
      %v888 = vpop.f32.mrf.mxu0
      %889 = vmatprep.mubr.bf16.mxu0 0
      %890 = vmatmul.mubr.bf16.gmra.mxu0 %v465
      %v891 = vpop.f32.mrf.mxu0
      %v892 = vadd.f32 %v667, %v891
      %v893 = vpop.f32.mrf.mxu0
      %v894 = vpop.f32.mrf.mxu0
      %v895 = vadd.f32 %v670, %v894
      %v896 = vpop.f32.mrf.mxu0
      %897 = vmatprep.mubr.bf16.mxu0 0
      %898 = vmatmul.mubr.bf16.gmra.mxu0 %v466
      %v899 = vpop.f32.mrf.mxu0
      %v900 = vadd.f32 %v675, %v899
      %v901 = vpop.f32.mrf.mxu0
      %v902 = vpop.f32.mrf.mxu0
      %v903 = vadd.f32 %v678, %v902
      %v904 = vpop.f32.mrf.mxu0
      %905 = vmatprep.mubr.bf16.mxu0 0
      %906 = vmatmul.mubr.bf16.gmra.mxu0 %v467
      %v907 = vpop.f32.mrf.mxu0
      %v908 = vadd.f32 %v683, %v907
      %v909 = vpop.f32.mrf.mxu0
      %v910 = vpop.f32.mrf.mxu0
      %v911 = vadd.f32 %v686, %v910
      %v912 = vpop.f32.mrf.mxu0
      %913 = vmatprep.mubr.bf16.mxu0 0
      %914 = vmatmul.mubr.bf16.gmra.mxu0 %v468
      %v915 = vpop.f32.mrf.mxu0
      %v916 = vadd.f32 %v691, %v915
      %v917 = vpop.f32.mrf.mxu0
      %v918 = vpop.f32.mrf.mxu0
      %v919 = vadd.f32 %v694, %v918
      %v920 = vpop.f32.mrf.mxu0
      %921 = vmatprep.mubr.bf16.mxu0 0
      %922 = vmatmul.mubr.bf16.gmra.mxu0 %v469
      %v923 = vpop.f32.mrf.mxu0
      %v924 = vadd.f32 %v699, %v923
      %v925 = vpop.f32.mrf.mxu0
      %v926 = vpop.f32.mrf.mxu0
      %v927 = vadd.f32 %v702, %v926
      %v928 = vpop.f32.mrf.mxu0
      %929 = vmatprep.mubr.bf16.mxu0 0
      %930 = vmatmul.mubr.bf16.gmra.mxu0 %v470
      %v931 = vpop.f32.mrf.mxu0
      %v932 = vadd.f32 %v707, %v931
      %v933 = vpop.f32.mrf.mxu0
      %v934 = vpop.f32.mrf.mxu0
      %v935 = vadd.f32 %v710, %v934
      %v936 = vpop.f32.mrf.mxu0
      %937 = vmatprep.mubr.bf16.mxu0 0
      %938 = vmatmul.mubr.bf16.gmra.mxu0 %v471
      %v939 = vpop.f32.mrf.mxu0
      %v940 = vadd.f32 %v715, %v939
      %v941 = vpop.f32.mrf.mxu0
      %v942 = vpop.f32.mrf.mxu0
      %v943 = vadd.f32 %v718, %v942
      %v944 = vpop.f32.mrf.mxu0
      %945 = vmatprep.mubr.bf16.mxu0 0
      %946 = vmatmul.mubr.bf16.gmra.mxu0 %v472
      %v947 = vpop.f32.mrf.mxu0
      %v948 = vadd.f32 %v723, %v947
      %v949 = vpop.f32.mrf.mxu0
      %v950 = vpop.f32.mrf.mxu0
      %v951 = vadd.f32 %v726, %v950
      %v952 = vpop.f32.mrf.mxu0
      %953 = vmatprep.mubr.bf16.mxu0 0
      %954 = vmatmul.mubr.bf16.gmra.mxu0 %v473
      %v955 = vpop.f32.mrf.mxu0
      %v956 = vadd.f32 %v731, %v955
      %v957 = vpop.f32.mrf.mxu0
      %v958 = vpop.f32.mrf.mxu0
      %v959 = vadd.f32 %v734, %v958
      %v960 = vpop.f32.mrf.mxu0
      %961 = vmatprep.mubr.bf16.mxu0 0
      %962 = vmatmul.mubr.bf16.gmra.mxu0 %v474
      %v963 = vpop.f32.mrf.mxu0
      %v964 = vadd.f32 %v739, %v963
      %v965 = vpop.f32.mrf.mxu0
      %v966 = vpop.f32.mrf.mxu0
      %v967 = vadd.f32 %v742, %v966
      %v968 = vpop.f32.mrf.mxu0
      %969 = vmatprep.mubr.bf16.mxu0 0
      %970 = vmatmul.mubr.bf16.gmra.mxu0 %v475
      %v971 = vpop.f32.mrf.mxu0
      %v972 = vadd.f32 %v747, %v971
      %v973 = vpop.f32.mrf.mxu0
      %v974 = vpop.f32.mrf.mxu0
      %v975 = vadd.f32 %v750, %v974
      %v976 = vpop.f32.mrf.mxu0
      %977 = vmatprep.mubr.bf16.mxu0 0
      %978 = vmatmul.mubr.bf16.gmra.mxu0 %v476
      %v979 = vpop.f32.mrf.mxu0
      %v980 = vadd.f32 %v755, %v979
      %v981 = vpop.f32.mrf.mxu0
      %v982 = vpop.f32.mrf.mxu0
      %v983 = vadd.f32 %v758, %v982
      %v984 = vpop.f32.mrf.mxu0
      %985 = vmatprep.mubr.bf16.mxu0 0
      %986 = vmatmul.mubr.bf16.gmra.mxu0 %v477
      %v987 = vpop.f32.mrf.mxu0
      %v988 = vadd.f32 %v763, %v987
      %v989 = vpop.f32.mrf.mxu0
      %v990 = vpop.f32.mrf.mxu0
      %v991 = vadd.f32 %v766, %v990
      %v992 = vpop.f32.mrf.mxu0
      %993 = vmatprep.mubr.bf16.mxu0 0
      %994 = vmatmul.mubr.bf16.gmra.mxu0 %v478
      %v995 = vpop.f32.mrf.mxu0
      %v996 = vadd.f32 %v771, %v995
      %v997 = vpop.f32.mrf.mxu0
      %v998 = vpop.f32.mrf.mxu0
      %v999 = vadd.f32 %v774, %v998
      %v1000 = vpop.f32.mrf.mxu0
      %1001 = vmatprep.mubr.bf16.mxu0 0
      %1002 = vmatmul.mubr.bf16.gmra.mxu0 %v479
      %v1003 = vpop.f32.mrf.mxu0
      %v1004 = vadd.f32 %v779, %v1003
      %v1005 = vpop.f32.mrf.mxu0
      %v1006 = vpop.f32.mrf.mxu0
      %v1007 = vadd.f32 %v782, %v1006
      %v1008 = vpop.f32.mrf.mxu0
      %1009 = vmatprep.mubr.bf16.mxu0 0
      %1010 = vmatmul.mubr.bf16.gmra.mxu0 %v480
      %v1011 = vpop.f32.mrf.mxu0
      %v1012 = vadd.f32 %v787, %v1011
      %v1013 = vpop.f32.mrf.mxu0
      %v1014 = vpop.f32.mrf.mxu0
      %v1015 = vadd.f32 %v790, %v1014
      %v1016 = vpop.f32.mrf.mxu0
      %1017 = vdwg.mxu0
      %v1018 = vld [vmem:[#allocation2 + $0x2] sm:$0xff]
      %v1019 = vld [vmem:[#allocation2 + $0xa] sm:$0xff]
      %v1020 = vld [vmem:[#allocation2 + $0x12] sm:$0xff]
      %v1021 = vld [vmem:[#allocation2 + $0x1a] sm:$0xff]
      %v1022 = vld [vmem:[#allocation2 + $0x22] sm:$0xff]
      %v1023 = vld [vmem:[#allocation2 + $0x2a] sm:$0xff]
      %v1024 = vld [vmem:[#allocation2 + $0x32] sm:$0xff]
      %v1025 = vld [vmem:[#allocation2 + $0x3a] sm:$0xff]
      %v1026 = vld [vmem:[#allocation2 + $0x42] sm:$0xff]
      %v1027 = vld [vmem:[#allocation2 + $0x4a] sm:$0xff]
      %v1028 = vld [vmem:[#allocation2 + $0x52] sm:$0xff]
      %v1029 = vld [vmem:[#allocation2 + $0x5a] sm:$0xff]
      %v1030 = vld [vmem:[#allocation2 + $0x62] sm:$0xff]
      %v1031 = vld [vmem:[#allocation2 + $0x6a] sm:$0xff]
      %v1032 = vld [vmem:[#allocation2 + $0x72] sm:$0xff]
      %v1033 = vld [vmem:[#allocation2 + $0x7a] sm:$0xff]
      %v1034 = vld [vmem:[#allocation2 + $0x82] sm:$0xff]
      %v1035 = vld [vmem:[#allocation2 + $0x8a] sm:$0xff]
      %v1036 = vld [vmem:[#allocation2 + $0x92] sm:$0xff]
      %v1037 = vld [vmem:[#allocation2 + $0x9a] sm:$0xff]
      %v1038 = vld [vmem:[#allocation2 + $0xa2] sm:$0xff]
      %v1039 = vld [vmem:[#allocation2 + $0xaa] sm:$0xff]
      %v1040 = vld [vmem:[#allocation2 + $0xb2] sm:$0xff]
      %v1041 = vld [vmem:[#allocation2 + $0xba] sm:$0xff]
      %v1042 = vld [vmem:[#allocation2 + $0xc2] sm:$0xff]
      %v1043 = vld [vmem:[#allocation2 + $0xca] sm:$0xff]
      %v1044 = vld [vmem:[#allocation2 + $0xd2] sm:$0xff]
      %v1045 = vld [vmem:[#allocation2 + $0xda] sm:$0xff]
      %v1046 = vld [vmem:[#allocation2 + $0xe2] sm:$0xff]
      %v1047 = vld [vmem:[#allocation2 + $0xea] sm:$0xff]
      %v1048 = vld [vmem:[#allocation2 + $0xf2] sm:$0xff]
      %v1049 = vld [vmem:[#allocation2 + $0xfa] sm:$0xff]
      %v1050 = vld [vmem:[#allocation2 + $0x102] sm:$0xff]
      %v1051 = vld [vmem:[#allocation2 + $0x10a] sm:$0xff]
      %v1052 = vld [vmem:[#allocation2 + $0x112] sm:$0xff]
      %v1053 = vld [vmem:[#allocation2 + $0x11a] sm:$0xff]
      %v1054 = vpack.c.bf16 %v1019, %v1018
      %v1055 = vpack.c.bf16 %v1021, %v1020
      %v1056 = vpack.c.bf16 %v1023, %v1022
      %v1057 = vpack.c.bf16 %v1025, %v1024
      %v1058 = vpack.c.bf16 %v1027, %v1026
      %v1059 = vpack.c.bf16 %v1029, %v1028
      %v1060 = vpack.c.bf16 %v1031, %v1030
      %v1061 = vpack.c.bf16 %v1033, %v1032
      %v1062 = vpack.c.bf16 %v1035, %v1034
      %v1063 = vpack.c.bf16 %v1037, %v1036
      %v1064 = vpack.c.bf16 %v1039, %v1038
      %v1065 = vpack.c.bf16 %v1041, %v1040
      %v1066 = vpack.c.bf16 %v1043, %v1042
      %v1067 = vpack.c.bf16 %v1045, %v1044
      %v1068 = vpack.c.bf16 %v1047, %v1046
      %v1069 = vpack.c.bf16 %v1049, %v1048
      %v1070 = vpack.c.bf16 %v1051, %v1050
      %v1071 = vpack.c.bf16 %v1053, %v1052
      %s1072 = scalar_lea.vmem %s2, 128
      %v1073 = vld [vmem:[%s1072] sm:$0xf]
      %v1074 = vld [vmem:[%s1072 + $0x4] sm:$0xf]
      %v1075 = vld [vmem:[%s1072 + $0x8] sm:$0xf]
      %v1076 = vld [vmem:[%s1072 + $0xc] sm:$0xf]
      %v1077 = vld [vmem:[%s1072 + $0x10] sm:$0xf]
      %v1078 = vld [vmem:[%s1072 + $0x14] sm:$0xf]
      %v1079 = vld [vmem:[%s1072 + $0x18] sm:$0xf]
      %v1080 = vld [vmem:[%s1072 + $0x1c] sm:$0xf]
      %v1081 = vld [vmem:[%s1072 + $0x20] sm:$0xf]
      %v1082 = vld [vmem:[%s1072 + $0x24] sm:$0xf]
      %v1083 = vld [vmem:[%s1072 + $0x28] sm:$0xf]
      %v1084 = vld [vmem:[%s1072 + $0x2c] sm:$0xf]
      %v1085 = vld [vmem:[%s1072 + $0x30] sm:$0xf]
      %v1086 = vld [vmem:[%s1072 + $0x34] sm:$0xf]
      %v1087 = vld [vmem:[%s1072 + $0x38] sm:$0xf]
      %v1088 = vld [vmem:[%s1072 + $0x3c] sm:$0xf]
      %v1105 = vunpack.c.l.b16 %v1073
      %v1106 = vunpack.c.l.b16 %v1074
      %v1107 = vunpack.c.l.b16 %v1075
      %v1108 = vunpack.c.l.b16 %v1076
      %v1109 = vunpack.c.l.b16 %v1077
      %v1110 = vunpack.c.l.b16 %v1078
      %v1111 = vunpack.c.l.b16 %v1079
      %v1112 = vunpack.c.l.b16 %v1080
      %v1113 = vunpack.c.l.b16 %v1081
      %v1114 = vunpack.c.l.b16 %v1082
      %v1115 = vunpack.c.l.b16 %v1083
      %v1116 = vunpack.c.l.b16 %v1084
      %v1117 = vunpack.c.l.b16 %v1085
      %v1118 = vunpack.c.l.b16 %v1086
      %v1119 = vunpack.c.l.b16 %v1087
      %v1120 = vunpack.c.l.b16 %v1088
      %v1121 = vpack.c.b16 %v1106, %v1105
      %v1122 = vpack.c.b16 %v1108, %v1107
      %v1123 = vpack.c.b16 %v1110, %v1109
      %v1124 = vpack.c.b16 %v1112, %v1111
      %v1125 = vpack.c.b16 %v1114, %v1113
      %v1126 = vpack.c.b16 %v1116, %v1115
      %v1127 = vpack.c.b16 %v1118, %v1117
      %v1128 = vpack.c.b16 %v1120, %v1119
      %1137 = vmatprep.subr.bf16.mxu0 0
      %1138 = vmatpush1.bf16.msra.mxu0 %v1128
      %1139 = vmatprep.subr.bf16.mxu0 0
      %1140 = vmatpush1.bf16.msra.mxu0 %v1127
      %1141 = vmatprep.subr.bf16.mxu0 0
      %1142 = vmatpush1.bf16.msra.mxu0 %v1126
      %1143 = vmatprep.subr.bf16.mxu0 0
      %1144 = vmatpush1.bf16.msra.mxu0 %v1125
      %1145 = vmatprep.subr.bf16.mxu0 0
      %1146 = vmatpush1.bf16.msra.mxu0 %v1124
      %1147 = vmatprep.subr.bf16.mxu0 0
      %1148 = vmatpush1.bf16.msra.mxu0 %v1123
      %1149 = vmatprep.subr.bf16.mxu0 0
      %1150 = vmatpush1.bf16.msra.mxu0 %v1122
      %1151 = vmatprep.subr.bf16.mxu0 0
      %1152 = vmatpush1.bf16.msra.mxu0 %v1121
      %1153 = vmatprep.subr.bf16.mxu0 0
      %1154 = vmatpush2.bf16.msra.mxu0 0
      %1155 = vmatprep.subr.bf16.mxu0 0
      %1156 = vmatpush2.bf16.msra.mxu0 0
      %1157 = vmatprep.subr.bf16.mxu0 0
      %1158 = vmatpush2.bf16.msra.mxu0 0
      %1159 = vmatprep.subr.bf16.mxu0 0
      %1160 = vmatpush2.bf16.msra.mxu0 0
      %1161 = vmatprep.subr.bf16.mxu0 0
      %1162 = vmatpush2.bf16.msra.mxu0 0
      %1163 = vmatprep.subr.bf16.mxu0 0
      %1164 = vmatpush2.bf16.msra.mxu0 0
      %1165 = vmatprep.subr.bf16.mxu0 0
      %1166 = vmatpush2.bf16.msra.mxu0 0
      %1167 = vmatprep.subr.bf16.mxu0 0
      %1168 = vmatpush2.bf16.msra.mxu0 0
      %1169 = vmatprep.mubr.bf16.mxu0 0
      %1170 = vmatmul.mubr.bf16.gmra.mxu0 %v1054
      %v1171 = vpop.f32.mrf.mxu0
      %v1172 = vadd.f32 0.0, %v1171
      %v1173 = vpop.f32.mrf.mxu0
      %v1174 = vpop.f32.mrf.mxu0
      %v1175 = vadd.f32 0.0, %v1174
      %v1176 = vpop.f32.mrf.mxu0
      %1177 = vmatprep.mubr.bf16.mxu0 0
      %1178 = vmatmul.mubr.bf16.gmra.mxu0 %v1055
      %v1179 = vpop.f32.mrf.mxu0
      %v1180 = vadd.f32 0.0, %v1179
      %v1181 = vpop.f32.mrf.mxu0
      %v1182 = vpop.f32.mrf.mxu0
      %v1183 = vadd.f32 0.0, %v1182
      %v1184 = vpop.f32.mrf.mxu0
      %1185 = vmatprep.mubr.bf16.mxu0 0
      %1186 = vmatmul.mubr.bf16.gmra.mxu0 %v1056
      %v1187 = vpop.f32.mrf.mxu0
      %v1188 = vadd.f32 0.0, %v1187
      %v1189 = vpop.f32.mrf.mxu0
      %v1190 = vpop.f32.mrf.mxu0
      %v1191 = vadd.f32 0.0, %v1190
      %v1192 = vpop.f32.mrf.mxu0
      %1193 = vmatprep.mubr.bf16.mxu0 0
      %1194 = vmatmul.mubr.bf16.gmra.mxu0 %v1057
      %v1195 = vpop.f32.mrf.mxu0
      %v1196 = vadd.f32 0.0, %v1195
      %v1197 = vpop.f32.mrf.mxu0
      %v1198 = vpop.f32.mrf.mxu0
      %v1199 = vadd.f32 0.0, %v1198
      %v1200 = vpop.f32.mrf.mxu0
      %1201 = vmatprep.mubr.bf16.mxu0 0
      %1202 = vmatmul.mubr.bf16.gmra.mxu0 %v1058
      %v1203 = vpop.f32.mrf.mxu0
      %v1204 = vadd.f32 0.0, %v1203
      %v1205 = vpop.f32.mrf.mxu0
      %v1206 = vpop.f32.mrf.mxu0
      %v1207 = vadd.f32 0.0, %v1206
      %v1208 = vpop.f32.mrf.mxu0
      %1209 = vmatprep.mubr.bf16.mxu0 0
      %1210 = vmatmul.mubr.bf16.gmra.mxu0 %v1059
      %v1211 = vpop.f32.mrf.mxu0
      %v1212 = vadd.f32 0.0, %v1211
      %v1213 = vpop.f32.mrf.mxu0
      %v1214 = vpop.f32.mrf.mxu0
      %v1215 = vadd.f32 0.0, %v1214
      %v1216 = vpop.f32.mrf.mxu0
      %1217 = vmatprep.mubr.bf16.mxu0 0
      %1218 = vmatmul.mubr.bf16.gmra.mxu0 %v1060
      %v1219 = vpop.f32.mrf.mxu0
      %v1220 = vadd.f32 0.0, %v1219
      %v1221 = vpop.f32.mrf.mxu0
      %v1222 = vpop.f32.mrf.mxu0
      %v1223 = vadd.f32 0.0, %v1222
      %v1224 = vpop.f32.mrf.mxu0
      %1225 = vmatprep.mubr.bf16.mxu0 0
      %1226 = vmatmul.mubr.bf16.gmra.mxu0 %v1061
      %v1227 = vpop.f32.mrf.mxu0
      %v1228 = vadd.f32 0.0, %v1227
      %v1229 = vpop.f32.mrf.mxu0
      %v1230 = vpop.f32.mrf.mxu0
      %v1231 = vadd.f32 0.0, %v1230
      %v1232 = vpop.f32.mrf.mxu0
      %1233 = vmatprep.mubr.bf16.mxu0 0
      %1234 = vmatmul.mubr.bf16.gmra.mxu0 %v1062
      %v1235 = vpop.f32.mrf.mxu0
      %v1236 = vadd.f32 0.0, %v1235
      %v1237 = vpop.f32.mrf.mxu0
      %v1238 = vpop.f32.mrf.mxu0
      %v1239 = vadd.f32 0.0, %v1238
      %v1240 = vpop.f32.mrf.mxu0
      %1241 = vmatprep.mubr.bf16.mxu0 0
      %1242 = vmatmul.mubr.bf16.gmra.mxu0 %v1063
      %v1243 = vpop.f32.mrf.mxu0
      %v1244 = vadd.f32 0.0, %v1243
      %v1245 = vpop.f32.mrf.mxu0
      %v1246 = vpop.f32.mrf.mxu0
      %v1247 = vadd.f32 0.0, %v1246
      %v1248 = vpop.f32.mrf.mxu0
      %1249 = vmatprep.mubr.bf16.mxu0 0
      %1250 = vmatmul.mubr.bf16.gmra.mxu0 %v1064
      %v1251 = vpop.f32.mrf.mxu0
      %v1252 = vadd.f32 0.0, %v1251
      %v1253 = vpop.f32.mrf.mxu0
      %v1254 = vpop.f32.mrf.mxu0
      %v1255 = vadd.f32 0.0, %v1254
      %v1256 = vpop.f32.mrf.mxu0
      %1257 = vmatprep.mubr.bf16.mxu0 0
      %1258 = vmatmul.mubr.bf16.gmra.mxu0 %v1065
      %v1259 = vpop.f32.mrf.mxu0
      %v1260 = vadd.f32 0.0, %v1259
      %v1261 = vpop.f32.mrf.mxu0
      %v1262 = vpop.f32.mrf.mxu0
      %v1263 = vadd.f32 0.0, %v1262
      %v1264 = vpop.f32.mrf.mxu0
      %1265 = vmatprep.mubr.bf16.mxu0 0
      %1266 = vmatmul.mubr.bf16.gmra.mxu0 %v1066
      %v1267 = vpop.f32.mrf.mxu0
      %v1268 = vadd.f32 0.0, %v1267
      %v1269 = vpop.f32.mrf.mxu0
      %v1270 = vpop.f32.mrf.mxu0
      %v1271 = vadd.f32 0.0, %v1270
      %v1272 = vpop.f32.mrf.mxu0
      %1273 = vmatprep.mubr.bf16.mxu0 0
      %1274 = vmatmul.mubr.bf16.gmra.mxu0 %v1067
      %v1275 = vpop.f32.mrf.mxu0
      %v1276 = vadd.f32 0.0, %v1275
      %v1277 = vpop.f32.mrf.mxu0
      %v1278 = vpop.f32.mrf.mxu0
      %v1279 = vadd.f32 0.0, %v1278
      %v1280 = vpop.f32.mrf.mxu0
      %1281 = vmatprep.mubr.bf16.mxu0 0
      %1282 = vmatmul.mubr.bf16.gmra.mxu0 %v1068
      %v1283 = vpop.f32.mrf.mxu0
      %v1284 = vadd.f32 0.0, %v1283
      %v1285 = vpop.f32.mrf.mxu0
      %v1286 = vpop.f32.mrf.mxu0
      %v1287 = vadd.f32 0.0, %v1286
      %v1288 = vpop.f32.mrf.mxu0
      %1289 = vmatprep.mubr.bf16.mxu0 0
      %1290 = vmatmul.mubr.bf16.gmra.mxu0 %v1069
      %v1291 = vpop.f32.mrf.mxu0
      %v1292 = vadd.f32 0.0, %v1291
      %v1293 = vpop.f32.mrf.mxu0
      %v1294 = vpop.f32.mrf.mxu0
      %v1295 = vadd.f32 0.0, %v1294
      %v1296 = vpop.f32.mrf.mxu0
      %1297 = vmatprep.mubr.bf16.mxu0 0
      %1298 = vmatmul.mubr.bf16.gmra.mxu0 %v1070
      %v1299 = vpop.f32.mrf.mxu0
      %v1300 = vadd.f32 0.0, %v1299
      %v1301 = vpop.f32.mrf.mxu0
      %v1302 = vpop.f32.mrf.mxu0
      %v1303 = vadd.f32 0.0, %v1302
      %v1304 = vpop.f32.mrf.mxu0
      %1305 = vmatprep.mubr.bf16.mxu0 0
      %1306 = vmatmul.mubr.bf16.gmra.mxu0 %v1071
      %v1307 = vpop.f32.mrf.mxu0
      %v1308 = vadd.f32 0.0, %v1307
      %v1309 = vpop.f32.mrf.mxu0
      %v1310 = vpop.f32.mrf.mxu0
      %v1311 = vadd.f32 0.0, %v1310
      %v1312 = vpop.f32.mrf.mxu0
      %1313 = vdwg.mxu0
      %v1314 = vadd.f32 %v876, %v1172
      %v1315 = vadd.f32 %v879, %v1175
      %v1316 = vadd.f32 %v884, %v1180
      %v1317 = vadd.f32 %v887, %v1183
      %v1318 = vadd.f32 %v892, %v1188
      %v1319 = vadd.f32 %v895, %v1191
      %v1320 = vadd.f32 %v900, %v1196
      %v1321 = vadd.f32 %v903, %v1199
      %v1322 = vadd.f32 %v908, %v1204
      %v1323 = vadd.f32 %v911, %v1207
      %v1324 = vadd.f32 %v916, %v1212
      %v1325 = vadd.f32 %v919, %v1215
      %v1326 = vadd.f32 %v924, %v1220
      %v1327 = vadd.f32 %v927, %v1223
      %v1328 = vadd.f32 %v932, %v1228
      %v1329 = vadd.f32 %v935, %v1231
      %v1330 = vadd.f32 %v940, %v1236
      %v1331 = vadd.f32 %v943, %v1239
      %v1332 = vadd.f32 %v948, %v1244
      %v1333 = vadd.f32 %v951, %v1247
      %v1334 = vadd.f32 %v956, %v1252
      %v1335 = vadd.f32 %v959, %v1255
      %v1336 = vadd.f32 %v964, %v1260
      %v1337 = vadd.f32 %v967, %v1263
      %v1338 = vadd.f32 %v972, %v1268
      %v1339 = vadd.f32 %v975, %v1271
      %v1340 = vadd.f32 %v980, %v1276
      %v1341 = vadd.f32 %v983, %v1279
      %v1342 = vadd.f32 %v988, %v1284
      %v1343 = vadd.f32 %v991, %v1287
      %v1344 = vadd.f32 %v996, %v1292
      %v1345 = vadd.f32 %v999, %v1295
      %v1346 = vadd.f32 %v1004, %v1300
      %v1347 = vadd.f32 %v1007, %v1303
      %v1348 = vadd.f32 %v1012, %v1308
      %v1349 = vadd.f32 %v1015, %v1311
      %v1350 = vld [vmem:[#allocation2 + $0x12] sm:$0xff]
      %v1351 = vld [vmem:[#allocation2 + $0x1a] sm:$0xff]
      %v1352 = vld [vmem:[#allocation2 + $0x22] sm:$0xff]
      %v1353 = vld [vmem:[#allocation2 + $0x2a] sm:$0xff]
      %v1354 = vld [vmem:[#allocation2 + $0x32] sm:$0xff]
      %v1355 = vld [vmem:[#allocation2 + $0x3a] sm:$0xff]
      %v1356 = vld [vmem:[#allocation2 + $0x42] sm:$0xff]
      %v1357 = vld [vmem:[#allocation2 + $0x4a] sm:$0xff]
      %v1358 = vld [vmem:[#allocation2 + $0x52] sm:$0xff]
      %v1359 = vld [vmem:[#allocation2 + $0x5a] sm:$0xff]
      %v1360 = vld [vmem:[#allocation2 + $0x62] sm:$0xff]
      %v1361 = vld [vmem:[#allocation2 + $0x6a] sm:$0xff]
      %v1362 = vld [vmem:[#allocation2 + $0x72] sm:$0xff]
      %v1363 = vld [vmem:[#allocation2 + $0x7a] sm:$0xff]
      %v1364 = vld [vmem:[#allocation2 + $0x82] sm:$0xff]
      %v1365 = vld [vmem:[#allocation2 + $0x8a] sm:$0xff]
      %v1366 = vld [vmem:[#allocation2 + $0x92] sm:$0xff]
      %v1367 = vld [vmem:[#allocation2 + $0x9a] sm:$0xff]
      %v1368 = vld [vmem:[#allocation2 + $0xa2] sm:$0xff]
      %v1369 = vld [vmem:[#allocation2 + $0xaa] sm:$0xff]
      %v1370 = vld [vmem:[#allocation2 + $0xb2] sm:$0xff]
      %v1371 = vld [vmem:[#allocation2 + $0xba] sm:$0xff]
      %v1372 = vld [vmem:[#allocation2 + $0xc2] sm:$0xff]
      %v1373 = vld [vmem:[#allocation2 + $0xca] sm:$0xff]
      %v1374 = vld [vmem:[#allocation2 + $0xd2] sm:$0xff]
      %v1375 = vld [vmem:[#allocation2 + $0xda] sm:$0xff]
      %v1376 = vld [vmem:[#allocation2 + $0xe2] sm:$0xff]
      %v1377 = vld [vmem:[#allocation2 + $0xea] sm:$0xff]
      %v1378 = vld [vmem:[#allocation2 + $0xf2] sm:$0xff]
      %v1379 = vld [vmem:[#allocation2 + $0xfa] sm:$0xff]
      %v1380 = vld [vmem:[#allocation2 + $0x102] sm:$0xff]
      %v1381 = vld [vmem:[#allocation2 + $0x10a] sm:$0xff]
      %v1382 = vld [vmem:[#allocation2 + $0x112] sm:$0xff]
      %v1383 = vld [vmem:[#allocation2 + $0x11a] sm:$0xff]
      %v1384 = vld [vmem:[#allocation2 + $0x122] sm:$0xff]
      %v1385 = vld [vmem:[#allocation2 + $0x12a] sm:$0xff]
      %v1386 = vpack.c.bf16 %v1351, %v1350
      %v1387 = vpack.c.bf16 %v1353, %v1352
      %v1388 = vpack.c.bf16 %v1355, %v1354
      %v1389 = vpack.c.bf16 %v1357, %v1356
      %v1390 = vpack.c.bf16 %v1359, %v1358
      %v1391 = vpack.c.bf16 %v1361, %v1360
      %v1392 = vpack.c.bf16 %v1363, %v1362
      %v1393 = vpack.c.bf16 %v1365, %v1364
      %v1394 = vpack.c.bf16 %v1367, %v1366
      %v1395 = vpack.c.bf16 %v1369, %v1368
      %v1396 = vpack.c.bf16 %v1371, %v1370
      %v1397 = vpack.c.bf16 %v1373, %v1372
      %v1398 = vpack.c.bf16 %v1375, %v1374
      %v1399 = vpack.c.bf16 %v1377, %v1376
      %v1400 = vpack.c.bf16 %v1379, %v1378
      %v1401 = vpack.c.bf16 %v1381, %v1380
      %v1402 = vpack.c.bf16 %v1383, %v1382
      %v1403 = vpack.c.bf16 %v1385, %v1384
      %s1404 = scalar_lea.vmem %s2, 192
      %v1405 = vld [vmem:[%s1404] sm:$0xf]
      %v1406 = vld [vmem:[%s1404 + $0x4] sm:$0xf]
      %v1407 = vld [vmem:[%s1404 + $0x8] sm:$0xf]
      %v1408 = vld [vmem:[%s1404 + $0xc] sm:$0xf]
      %v1409 = vld [vmem:[%s1404 + $0x10] sm:$0xf]
      %v1410 = vld [vmem:[%s1404 + $0x14] sm:$0xf]
      %v1411 = vld [vmem:[%s1404 + $0x18] sm:$0xf]
      %v1412 = vld [vmem:[%s1404 + $0x1c] sm:$0xf]
      %v1413 = vld [vmem:[%s1404 + $0x20] sm:$0xf]
      %v1414 = vld [vmem:[%s1404 + $0x24] sm:$0xf]
      %v1415 = vld [vmem:[%s1404 + $0x28] sm:$0xf]
      %v1416 = vld [vmem:[%s1404 + $0x2c] sm:$0xf]
      %v1417 = vld [vmem:[%s1404 + $0x30] sm:$0xf]
      %v1418 = vld [vmem:[%s1404 + $0x34] sm:$0xf]
      %v1419 = vld [vmem:[%s1404 + $0x38] sm:$0xf]
      %v1420 = vld [vmem:[%s1404 + $0x3c] sm:$0xf]
      %v1437 = vunpack.c.l.b16 %v1405
      %v1438 = vunpack.c.l.b16 %v1406
      %v1439 = vunpack.c.l.b16 %v1407
      %v1440 = vunpack.c.l.b16 %v1408
      %v1441 = vunpack.c.l.b16 %v1409
      %v1442 = vunpack.c.l.b16 %v1410
      %v1443 = vunpack.c.l.b16 %v1411
      %v1444 = vunpack.c.l.b16 %v1412
      %v1445 = vunpack.c.l.b16 %v1413
      %v1446 = vunpack.c.l.b16 %v1414
      %v1447 = vunpack.c.l.b16 %v1415
      %v1448 = vunpack.c.l.b16 %v1416
      %v1449 = vunpack.c.l.b16 %v1417
      %v1450 = vunpack.c.l.b16 %v1418
      %v1451 = vunpack.c.l.b16 %v1419
      %v1452 = vunpack.c.l.b16 %v1420
      %v1453 = vpack.c.b16 %v1438, %v1437
      %v1454 = vpack.c.b16 %v1440, %v1439
      %v1455 = vpack.c.b16 %v1442, %v1441
      %v1456 = vpack.c.b16 %v1444, %v1443
      %v1457 = vpack.c.b16 %v1446, %v1445
      %v1458 = vpack.c.b16 %v1448, %v1447
      %v1459 = vpack.c.b16 %v1450, %v1449
      %v1460 = vpack.c.b16 %v1452, %v1451
      %1469 = vmatprep.subr.bf16.mxu0 0
      %1470 = vmatpush1.bf16.msra.mxu0 %v1460
      %1471 = vmatprep.subr.bf16.mxu0 0
      %1472 = vmatpush1.bf16.msra.mxu0 %v1459
      %1473 = vmatprep.subr.bf16.mxu0 0
      %1474 = vmatpush1.bf16.msra.mxu0 %v1458
      %1475 = vmatprep.subr.bf16.mxu0 0
      %1476 = vmatpush1.bf16.msra.mxu0 %v1457
      %1477 = vmatprep.subr.bf16.mxu0 0
      %1478 = vmatpush1.bf16.msra.mxu0 %v1456
      %1479 = vmatprep.subr.bf16.mxu0 0
      %1480 = vmatpush1.bf16.msra.mxu0 %v1455
      %1481 = vmatprep.subr.bf16.mxu0 0
      %1482 = vmatpush1.bf16.msra.mxu0 %v1454
      %1483 = vmatprep.subr.bf16.mxu0 0
      %1484 = vmatpush1.bf16.msra.mxu0 %v1453
      %1485 = vmatprep.subr.bf16.mxu0 0
      %1486 = vmatpush2.bf16.msra.mxu0 0
      %1487 = vmatprep.subr.bf16.mxu0 0
      %1488 = vmatpush2.bf16.msra.mxu0 0
      %1489 = vmatprep.subr.bf16.mxu0 0
      %1490 = vmatpush2.bf16.msra.mxu0 0
      %1491 = vmatprep.subr.bf16.mxu0 0
      %1492 = vmatpush2.bf16.msra.mxu0 0
      %1493 = vmatprep.subr.bf16.mxu0 0
      %1494 = vmatpush2.bf16.msra.mxu0 0
      %1495 = vmatprep.subr.bf16.mxu0 0
      %1496 = vmatpush2.bf16.msra.mxu0 0
      %1497 = vmatprep.subr.bf16.mxu0 0
      %1498 = vmatpush2.bf16.msra.mxu0 0
      %1499 = vmatprep.subr.bf16.mxu0 0
      %1500 = vmatpush2.bf16.msra.mxu0 0
      %1501 = vmatprep.mubr.bf16.mxu0 0
      %1502 = vmatmul.mubr.bf16.gmra.mxu0 %v1386
      %v1503 = vpop.f32.mrf.mxu0
      %v1504 = vadd.f32 0.0, %v1503
      %v1505 = vpop.f32.mrf.mxu0
      %v1506 = vpop.f32.mrf.mxu0
      %v1507 = vadd.f32 0.0, %v1506
      %v1508 = vpop.f32.mrf.mxu0
      %1509 = vmatprep.mubr.bf16.mxu0 0
      %1510 = vmatmul.mubr.bf16.gmra.mxu0 %v1387
      %v1511 = vpop.f32.mrf.mxu0
      %v1512 = vadd.f32 0.0, %v1511
      %v1513 = vpop.f32.mrf.mxu0
      %v1514 = vpop.f32.mrf.mxu0
      %v1515 = vadd.f32 0.0, %v1514
      %v1516 = vpop.f32.mrf.mxu0
      %1517 = vmatprep.mubr.bf16.mxu0 0
      %1518 = vmatmul.mubr.bf16.gmra.mxu0 %v1388
      %v1519 = vpop.f32.mrf.mxu0
      %v1520 = vadd.f32 0.0, %v1519
      %v1521 = vpop.f32.mrf.mxu0
      %v1522 = vpop.f32.mrf.mxu0
      %v1523 = vadd.f32 0.0, %v1522
      %v1524 = vpop.f32.mrf.mxu0
      %1525 = vmatprep.mubr.bf16.mxu0 0
      %1526 = vmatmul.mubr.bf16.gmra.mxu0 %v1389
      %v1527 = vpop.f32.mrf.mxu0
      %v1528 = vadd.f32 0.0, %v1527
      %v1529 = vpop.f32.mrf.mxu0
      %v1530 = vpop.f32.mrf.mxu0
      %v1531 = vadd.f32 0.0, %v1530
      %v1532 = vpop.f32.mrf.mxu0
      %1533 = vmatprep.mubr.bf16.mxu0 0
      %1534 = vmatmul.mubr.bf16.gmra.mxu0 %v1390
      %v1535 = vpop.f32.mrf.mxu0
      %v1536 = vadd.f32 0.0, %v1535
      %v1537 = vpop.f32.mrf.mxu0
      %v1538 = vpop.f32.mrf.mxu0
      %v1539 = vadd.f32 0.0, %v1538
      %v1540 = vpop.f32.mrf.mxu0
      %1541 = vmatprep.mubr.bf16.mxu0 0
      %1542 = vmatmul.mubr.bf16.gmra.mxu0 %v1391
      %v1543 = vpop.f32.mrf.mxu0
      %v1544 = vadd.f32 0.0, %v1543
      %v1545 = vpop.f32.mrf.mxu0
      %v1546 = vpop.f32.mrf.mxu0
      %v1547 = vadd.f32 0.0, %v1546
      %v1548 = vpop.f32.mrf.mxu0
      %1549 = vmatprep.mubr.bf16.mxu0 0
      %1550 = vmatmul.mubr.bf16.gmra.mxu0 %v1392
      %v1551 = vpop.f32.mrf.mxu0
      %v1552 = vadd.f32 0.0, %v1551
      %v1553 = vpop.f32.mrf.mxu0
      %v1554 = vpop.f32.mrf.mxu0
      %v1555 = vadd.f32 0.0, %v1554
      %v1556 = vpop.f32.mrf.mxu0
      %1557 = vmatprep.mubr.bf16.mxu0 0
      %1558 = vmatmul.mubr.bf16.gmra.mxu0 %v1393
      %v1559 = vpop.f32.mrf.mxu0
      %v1560 = vadd.f32 0.0, %v1559
      %v1561 = vpop.f32.mrf.mxu0
      %v1562 = vpop.f32.mrf.mxu0
      %v1563 = vadd.f32 0.0, %v1562
      %v1564 = vpop.f32.mrf.mxu0
      %1565 = vmatprep.mubr.bf16.mxu0 0
      %1566 = vmatmul.mubr.bf16.gmra.mxu0 %v1394
      %v1567 = vpop.f32.mrf.mxu0
      %v1568 = vadd.f32 0.0, %v1567
      %v1569 = vpop.f32.mrf.mxu0
      %v1570 = vpop.f32.mrf.mxu0
      %v1571 = vadd.f32 0.0, %v1570
      %v1572 = vpop.f32.mrf.mxu0
      %1573 = vmatprep.mubr.bf16.mxu0 0
      %1574 = vmatmul.mubr.bf16.gmra.mxu0 %v1395
      %v1575 = vpop.f32.mrf.mxu0
      %v1576 = vadd.f32 0.0, %v1575
      %v1577 = vpop.f32.mrf.mxu0
      %v1578 = vpop.f32.mrf.mxu0
      %v1579 = vadd.f32 0.0, %v1578
      %v1580 = vpop.f32.mrf.mxu0
      %1581 = vmatprep.mubr.bf16.mxu0 0
      %1582 = vmatmul.mubr.bf16.gmra.mxu0 %v1396
      %v1583 = vpop.f32.mrf.mxu0
      %v1584 = vadd.f32 0.0, %v1583
      %v1585 = vpop.f32.mrf.mxu0
      %v1586 = vpop.f32.mrf.mxu0
      %v1587 = vadd.f32 0.0, %v1586
      %v1588 = vpop.f32.mrf.mxu0
      %1589 = vmatprep.mubr.bf16.mxu0 0
      %1590 = vmatmul.mubr.bf16.gmra.mxu0 %v1397
      %v1591 = vpop.f32.mrf.mxu0
      %v1592 = vadd.f32 0.0, %v1591
      %v1593 = vpop.f32.mrf.mxu0
      %v1594 = vpop.f32.mrf.mxu0
      %v1595 = vadd.f32 0.0, %v1594
      %v1596 = vpop.f32.mrf.mxu0
      %1597 = vmatprep.mubr.bf16.mxu0 0
      %1598 = vmatmul.mubr.bf16.gmra.mxu0 %v1398
      %v1599 = vpop.f32.mrf.mxu0
      %v1600 = vadd.f32 0.0, %v1599
      %v1601 = vpop.f32.mrf.mxu0
      %v1602 = vpop.f32.mrf.mxu0
      %v1603 = vadd.f32 0.0, %v1602
      %v1604 = vpop.f32.mrf.mxu0
      %1605 = vmatprep.mubr.bf16.mxu0 0
      %1606 = vmatmul.mubr.bf16.gmra.mxu0 %v1399
      %v1607 = vpop.f32.mrf.mxu0
      %v1608 = vadd.f32 0.0, %v1607
      %v1609 = vpop.f32.mrf.mxu0
      %v1610 = vpop.f32.mrf.mxu0
      %v1611 = vadd.f32 0.0, %v1610
      %v1612 = vpop.f32.mrf.mxu0
      %1613 = vmatprep.mubr.bf16.mxu0 0
      %1614 = vmatmul.mubr.bf16.gmra.mxu0 %v1400
      %v1615 = vpop.f32.mrf.mxu0
      %v1616 = vadd.f32 0.0, %v1615
      %v1617 = vpop.f32.mrf.mxu0
      %v1618 = vpop.f32.mrf.mxu0
      %v1619 = vadd.f32 0.0, %v1618
      %v1620 = vpop.f32.mrf.mxu0
      %1621 = vmatprep.mubr.bf16.mxu0 0
      %1622 = vmatmul.mubr.bf16.gmra.mxu0 %v1401
      %v1623 = vpop.f32.mrf.mxu0
      %v1624 = vadd.f32 0.0, %v1623
      %v1625 = vpop.f32.mrf.mxu0
      %v1626 = vpop.f32.mrf.mxu0
      %v1627 = vadd.f32 0.0, %v1626
      %v1628 = vpop.f32.mrf.mxu0
      %1629 = vmatprep.mubr.bf16.mxu0 0
      %1630 = vmatmul.mubr.bf16.gmra.mxu0 %v1402
      %v1631 = vpop.f32.mrf.mxu0
      %v1632 = vadd.f32 0.0, %v1631
      %v1633 = vpop.f32.mrf.mxu0
      %v1634 = vpop.f32.mrf.mxu0
      %v1635 = vadd.f32 0.0, %v1634
      %v1636 = vpop.f32.mrf.mxu0
      %1637 = vmatprep.mubr.bf16.mxu0 0
      %1638 = vmatmul.mubr.bf16.gmra.mxu0 %v1403
      %v1639 = vpop.f32.mrf.mxu0
      %v1640 = vadd.f32 0.0, %v1639
      %v1641 = vpop.f32.mrf.mxu0
      %v1642 = vpop.f32.mrf.mxu0
      %v1643 = vadd.f32 0.0, %v1642
      %v1644 = vpop.f32.mrf.mxu0
      %1645 = vdwg.mxu0
      %v1646 = vadd.f32 %v1314, %v1504
      %v1647 = vadd.f32 %v1315, %v1507
      %v1648 = vadd.f32 %v1316, %v1512
      %v1649 = vadd.f32 %v1317, %v1515
      %v1650 = vadd.f32 %v1318, %v1520
      %v1651 = vadd.f32 %v1319, %v1523
      %v1652 = vadd.f32 %v1320, %v1528
      %v1653 = vadd.f32 %v1321, %v1531
      %v1654 = vadd.f32 %v1322, %v1536
      %v1655 = vadd.f32 %v1323, %v1539
      %v1656 = vadd.f32 %v1324, %v1544
      %v1657 = vadd.f32 %v1325, %v1547
      %v1658 = vadd.f32 %v1326, %v1552
      %v1659 = vadd.f32 %v1327, %v1555
      %v1660 = vadd.f32 %v1328, %v1560
      %v1661 = vadd.f32 %v1329, %v1563
      %v1662 = vadd.f32 %v1330, %v1568
      %v1663 = vadd.f32 %v1331, %v1571
      %v1664 = vadd.f32 %v1332, %v1576
      %v1665 = vadd.f32 %v1333, %v1579
      %v1666 = vadd.f32 %v1334, %v1584
      %v1667 = vadd.f32 %v1335, %v1587
      %v1668 = vadd.f32 %v1336, %v1592
      %v1669 = vadd.f32 %v1337, %v1595
      %v1670 = vadd.f32 %v1338, %v1600
      %v1671 = vadd.f32 %v1339, %v1603
      %v1672 = vadd.f32 %v1340, %v1608
      %v1673 = vadd.f32 %v1341, %v1611
      %v1674 = vadd.f32 %v1342, %v1616
      %v1675 = vadd.f32 %v1343, %v1619
      %v1676 = vadd.f32 %v1344, %v1624
      %v1677 = vadd.f32 %v1345, %v1627
      %v1678 = vadd.f32 %v1346, %v1632
      %v1679 = vadd.f32 %v1347, %v1635
      %v1680 = vadd.f32 %v1348, %v1640
      %v1681 = vadd.f32 %v1349, %v1643
      %v1682 = vld [vmem:[#allocation2 + $0x13] sm:$0xff]
      %v1683 = vld [vmem:[#allocation2 + $0x1b] sm:$0xff]
      %v1684 = vld [vmem:[#allocation2 + $0x23] sm:$0xff]
      %v1685 = vld [vmem:[#allocation2 + $0x2b] sm:$0xff]
      %v1686 = vld [vmem:[#allocation2 + $0x33] sm:$0xff]
      %v1687 = vld [vmem:[#allocation2 + $0x3b] sm:$0xff]
      %v1688 = vld [vmem:[#allocation2 + $0x43] sm:$0xff]
      %v1689 = vld [vmem:[#allocation2 + $0x4b] sm:$0xff]
      %v1690 = vld [vmem:[#allocation2 + $0x53] sm:$0xff]
      %v1691 = vld [vmem:[#allocation2 + $0x5b] sm:$0xff]
      %v1692 = vld [vmem:[#allocation2 + $0x63] sm:$0xff]
      %v1693 = vld [vmem:[#allocation2 + $0x6b] sm:$0xff]
      %v1694 = vld [vmem:[#allocation2 + $0x73] sm:$0xff]
      %v1695 = vld [vmem:[#allocation2 + $0x7b] sm:$0xff]
      %v1696 = vld [vmem:[#allocation2 + $0x83] sm:$0xff]
      %v1697 = vld [vmem:[#allocation2 + $0x8b] sm:$0xff]
      %v1698 = vld [vmem:[#allocation2 + $0x93] sm:$0xff]
      %v1699 = vld [vmem:[#allocation2 + $0x9b] sm:$0xff]
      %v1700 = vld [vmem:[#allocation2 + $0xa3] sm:$0xff]
      %v1701 = vld [vmem:[#allocation2 + $0xab] sm:$0xff]
      %v1702 = vld [vmem:[#allocation2 + $0xb3] sm:$0xff]
      %v1703 = vld [vmem:[#allocation2 + $0xbb] sm:$0xff]
      %v1704 = vld [vmem:[#allocation2 + $0xc3] sm:$0xff]
      %v1705 = vld [vmem:[#allocation2 + $0xcb] sm:$0xff]
      %v1706 = vld [vmem:[#allocation2 + $0xd3] sm:$0xff]
      %v1707 = vld [vmem:[#allocation2 + $0xdb] sm:$0xff]
      %v1708 = vld [vmem:[#allocation2 + $0xe3] sm:$0xff]
      %v1709 = vld [vmem:[#allocation2 + $0xeb] sm:$0xff]
      %v1710 = vld [vmem:[#allocation2 + $0xf3] sm:$0xff]
      %v1711 = vld [vmem:[#allocation2 + $0xfb] sm:$0xff]
      %v1712 = vld [vmem:[#allocation2 + $0x103] sm:$0xff]
      %v1713 = vld [vmem:[#allocation2 + $0x10b] sm:$0xff]
      %v1714 = vld [vmem:[#allocation2 + $0x113] sm:$0xff]
      %v1715 = vld [vmem:[#allocation2 + $0x11b] sm:$0xff]
      %v1716 = vld [vmem:[#allocation2 + $0x123] sm:$0xff]
      %v1717 = vld [vmem:[#allocation2 + $0x12b] sm:$0xff]
      %v1718 = vpack.c.bf16 %v1683, %v1682
      %v1719 = vpack.c.bf16 %v1685, %v1684
      %v1720 = vpack.c.bf16 %v1687, %v1686
      %v1721 = vpack.c.bf16 %v1689, %v1688
      %v1722 = vpack.c.bf16 %v1691, %v1690
      %v1723 = vpack.c.bf16 %v1693, %v1692
      %v1724 = vpack.c.bf16 %v1695, %v1694
      %v1725 = vpack.c.bf16 %v1697, %v1696
      %v1726 = vpack.c.bf16 %v1699, %v1698
      %v1727 = vpack.c.bf16 %v1701, %v1700
      %v1728 = vpack.c.bf16 %v1703, %v1702
      %v1729 = vpack.c.bf16 %v1705, %v1704
      %v1730 = vpack.c.bf16 %v1707, %v1706
      %v1731 = vpack.c.bf16 %v1709, %v1708
      %v1732 = vpack.c.bf16 %v1711, %v1710
      %v1733 = vpack.c.bf16 %v1713, %v1712
      %v1734 = vpack.c.bf16 %v1715, %v1714
      %v1735 = vpack.c.bf16 %v1717, %v1716
      %s1736 = scalar_lea.vmem %s2, 256
      %v1737 = vld [vmem:[%s1736] sm:$0xf]
      %v1738 = vld [vmem:[%s1736 + $0x4] sm:$0xf]
      %v1739 = vld [vmem:[%s1736 + $0x8] sm:$0xf]
      %v1740 = vld [vmem:[%s1736 + $0xc] sm:$0xf]
      %v1741 = vld [vmem:[%s1736 + $0x10] sm:$0xf]
      %v1742 = vld [vmem:[%s1736 + $0x14] sm:$0xf]
      %v1743 = vld [vmem:[%s1736 + $0x18] sm:$0xf]
      %v1744 = vld [vmem:[%s1736 + $0x1c] sm:$0xf]
      %v1745 = vld [vmem:[%s1736 + $0x20] sm:$0xf]
      %v1746 = vld [vmem:[%s1736 + $0x24] sm:$0xf]
      %v1747 = vld [vmem:[%s1736 + $0x28] sm:$0xf]
      %v1748 = vld [vmem:[%s1736 + $0x2c] sm:$0xf]
      %v1749 = vld [vmem:[%s1736 + $0x30] sm:$0xf]
      %v1750 = vld [vmem:[%s1736 + $0x34] sm:$0xf]
      %v1751 = vld [vmem:[%s1736 + $0x38] sm:$0xf]
      %v1752 = vld [vmem:[%s1736 + $0x3c] sm:$0xf]
      %v1769 = vunpack.c.l.b16 %v1737
      %v1770 = vunpack.c.l.b16 %v1738
      %v1771 = vunpack.c.l.b16 %v1739
      %v1772 = vunpack.c.l.b16 %v1740
      %v1773 = vunpack.c.l.b16 %v1741
      %v1774 = vunpack.c.l.b16 %v1742
      %v1775 = vunpack.c.l.b16 %v1743
      %v1776 = vunpack.c.l.b16 %v1744
      %v1777 = vunpack.c.l.b16 %v1745
      %v1778 = vunpack.c.l.b16 %v1746
      %v1779 = vunpack.c.l.b16 %v1747
      %v1780 = vunpack.c.l.b16 %v1748
      %v1781 = vunpack.c.l.b16 %v1749
      %v1782 = vunpack.c.l.b16 %v1750
      %v1783 = vunpack.c.l.b16 %v1751
      %v1784 = vunpack.c.l.b16 %v1752
      %v1785 = vpack.c.b16 %v1770, %v1769
      %v1786 = vpack.c.b16 %v1772, %v1771
      %v1787 = vpack.c.b16 %v1774, %v1773
      %v1788 = vpack.c.b16 %v1776, %v1775
      %v1789 = vpack.c.b16 %v1778, %v1777
      %v1790 = vpack.c.b16 %v1780, %v1779
      %v1791 = vpack.c.b16 %v1782, %v1781
      %v1792 = vpack.c.b16 %v1784, %v1783
      %1801 = vmatprep.subr.bf16.mxu0 0
      %1802 = vmatpush1.bf16.msra.mxu0 %v1792
      %1803 = vmatprep.subr.bf16.mxu0 0
      %1804 = vmatpush1.bf16.msra.mxu0 %v1791
      %1805 = vmatprep.subr.bf16.mxu0 0
      %1806 = vmatpush1.bf16.msra.mxu0 %v1790
      %1807 = vmatprep.subr.bf16.mxu0 0
      %1808 = vmatpush1.bf16.msra.mxu0 %v1789
      %1809 = vmatprep.subr.bf16.mxu0 0
      %1810 = vmatpush1.bf16.msra.mxu0 %v1788
      %1811 = vmatprep.subr.bf16.mxu0 0
      %1812 = vmatpush1.bf16.msra.mxu0 %v1787
      %1813 = vmatprep.subr.bf16.mxu0 0
      %1814 = vmatpush1.bf16.msra.mxu0 %v1786
      %1815 = vmatprep.subr.bf16.mxu0 0
      %1816 = vmatpush1.bf16.msra.mxu0 %v1785
      %1817 = vmatprep.subr.bf16.mxu0 0
      %1818 = vmatpush2.bf16.msra.mxu0 0
      %1819 = vmatprep.subr.bf16.mxu0 0
      %1820 = vmatpush2.bf16.msra.mxu0 0
      %1821 = vmatprep.subr.bf16.mxu0 0
      %1822 = vmatpush2.bf16.msra.mxu0 0
      %1823 = vmatprep.subr.bf16.mxu0 0
      %1824 = vmatpush2.bf16.msra.mxu0 0
      %1825 = vmatprep.subr.bf16.mxu0 0
      %1826 = vmatpush2.bf16.msra.mxu0 0
      %1827 = vmatprep.subr.bf16.mxu0 0
      %1828 = vmatpush2.bf16.msra.mxu0 0
      %1829 = vmatprep.subr.bf16.mxu0 0
      %1830 = vmatpush2.bf16.msra.mxu0 0
      %1831 = vmatprep.subr.bf16.mxu0 0
      %1832 = vmatpush2.bf16.msra.mxu0 0
      %1833 = vmatprep.mubr.bf16.mxu0 0
      %1834 = vmatmul.mubr.bf16.gmra.mxu0 %v1718
      %v1835 = vpop.f32.mrf.mxu0
      %v1836 = vadd.f32 0.0, %v1835
      %v1837 = vpop.f32.mrf.mxu0
      %v1838 = vpop.f32.mrf.mxu0
      %v1839 = vadd.f32 0.0, %v1838
      %v1840 = vpop.f32.mrf.mxu0
      %1841 = vmatprep.mubr.bf16.mxu0 0
      %1842 = vmatmul.mubr.bf16.gmra.mxu0 %v1719
      %v1843 = vpop.f32.mrf.mxu0
      %v1844 = vadd.f32 0.0, %v1843
      %v1845 = vpop.f32.mrf.mxu0
      %v1846 = vpop.f32.mrf.mxu0
      %v1847 = vadd.f32 0.0, %v1846
      %v1848 = vpop.f32.mrf.mxu0
      %1849 = vmatprep.mubr.bf16.mxu0 0
      %1850 = vmatmul.mubr.bf16.gmra.mxu0 %v1720
      %v1851 = vpop.f32.mrf.mxu0
      %v1852 = vadd.f32 0.0, %v1851
      %v1853 = vpop.f32.mrf.mxu0
      %v1854 = vpop.f32.mrf.mxu0
      %v1855 = vadd.f32 0.0, %v1854
      %v1856 = vpop.f32.mrf.mxu0
      %1857 = vmatprep.mubr.bf16.mxu0 0
      %1858 = vmatmul.mubr.bf16.gmra.mxu0 %v1721
      %v1859 = vpop.f32.mrf.mxu0
      %v1860 = vadd.f32 0.0, %v1859
      %v1861 = vpop.f32.mrf.mxu0
      %v1862 = vpop.f32.mrf.mxu0
      %v1863 = vadd.f32 0.0, %v1862
      %v1864 = vpop.f32.mrf.mxu0
      %1865 = vmatprep.mubr.bf16.mxu0 0
      %1866 = vmatmul.mubr.bf16.gmra.mxu0 %v1722
      %v1867 = vpop.f32.mrf.mxu0
      %v1868 = vadd.f32 0.0, %v1867
      %v1869 = vpop.f32.mrf.mxu0
      %v1870 = vpop.f32.mrf.mxu0
      %v1871 = vadd.f32 0.0, %v1870
      %v1872 = vpop.f32.mrf.mxu0
      %1873 = vmatprep.mubr.bf16.mxu0 0
      %1874 = vmatmul.mubr.bf16.gmra.mxu0 %v1723
      %v1875 = vpop.f32.mrf.mxu0
      %v1876 = vadd.f32 0.0, %v1875
      %v1877 = vpop.f32.mrf.mxu0
      %v1878 = vpop.f32.mrf.mxu0
      %v1879 = vadd.f32 0.0, %v1878
      %v1880 = vpop.f32.mrf.mxu0
      %1881 = vmatprep.mubr.bf16.mxu0 0
      %1882 = vmatmul.mubr.bf16.gmra.mxu0 %v1724
      %v1883 = vpop.f32.mrf.mxu0
      %v1884 = vadd.f32 0.0, %v1883
      %v1885 = vpop.f32.mrf.mxu0
      %v1886 = vpop.f32.mrf.mxu0
      %v1887 = vadd.f32 0.0, %v1886
      %v1888 = vpop.f32.mrf.mxu0
      %1889 = vmatprep.mubr.bf16.mxu0 0
      %1890 = vmatmul.mubr.bf16.gmra.mxu0 %v1725
      %v1891 = vpop.f32.mrf.mxu0
      %v1892 = vadd.f32 0.0, %v1891
      %v1893 = vpop.f32.mrf.mxu0
      %v1894 = vpop.f32.mrf.mxu0
      %v1895 = vadd.f32 0.0, %v1894
      %v1896 = vpop.f32.mrf.mxu0
      %1897 = vmatprep.mubr.bf16.mxu0 0
      %1898 = vmatmul.mubr.bf16.gmra.mxu0 %v1726
      %v1899 = vpop.f32.mrf.mxu0
      %v1900 = vadd.f32 0.0, %v1899
      %v1901 = vpop.f32.mrf.mxu0
      %v1902 = vpop.f32.mrf.mxu0
      %v1903 = vadd.f32 0.0, %v1902
      %v1904 = vpop.f32.mrf.mxu0
      %1905 = vmatprep.mubr.bf16.mxu0 0
      %1906 = vmatmul.mubr.bf16.gmra.mxu0 %v1727
      %v1907 = vpop.f32.mrf.mxu0
      %v1908 = vadd.f32 0.0, %v1907
      %v1909 = vpop.f32.mrf.mxu0
      %v1910 = vpop.f32.mrf.mxu0
      %v1911 = vadd.f32 0.0, %v1910
      %v1912 = vpop.f32.mrf.mxu0
      %1913 = vmatprep.mubr.bf16.mxu0 0
      %1914 = vmatmul.mubr.bf16.gmra.mxu0 %v1728
      %v1915 = vpop.f32.mrf.mxu0
      %v1916 = vadd.f32 0.0, %v1915
      %v1917 = vpop.f32.mrf.mxu0
      %v1918 = vpop.f32.mrf.mxu0
      %v1919 = vadd.f32 0.0, %v1918
      %v1920 = vpop.f32.mrf.mxu0
      %1921 = vmatprep.mubr.bf16.mxu0 0
      %1922 = vmatmul.mubr.bf16.gmra.mxu0 %v1729
      %v1923 = vpop.f32.mrf.mxu0
      %v1924 = vadd.f32 0.0, %v1923
      %v1925 = vpop.f32.mrf.mxu0
      %v1926 = vpop.f32.mrf.mxu0
      %v1927 = vadd.f32 0.0, %v1926
      %v1928 = vpop.f32.mrf.mxu0
      %1929 = vmatprep.mubr.bf16.mxu0 0
      %1930 = vmatmul.mubr.bf16.gmra.mxu0 %v1730
      %v1931 = vpop.f32.mrf.mxu0
      %v1932 = vadd.f32 0.0, %v1931
      %v1933 = vpop.f32.mrf.mxu0
      %v1934 = vpop.f32.mrf.mxu0
      %v1935 = vadd.f32 0.0, %v1934
      %v1936 = vpop.f32.mrf.mxu0
      %1937 = vmatprep.mubr.bf16.mxu0 0
      %1938 = vmatmul.mubr.bf16.gmra.mxu0 %v1731
      %v1939 = vpop.f32.mrf.mxu0
      %v1940 = vadd.f32 0.0, %v1939
      %v1941 = vpop.f32.mrf.mxu0
      %v1942 = vpop.f32.mrf.mxu0
      %v1943 = vadd.f32 0.0, %v1942
      %v1944 = vpop.f32.mrf.mxu0
      %1945 = vmatprep.mubr.bf16.mxu0 0
      %1946 = vmatmul.mubr.bf16.gmra.mxu0 %v1732
      %v1947 = vpop.f32.mrf.mxu0
      %v1948 = vadd.f32 0.0, %v1947
      %v1949 = vpop.f32.mrf.mxu0
      %v1950 = vpop.f32.mrf.mxu0
      %v1951 = vadd.f32 0.0, %v1950
      %v1952 = vpop.f32.mrf.mxu0
      %1953 = vmatprep.mubr.bf16.mxu0 0
      %1954 = vmatmul.mubr.bf16.gmra.mxu0 %v1733
      %v1955 = vpop.f32.mrf.mxu0
      %v1956 = vadd.f32 0.0, %v1955
      %v1957 = vpop.f32.mrf.mxu0
      %v1958 = vpop.f32.mrf.mxu0
      %v1959 = vadd.f32 0.0, %v1958
      %v1960 = vpop.f32.mrf.mxu0
      %1961 = vmatprep.mubr.bf16.mxu0 0
      %1962 = vmatmul.mubr.bf16.gmra.mxu0 %v1734
      %v1963 = vpop.f32.mrf.mxu0
      %v1964 = vadd.f32 0.0, %v1963
      %v1965 = vpop.f32.mrf.mxu0
      %v1966 = vpop.f32.mrf.mxu0
      %v1967 = vadd.f32 0.0, %v1966
      %v1968 = vpop.f32.mrf.mxu0
      %1969 = vmatprep.mubr.bf16.mxu0 0
      %1970 = vmatmul.mubr.bf16.gmra.mxu0 %v1735
      %v1971 = vpop.f32.mrf.mxu0
      %v1972 = vadd.f32 0.0, %v1971
      %v1973 = vpop.f32.mrf.mxu0
      %v1974 = vpop.f32.mrf.mxu0
      %v1975 = vadd.f32 0.0, %v1974
      %v1976 = vpop.f32.mrf.mxu0
      %1977 = vdwg.mxu0
      %v1978 = vadd.f32 %v1646, %v1836
      %v1979 = vadd.f32 %v1647, %v1839
      %v1980 = vadd.f32 %v1648, %v1844
      %v1981 = vadd.f32 %v1649, %v1847
      %v1982 = vadd.f32 %v1650, %v1852
      %v1983 = vadd.f32 %v1651, %v1855
      %v1984 = vadd.f32 %v1652, %v1860
      %v1985 = vadd.f32 %v1653, %v1863
      %v1986 = vadd.f32 %v1654, %v1868
      %v1987 = vadd.f32 %v1655, %v1871
      %v1988 = vadd.f32 %v1656, %v1876
      %v1989 = vadd.f32 %v1657, %v1879
      %v1990 = vadd.f32 %v1658, %v1884
      %v1991 = vadd.f32 %v1659, %v1887
      %v1992 = vadd.f32 %v1660, %v1892
      %v1993 = vadd.f32 %v1661, %v1895
      %v1994 = vadd.f32 %v1662, %v1900
      %v1995 = vadd.f32 %v1663, %v1903
      %v1996 = vadd.f32 %v1664, %v1908
      %v1997 = vadd.f32 %v1665, %v1911
      %v1998 = vadd.f32 %v1666, %v1916
      %v1999 = vadd.f32 %v1667, %v1919
      %v2000 = vadd.f32 %v1668, %v1924
      %v2001 = vadd.f32 %v1669, %v1927
      %v2002 = vadd.f32 %v1670, %v1932
      %v2003 = vadd.f32 %v1671, %v1935
      %v2004 = vadd.f32 %v1672, %v1940
      %v2005 = vadd.f32 %v1673, %v1943
      %v2006 = vadd.f32 %v1674, %v1948
      %v2007 = vadd.f32 %v1675, %v1951
      %v2008 = vadd.f32 %v1676, %v1956
      %v2009 = vadd.f32 %v1677, %v1959
      %v2010 = vadd.f32 %v1678, %v1964
      %v2011 = vadd.f32 %v1679, %v1967
      %v2012 = vadd.f32 %v1680, %v1972
      %v2013 = vadd.f32 %v1681, %v1975
      %v2014 = vld [vmem:[#allocation2 + $0x14] sm:$0xff]
      %v2015 = vld [vmem:[#allocation2 + $0x1c] sm:$0xff]
      %v2016 = vld [vmem:[#allocation2 + $0x24] sm:$0xff]
      %v2017 = vld [vmem:[#allocation2 + $0x2c] sm:$0xff]
      %v2018 = vld [vmem:[#allocation2 + $0x34] sm:$0xff]
      %v2019 = vld [vmem:[#allocation2 + $0x3c] sm:$0xff]
      %v2020 = vld [vmem:[#allocation2 + $0x44] sm:$0xff]
      %v2021 = vld [vmem:[#allocation2 + $0x4c] sm:$0xff]
      %v2022 = vld [vmem:[#allocation2 + $0x54] sm:$0xff]
      %v2023 = vld [vmem:[#allocation2 + $0x5c] sm:$0xff]
      %v2024 = vld [vmem:[#allocation2 + $0x64] sm:$0xff]
      %v2025 = vld [vmem:[#allocation2 + $0x6c] sm:$0xff]
      %v2026 = vld [vmem:[#allocation2 + $0x74] sm:$0xff]
      %v2027 = vld [vmem:[#allocation2 + $0x7c] sm:$0xff]
      %v2028 = vld [vmem:[#allocation2 + $0x84] sm:$0xff]
      %v2029 = vld [vmem:[#allocation2 + $0x8c] sm:$0xff]
      %v2030 = vld [vmem:[#allocation2 + $0x94] sm:$0xff]
      %v2031 = vld [vmem:[#allocation2 + $0x9c] sm:$0xff]
      %v2032 = vld [vmem:[#allocation2 + $0xa4] sm:$0xff]
      %v2033 = vld [vmem:[#allocation2 + $0xac] sm:$0xff]
      %v2034 = vld [vmem:[#allocation2 + $0xb4] sm:$0xff]
      %v2035 = vld [vmem:[#allocation2 + $0xbc] sm:$0xff]
      %v2036 = vld [vmem:[#allocation2 + $0xc4] sm:$0xff]
      %v2037 = vld [vmem:[#allocation2 + $0xcc] sm:$0xff]
      %v2038 = vld [vmem:[#allocation2 + $0xd4] sm:$0xff]
      %v2039 = vld [vmem:[#allocation2 + $0xdc] sm:$0xff]
      %v2040 = vld [vmem:[#allocation2 + $0xe4] sm:$0xff]
      %v2041 = vld [vmem:[#allocation2 + $0xec] sm:$0xff]
      %v2042 = vld [vmem:[#allocation2 + $0xf4] sm:$0xff]
      %v2043 = vld [vmem:[#allocation2 + $0xfc] sm:$0xff]
      %v2044 = vld [vmem:[#allocation2 + $0x104] sm:$0xff]
      %v2045 = vld [vmem:[#allocation2 + $0x10c] sm:$0xff]
      %v2046 = vld [vmem:[#allocation2 + $0x114] sm:$0xff]
      %v2047 = vld [vmem:[#allocation2 + $0x11c] sm:$0xff]
      %v2048 = vld [vmem:[#allocation2 + $0x124] sm:$0xff]
      %v2049 = vld [vmem:[#allocation2 + $0x12c] sm:$0xff]
      %v2050 = vpack.c.bf16 %v2015, %v2014
      %v2051 = vpack.c.bf16 %v2017, %v2016
      %v2052 = vpack.c.bf16 %v2019, %v2018
      %v2053 = vpack.c.bf16 %v2021, %v2020
      %v2054 = vpack.c.bf16 %v2023, %v2022
      %v2055 = vpack.c.bf16 %v2025, %v2024
      %v2056 = vpack.c.bf16 %v2027, %v2026
      %v2057 = vpack.c.bf16 %v2029, %v2028
      %v2058 = vpack.c.bf16 %v2031, %v2030
      %v2059 = vpack.c.bf16 %v2033, %v2032
      %v2060 = vpack.c.bf16 %v2035, %v2034
      %v2061 = vpack.c.bf16 %v2037, %v2036
      %v2062 = vpack.c.bf16 %v2039, %v2038
      %v2063 = vpack.c.bf16 %v2041, %v2040
      %v2064 = vpack.c.bf16 %v2043, %v2042
      %v2065 = vpack.c.bf16 %v2045, %v2044
      %v2066 = vpack.c.bf16 %v2047, %v2046
      %v2067 = vpack.c.bf16 %v2049, %v2048
      %s2068 = scalar_lea.vmem %s2, 320
      %v2069 = vld [vmem:[%s2068] sm:$0xf]
      %v2070 = vld [vmem:[%s2068 + $0x4] sm:$0xf]
      %v2071 = vld [vmem:[%s2068 + $0x8] sm:$0xf]
      %v2072 = vld [vmem:[%s2068 + $0xc] sm:$0xf]
      %v2073 = vld [vmem:[%s2068 + $0x10] sm:$0xf]
      %v2074 = vld [vmem:[%s2068 + $0x14] sm:$0xf]
      %v2075 = vld [vmem:[%s2068 + $0x18] sm:$0xf]
      %v2076 = vld [vmem:[%s2068 + $0x1c] sm:$0xf]
      %v2077 = vld [vmem:[%s2068 + $0x20] sm:$0xf]
      %v2078 = vld [vmem:[%s2068 + $0x24] sm:$0xf]
      %v2079 = vld [vmem:[%s2068 + $0x28] sm:$0xf]
      %v2080 = vld [vmem:[%s2068 + $0x2c] sm:$0xf]
      %v2081 = vld [vmem:[%s2068 + $0x30] sm:$0xf]
      %v2082 = vld [vmem:[%s2068 + $0x34] sm:$0xf]
      %v2083 = vld [vmem:[%s2068 + $0x38] sm:$0xf]
      %v2084 = vld [vmem:[%s2068 + $0x3c] sm:$0xf]
      %v2101 = vunpack.c.l.b16 %v2069
      %v2102 = vunpack.c.l.b16 %v2070
      %v2103 = vunpack.c.l.b16 %v2071
      %v2104 = vunpack.c.l.b16 %v2072
      %v2105 = vunpack.c.l.b16 %v2073
      %v2106 = vunpack.c.l.b16 %v2074
      %v2107 = vunpack.c.l.b16 %v2075
      %v2108 = vunpack.c.l.b16 %v2076
      %v2109 = vunpack.c.l.b16 %v2077
      %v2110 = vunpack.c.l.b16 %v2078
      %v2111 = vunpack.c.l.b16 %v2079
      %v2112 = vunpack.c.l.b16 %v2080
      %v2113 = vunpack.c.l.b16 %v2081
      %v2114 = vunpack.c.l.b16 %v2082
      %v2115 = vunpack.c.l.b16 %v2083
      %v2116 = vunpack.c.l.b16 %v2084
      %v2117 = vpack.c.b16 %v2102, %v2101
      %v2118 = vpack.c.b16 %v2104, %v2103
      %v2119 = vpack.c.b16 %v2106, %v2105
      %v2120 = vpack.c.b16 %v2108, %v2107
      %v2121 = vpack.c.b16 %v2110, %v2109
      %v2122 = vpack.c.b16 %v2112, %v2111
      %v2123 = vpack.c.b16 %v2114, %v2113
      %v2124 = vpack.c.b16 %v2116, %v2115
      %2133 = vmatprep.subr.bf16.mxu0 0
      %2134 = vmatpush1.bf16.msra.mxu0 %v2124
      %2135 = vmatprep.subr.bf16.mxu0 0
      %2136 = vmatpush1.bf16.msra.mxu0 %v2123
      %2137 = vmatprep.subr.bf16.mxu0 0
      %2138 = vmatpush1.bf16.msra.mxu0 %v2122
      %2139 = vmatprep.subr.bf16.mxu0 0
      %2140 = vmatpush1.bf16.msra.mxu0 %v2121
      %2141 = vmatprep.subr.bf16.mxu0 0
      %2142 = vmatpush1.bf16.msra.mxu0 %v2120
      %2143 = vmatprep.subr.bf16.mxu0 0
      %2144 = vmatpush1.bf16.msra.mxu0 %v2119
      %2145 = vmatprep.subr.bf16.mxu0 0
      %2146 = vmatpush1.bf16.msra.mxu0 %v2118
      %2147 = vmatprep.subr.bf16.mxu0 0
      %2148 = vmatpush1.bf16.msra.mxu0 %v2117
      %2149 = vmatprep.subr.bf16.mxu0 0
      %2150 = vmatpush2.bf16.msra.mxu0 0
      %2151 = vmatprep.subr.bf16.mxu0 0
      %2152 = vmatpush2.bf16.msra.mxu0 0
      %2153 = vmatprep.subr.bf16.mxu0 0
      %2154 = vmatpush2.bf16.msra.mxu0 0
      %2155 = vmatprep.subr.bf16.mxu0 0
      %2156 = vmatpush2.bf16.msra.mxu0 0
      %2157 = vmatprep.subr.bf16.mxu0 0
      %2158 = vmatpush2.bf16.msra.mxu0 0
      %2159 = vmatprep.subr.bf16.mxu0 0
      %2160 = vmatpush2.bf16.msra.mxu0 0
      %2161 = vmatprep.subr.bf16.mxu0 0
      %2162 = vmatpush2.bf16.msra.mxu0 0
      %2163 = vmatprep.subr.bf16.mxu0 0
      %2164 = vmatpush2.bf16.msra.mxu0 0
      %2165 = vmatprep.mubr.bf16.mxu0 0
      %2166 = vmatmul.mubr.bf16.gmra.mxu0 %v2050
      %v2167 = vpop.f32.mrf.mxu0
      %v2168 = vadd.f32 0.0, %v2167
      %v2169 = vpop.f32.mrf.mxu0
      %v2170 = vpop.f32.mrf.mxu0
      %v2171 = vadd.f32 0.0, %v2170
      %v2172 = vpop.f32.mrf.mxu0
      %2173 = vmatprep.mubr.bf16.mxu0 0
      %2174 = vmatmul.mubr.bf16.gmra.mxu0 %v2051
      %v2175 = vpop.f32.mrf.mxu0
      %v2176 = vadd.f32 0.0, %v2175
      %v2177 = vpop.f32.mrf.mxu0
      %v2178 = vpop.f32.mrf.mxu0
      %v2179 = vadd.f32 0.0, %v2178
      %v2180 = vpop.f32.mrf.mxu0
      %2181 = vmatprep.mubr.bf16.mxu0 0
      %2182 = vmatmul.mubr.bf16.gmra.mxu0 %v2052
      %v2183 = vpop.f32.mrf.mxu0
      %v2184 = vadd.f32 0.0, %v2183
      %v2185 = vpop.f32.mrf.mxu0
      %v2186 = vpop.f32.mrf.mxu0
      %v2187 = vadd.f32 0.0, %v2186
      %v2188 = vpop.f32.mrf.mxu0
      %2189 = vmatprep.mubr.bf16.mxu0 0
      %2190 = vmatmul.mubr.bf16.gmra.mxu0 %v2053
      %v2191 = vpop.f32.mrf.mxu0
      %v2192 = vadd.f32 0.0, %v2191
      %v2193 = vpop.f32.mrf.mxu0
      %v2194 = vpop.f32.mrf.mxu0
      %v2195 = vadd.f32 0.0, %v2194
      %v2196 = vpop.f32.mrf.mxu0
      %2197 = vmatprep.mubr.bf16.mxu0 0
      %2198 = vmatmul.mubr.bf16.gmra.mxu0 %v2054
      %v2199 = vpop.f32.mrf.mxu0
      %v2200 = vadd.f32 0.0, %v2199
      %v2201 = vpop.f32.mrf.mxu0
      %v2202 = vpop.f32.mrf.mxu0
      %v2203 = vadd.f32 0.0, %v2202
      %v2204 = vpop.f32.mrf.mxu0
      %2205 = vmatprep.mubr.bf16.mxu0 0
      %2206 = vmatmul.mubr.bf16.gmra.mxu0 %v2055
      %v2207 = vpop.f32.mrf.mxu0
      %v2208 = vadd.f32 0.0, %v2207
      %v2209 = vpop.f32.mrf.mxu0
      %v2210 = vpop.f32.mrf.mxu0
      %v2211 = vadd.f32 0.0, %v2210
      %v2212 = vpop.f32.mrf.mxu0
      %2213 = vmatprep.mubr.bf16.mxu0 0
      %2214 = vmatmul.mubr.bf16.gmra.mxu0 %v2056
      %v2215 = vpop.f32.mrf.mxu0
      %v2216 = vadd.f32 0.0, %v2215
      %v2217 = vpop.f32.mrf.mxu0
      %v2218 = vpop.f32.mrf.mxu0
      %v2219 = vadd.f32 0.0, %v2218
      %v2220 = vpop.f32.mrf.mxu0
      %2221 = vmatprep.mubr.bf16.mxu0 0
      %2222 = vmatmul.mubr.bf16.gmra.mxu0 %v2057
      %v2223 = vpop.f32.mrf.mxu0
      %v2224 = vadd.f32 0.0, %v2223
      %v2225 = vpop.f32.mrf.mxu0
      %v2226 = vpop.f32.mrf.mxu0
      %v2227 = vadd.f32 0.0, %v2226
      %v2228 = vpop.f32.mrf.mxu0
      %2229 = vmatprep.mubr.bf16.mxu0 0
      %2230 = vmatmul.mubr.bf16.gmra.mxu0 %v2058
      %v2231 = vpop.f32.mrf.mxu0
      %v2232 = vadd.f32 0.0, %v2231
      %v2233 = vpop.f32.mrf.mxu0
      %v2234 = vpop.f32.mrf.mxu0
      %v2235 = vadd.f32 0.0, %v2234
      %v2236 = vpop.f32.mrf.mxu0
      %2237 = vmatprep.mubr.bf16.mxu0 0
      %2238 = vmatmul.mubr.bf16.gmra.mxu0 %v2059
      %v2239 = vpop.f32.mrf.mxu0
      %v2240 = vadd.f32 0.0, %v2239
      %v2241 = vpop.f32.mrf.mxu0
      %v2242 = vpop.f32.mrf.mxu0
      %v2243 = vadd.f32 0.0, %v2242
      %v2244 = vpop.f32.mrf.mxu0
      %2245 = vmatprep.mubr.bf16.mxu0 0
      %2246 = vmatmul.mubr.bf16.gmra.mxu0 %v2060
      %v2247 = vpop.f32.mrf.mxu0
      %v2248 = vadd.f32 0.0, %v2247
      %v2249 = vpop.f32.mrf.mxu0
      %v2250 = vpop.f32.mrf.mxu0
      %v2251 = vadd.f32 0.0, %v2250
      %v2252 = vpop.f32.mrf.mxu0
      %2253 = vmatprep.mubr.bf16.mxu0 0
      %2254 = vmatmul.mubr.bf16.gmra.mxu0 %v2061
      %v2255 = vpop.f32.mrf.mxu0
      %v2256 = vadd.f32 0.0, %v2255
      %v2257 = vpop.f32.mrf.mxu0
      %v2258 = vpop.f32.mrf.mxu0
      %v2259 = vadd.f32 0.0, %v2258
      %v2260 = vpop.f32.mrf.mxu0
      %2261 = vmatprep.mubr.bf16.mxu0 0
      %2262 = vmatmul.mubr.bf16.gmra.mxu0 %v2062
      %v2263 = vpop.f32.mrf.mxu0
      %v2264 = vadd.f32 0.0, %v2263
      %v2265 = vpop.f32.mrf.mxu0
      %v2266 = vpop.f32.mrf.mxu0
      %v2267 = vadd.f32 0.0, %v2266
      %v2268 = vpop.f32.mrf.mxu0
      %2269 = vmatprep.mubr.bf16.mxu0 0
      %2270 = vmatmul.mubr.bf16.gmra.mxu0 %v2063
      %v2271 = vpop.f32.mrf.mxu0
      %v2272 = vadd.f32 0.0, %v2271
      %v2273 = vpop.f32.mrf.mxu0
      %v2274 = vpop.f32.mrf.mxu0
      %v2275 = vadd.f32 0.0, %v2274
      %v2276 = vpop.f32.mrf.mxu0
      %2277 = vmatprep.mubr.bf16.mxu0 0
      %2278 = vmatmul.mubr.bf16.gmra.mxu0 %v2064
      %v2279 = vpop.f32.mrf.mxu0
      %v2280 = vadd.f32 0.0, %v2279
      %v2281 = vpop.f32.mrf.mxu0
      %v2282 = vpop.f32.mrf.mxu0
      %v2283 = vadd.f32 0.0, %v2282
      %v2284 = vpop.f32.mrf.mxu0
      %2285 = vmatprep.mubr.bf16.mxu0 0
      %2286 = vmatmul.mubr.bf16.gmra.mxu0 %v2065
      %v2287 = vpop.f32.mrf.mxu0
      %v2288 = vadd.f32 0.0, %v2287
      %v2289 = vpop.f32.mrf.mxu0
      %v2290 = vpop.f32.mrf.mxu0
      %v2291 = vadd.f32 0.0, %v2290
      %v2292 = vpop.f32.mrf.mxu0
      %2293 = vmatprep.mubr.bf16.mxu0 0
      %2294 = vmatmul.mubr.bf16.gmra.mxu0 %v2066
      %v2295 = vpop.f32.mrf.mxu0
      %v2296 = vadd.f32 0.0, %v2295
      %v2297 = vpop.f32.mrf.mxu0
      %v2298 = vpop.f32.mrf.mxu0
      %v2299 = vadd.f32 0.0, %v2298
      %v2300 = vpop.f32.mrf.mxu0
      %2301 = vmatprep.mubr.bf16.mxu0 0
      %2302 = vmatmul.mubr.bf16.gmra.mxu0 %v2067
      %v2303 = vpop.f32.mrf.mxu0
      %v2304 = vadd.f32 0.0, %v2303
      %v2305 = vpop.f32.mrf.mxu0
      %v2306 = vpop.f32.mrf.mxu0
      %v2307 = vadd.f32 0.0, %v2306
      %v2308 = vpop.f32.mrf.mxu0
      %2309 = vdwg.mxu0
      %v2310 = vadd.f32 %v1978, %v2168
      %v2311 = vadd.f32 %v1979, %v2171
      %v2312 = vadd.f32 %v1980, %v2176
      %v2313 = vadd.f32 %v1981, %v2179
      %v2314 = vadd.f32 %v1982, %v2184
      %v2315 = vadd.f32 %v1983, %v2187
      %v2316 = vadd.f32 %v1984, %v2192
      %v2317 = vadd.f32 %v1985, %v2195
      %v2318 = vadd.f32 %v1986, %v2200
      %v2319 = vadd.f32 %v1987, %v2203
      %v2320 = vadd.f32 %v1988, %v2208
      %v2321 = vadd.f32 %v1989, %v2211
      %v2322 = vadd.f32 %v1990, %v2216
      %v2323 = vadd.f32 %v1991, %v2219
      %v2324 = vadd.f32 %v1992, %v2224
      %v2325 = vadd.f32 %v1993, %v2227
      %v2326 = vadd.f32 %v1994, %v2232
      %v2327 = vadd.f32 %v1995, %v2235
      %v2328 = vadd.f32 %v1996, %v2240
      %v2329 = vadd.f32 %v1997, %v2243
      %v2330 = vadd.f32 %v1998, %v2248
      %v2331 = vadd.f32 %v1999, %v2251
      %v2332 = vadd.f32 %v2000, %v2256
      %v2333 = vadd.f32 %v2001, %v2259
      %v2334 = vadd.f32 %v2002, %v2264
      %v2335 = vadd.f32 %v2003, %v2267
      %v2336 = vadd.f32 %v2004, %v2272
      %v2337 = vadd.f32 %v2005, %v2275
      %v2338 = vadd.f32 %v2006, %v2280
      %v2339 = vadd.f32 %v2007, %v2283
      %v2340 = vadd.f32 %v2008, %v2288
      %v2341 = vadd.f32 %v2009, %v2291
      %v2342 = vadd.f32 %v2010, %v2296
      %v2343 = vadd.f32 %v2011, %v2299
      %v2344 = vadd.f32 %v2012, %v2304
      %v2345 = vadd.f32 %v2013, %v2307
      %v2346 = vld [vmem:[#allocation2 + $0x24] sm:$0xff]
      %v2347 = vld [vmem:[#allocation2 + $0x2c] sm:$0xff]
      %v2348 = vld [vmem:[#allocation2 + $0x34] sm:$0xff]
      %v2349 = vld [vmem:[#allocation2 + $0x3c] sm:$0xff]
      %v2350 = vld [vmem:[#allocation2 + $0x44] sm:$0xff]
      %v2351 = vld [vmem:[#allocation2 + $0x4c] sm:$0xff]
      %v2352 = vld [vmem:[#allocation2 + $0x54] sm:$0xff]
      %v2353 = vld [vmem:[#allocation2 + $0x5c] sm:$0xff]
      %v2354 = vld [vmem:[#allocation2 + $0x64] sm:$0xff]
      %v2355 = vld [vmem:[#allocation2 + $0x6c] sm:$0xff]
      %v2356 = vld [vmem:[#allocation2 + $0x74] sm:$0xff]
      %v2357 = vld [vmem:[#allocation2 + $0x7c] sm:$0xff]
      %v2358 = vld [vmem:[#allocation2 + $0x84] sm:$0xff]
      %v2359 = vld [vmem:[#allocation2 + $0x8c] sm:$0xff]
      %v2360 = vld [vmem:[#allocation2 + $0x94] sm:$0xff]
      %v2361 = vld [vmem:[#allocation2 + $0x9c] sm:$0xff]
      %v2362 = vld [vmem:[#allocation2 + $0xa4] sm:$0xff]
      %v2363 = vld [vmem:[#allocation2 + $0xac] sm:$0xff]
      %v2364 = vld [vmem:[#allocation2 + $0xb4] sm:$0xff]
      %v2365 = vld [vmem:[#allocation2 + $0xbc] sm:$0xff]
      %v2366 = vld [vmem:[#allocation2 + $0xc4] sm:$0xff]
      %v2367 = vld [vmem:[#allocation2 + $0xcc] sm:$0xff]
      %v2368 = vld [vmem:[#allocation2 + $0xd4] sm:$0xff]
      %v2369 = vld [vmem:[#allocation2 + $0xdc] sm:$0xff]
      %v2370 = vld [vmem:[#allocation2 + $0xe4] sm:$0xff]
      %v2371 = vld [vmem:[#allocation2 + $0xec] sm:$0xff]
      %v2372 = vld [vmem:[#allocation2 + $0xf4] sm:$0xff]
      %v2373 = vld [vmem:[#allocation2 + $0xfc] sm:$0xff]
      %v2374 = vld [vmem:[#allocation2 + $0x104] sm:$0xff]
      %v2375 = vld [vmem:[#allocation2 + $0x10c] sm:$0xff]
      %v2376 = vld [vmem:[#allocation2 + $0x114] sm:$0xff]
      %v2377 = vld [vmem:[#allocation2 + $0x11c] sm:$0xff]
      %v2378 = vld [vmem:[#allocation2 + $0x124] sm:$0xff]
      %v2379 = vld [vmem:[#allocation2 + $0x12c] sm:$0xff]
      %v2380 = vld [vmem:[#allocation2 + $0x134] sm:$0xff]
      %v2381 = vld [vmem:[#allocation2 + $0x13c] sm:$0xff]
      %v2382 = vpack.c.bf16 %v2347, %v2346
      %v2383 = vpack.c.bf16 %v2349, %v2348
      %v2384 = vpack.c.bf16 %v2351, %v2350
      %v2385 = vpack.c.bf16 %v2353, %v2352
      %v2386 = vpack.c.bf16 %v2355, %v2354
      %v2387 = vpack.c.bf16 %v2357, %v2356
      %v2388 = vpack.c.bf16 %v2359, %v2358
      %v2389 = vpack.c.bf16 %v2361, %v2360
      %v2390 = vpack.c.bf16 %v2363, %v2362
      %v2391 = vpack.c.bf16 %v2365, %v2364
      %v2392 = vpack.c.bf16 %v2367, %v2366
      %v2393 = vpack.c.bf16 %v2369, %v2368
      %v2394 = vpack.c.bf16 %v2371, %v2370
      %v2395 = vpack.c.bf16 %v2373, %v2372
      %v2396 = vpack.c.bf16 %v2375, %v2374
      %v2397 = vpack.c.bf16 %v2377, %v2376
      %v2398 = vpack.c.bf16 %v2379, %v2378
      %v2399 = vpack.c.bf16 %v2381, %v2380
      %s2400 = scalar_lea.vmem %s2, 384
      %v2401 = vld [vmem:[%s2400] sm:$0xf]
      %v2402 = vld [vmem:[%s2400 + $0x4] sm:$0xf]
      %v2403 = vld [vmem:[%s2400 + $0x8] sm:$0xf]
      %v2404 = vld [vmem:[%s2400 + $0xc] sm:$0xf]
      %v2405 = vld [vmem:[%s2400 + $0x10] sm:$0xf]
      %v2406 = vld [vmem:[%s2400 + $0x14] sm:$0xf]
      %v2407 = vld [vmem:[%s2400 + $0x18] sm:$0xf]
      %v2408 = vld [vmem:[%s2400 + $0x1c] sm:$0xf]
      %v2409 = vld [vmem:[%s2400 + $0x20] sm:$0xf]
      %v2410 = vld [vmem:[%s2400 + $0x24] sm:$0xf]
      %v2411 = vld [vmem:[%s2400 + $0x28] sm:$0xf]
      %v2412 = vld [vmem:[%s2400 + $0x2c] sm:$0xf]
      %v2413 = vld [vmem:[%s2400 + $0x30] sm:$0xf]
      %v2414 = vld [vmem:[%s2400 + $0x34] sm:$0xf]
      %v2415 = vld [vmem:[%s2400 + $0x38] sm:$0xf]
      %v2416 = vld [vmem:[%s2400 + $0x3c] sm:$0xf]
      %v2433 = vunpack.c.l.b16 %v2401
      %v2434 = vunpack.c.l.b16 %v2402
      %v2435 = vunpack.c.l.b16 %v2403
      %v2436 = vunpack.c.l.b16 %v2404
      %v2437 = vunpack.c.l.b16 %v2405
      %v2438 = vunpack.c.l.b16 %v2406
      %v2439 = vunpack.c.l.b16 %v2407
      %v2440 = vunpack.c.l.b16 %v2408
      %v2441 = vunpack.c.l.b16 %v2409
      %v2442 = vunpack.c.l.b16 %v2410
      %v2443 = vunpack.c.l.b16 %v2411
      %v2444 = vunpack.c.l.b16 %v2412
      %v2445 = vunpack.c.l.b16 %v2413
      %v2446 = vunpack.c.l.b16 %v2414
      %v2447 = vunpack.c.l.b16 %v2415
      %v2448 = vunpack.c.l.b16 %v2416
      %v2449 = vpack.c.b16 %v2434, %v2433
      %v2450 = vpack.c.b16 %v2436, %v2435
      %v2451 = vpack.c.b16 %v2438, %v2437
      %v2452 = vpack.c.b16 %v2440, %v2439
      %v2453 = vpack.c.b16 %v2442, %v2441
      %v2454 = vpack.c.b16 %v2444, %v2443
      %v2455 = vpack.c.b16 %v2446, %v2445
      %v2456 = vpack.c.b16 %v2448, %v2447
      %2465 = vmatprep.subr.bf16.mxu0 0
      %2466 = vmatpush1.bf16.msra.mxu0 %v2456
      %2467 = vmatprep.subr.bf16.mxu0 0
      %2468 = vmatpush1.bf16.msra.mxu0 %v2455
      %2469 = vmatprep.subr.bf16.mxu0 0
      %2470 = vmatpush1.bf16.msra.mxu0 %v2454
      %2471 = vmatprep.subr.bf16.mxu0 0
      %2472 = vmatpush1.bf16.msra.mxu0 %v2453
      %2473 = vmatprep.subr.bf16.mxu0 0
      %2474 = vmatpush1.bf16.msra.mxu0 %v2452
      %2475 = vmatprep.subr.bf16.mxu0 0
      %2476 = vmatpush1.bf16.msra.mxu0 %v2451
      %2477 = vmatprep.subr.bf16.mxu0 0
      %2478 = vmatpush1.bf16.msra.mxu0 %v2450
      %2479 = vmatprep.subr.bf16.mxu0 0
      %2480 = vmatpush1.bf16.msra.mxu0 %v2449
      %2481 = vmatprep.subr.bf16.mxu0 0
      %2482 = vmatpush2.bf16.msra.mxu0 0
      %2483 = vmatprep.subr.bf16.mxu0 0
      %2484 = vmatpush2.bf16.msra.mxu0 0
      %2485 = vmatprep.subr.bf16.mxu0 0
      %2486 = vmatpush2.bf16.msra.mxu0 0
      %2487 = vmatprep.subr.bf16.mxu0 0
      %2488 = vmatpush2.bf16.msra.mxu0 0
      %2489 = vmatprep.subr.bf16.mxu0 0
      %2490 = vmatpush2.bf16.msra.mxu0 0
      %2491 = vmatprep.subr.bf16.mxu0 0
      %2492 = vmatpush2.bf16.msra.mxu0 0
      %2493 = vmatprep.subr.bf16.mxu0 0
      %2494 = vmatpush2.bf16.msra.mxu0 0
      %2495 = vmatprep.subr.bf16.mxu0 0
      %2496 = vmatpush2.bf16.msra.mxu0 0
      %2497 = vmatprep.mubr.bf16.mxu0 0
      %2498 = vmatmul.mubr.bf16.gmra.mxu0 %v2382
      %v2499 = vpop.f32.mrf.mxu0
      %v2500 = vadd.f32 0.0, %v2499
      %v2501 = vpop.f32.mrf.mxu0
      %v2502 = vpop.f32.mrf.mxu0
      %v2503 = vadd.f32 0.0, %v2502
      %v2504 = vpop.f32.mrf.mxu0
      %2505 = vmatprep.mubr.bf16.mxu0 0
      %2506 = vmatmul.mubr.bf16.gmra.mxu0 %v2383
      %v2507 = vpop.f32.mrf.mxu0
      %v2508 = vadd.f32 0.0, %v2507
      %v2509 = vpop.f32.mrf.mxu0
      %v2510 = vpop.f32.mrf.mxu0
      %v2511 = vadd.f32 0.0, %v2510
      %v2512 = vpop.f32.mrf.mxu0
      %2513 = vmatprep.mubr.bf16.mxu0 0
      %2514 = vmatmul.mubr.bf16.gmra.mxu0 %v2384
      %v2515 = vpop.f32.mrf.mxu0
      %v2516 = vadd.f32 0.0, %v2515
      %v2517 = vpop.f32.mrf.mxu0
      %v2518 = vpop.f32.mrf.mxu0
      %v2519 = vadd.f32 0.0, %v2518
      %v2520 = vpop.f32.mrf.mxu0
      %2521 = vmatprep.mubr.bf16.mxu0 0
      %2522 = vmatmul.mubr.bf16.gmra.mxu0 %v2385
      %v2523 = vpop.f32.mrf.mxu0
      %v2524 = vadd.f32 0.0, %v2523
      %v2525 = vpop.f32.mrf.mxu0
      %v2526 = vpop.f32.mrf.mxu0
      %v2527 = vadd.f32 0.0, %v2526
      %v2528 = vpop.f32.mrf.mxu0
      %2529 = vmatprep.mubr.bf16.mxu0 0
      %2530 = vmatmul.mubr.bf16.gmra.mxu0 %v2386
      %v2531 = vpop.f32.mrf.mxu0
      %v2532 = vadd.f32 0.0, %v2531
      %v2533 = vpop.f32.mrf.mxu0
      %v2534 = vpop.f32.mrf.mxu0
      %v2535 = vadd.f32 0.0, %v2534
      %v2536 = vpop.f32.mrf.mxu0
      %2537 = vmatprep.mubr.bf16.mxu0 0
      %2538 = vmatmul.mubr.bf16.gmra.mxu0 %v2387
      %v2539 = vpop.f32.mrf.mxu0
      %v2540 = vadd.f32 0.0, %v2539
      %v2541 = vpop.f32.mrf.mxu0
      %v2542 = vpop.f32.mrf.mxu0
      %v2543 = vadd.f32 0.0, %v2542
      %v2544 = vpop.f32.mrf.mxu0
      %2545 = vmatprep.mubr.bf16.mxu0 0
      %2546 = vmatmul.mubr.bf16.gmra.mxu0 %v2388
      %v2547 = vpop.f32.mrf.mxu0
      %v2548 = vadd.f32 0.0, %v2547
      %v2549 = vpop.f32.mrf.mxu0
      %v2550 = vpop.f32.mrf.mxu0
      %v2551 = vadd.f32 0.0, %v2550
      %v2552 = vpop.f32.mrf.mxu0
      %2553 = vmatprep.mubr.bf16.mxu0 0
      %2554 = vmatmul.mubr.bf16.gmra.mxu0 %v2389
      %v2555 = vpop.f32.mrf.mxu0
      %v2556 = vadd.f32 0.0, %v2555
      %v2557 = vpop.f32.mrf.mxu0
      %v2558 = vpop.f32.mrf.mxu0
      %v2559 = vadd.f32 0.0, %v2558
      %v2560 = vpop.f32.mrf.mxu0
      %2561 = vmatprep.mubr.bf16.mxu0 0
      %2562 = vmatmul.mubr.bf16.gmra.mxu0 %v2390
      %v2563 = vpop.f32.mrf.mxu0
      %v2564 = vadd.f32 0.0, %v2563
      %v2565 = vpop.f32.mrf.mxu0
      %v2566 = vpop.f32.mrf.mxu0
      %v2567 = vadd.f32 0.0, %v2566
      %v2568 = vpop.f32.mrf.mxu0
      %2569 = vmatprep.mubr.bf16.mxu0 0
      %2570 = vmatmul.mubr.bf16.gmra.mxu0 %v2391
      %v2571 = vpop.f32.mrf.mxu0
      %v2572 = vadd.f32 0.0, %v2571
      %v2573 = vpop.f32.mrf.mxu0
      %v2574 = vpop.f32.mrf.mxu0
      %v2575 = vadd.f32 0.0, %v2574
      %v2576 = vpop.f32.mrf.mxu0
      %2577 = vmatprep.mubr.bf16.mxu0 0
      %2578 = vmatmul.mubr.bf16.gmra.mxu0 %v2392
      %v2579 = vpop.f32.mrf.mxu0
      %v2580 = vadd.f32 0.0, %v2579
      %v2581 = vpop.f32.mrf.mxu0
      %v2582 = vpop.f32.mrf.mxu0
      %v2583 = vadd.f32 0.0, %v2582
      %v2584 = vpop.f32.mrf.mxu0
      %2585 = vmatprep.mubr.bf16.mxu0 0
      %2586 = vmatmul.mubr.bf16.gmra.mxu0 %v2393
      %v2587 = vpop.f32.mrf.mxu0
      %v2588 = vadd.f32 0.0, %v2587
      %v2589 = vpop.f32.mrf.mxu0
      %v2590 = vpop.f32.mrf.mxu0
      %v2591 = vadd.f32 0.0, %v2590
      %v2592 = vpop.f32.mrf.mxu0
      %2593 = vmatprep.mubr.bf16.mxu0 0
      %2594 = vmatmul.mubr.bf16.gmra.mxu0 %v2394
      %v2595 = vpop.f32.mrf.mxu0
      %v2596 = vadd.f32 0.0, %v2595
      %v2597 = vpop.f32.mrf.mxu0
      %v2598 = vpop.f32.mrf.mxu0
      %v2599 = vadd.f32 0.0, %v2598
      %v2600 = vpop.f32.mrf.mxu0
      %2601 = vmatprep.mubr.bf16.mxu0 0
      %2602 = vmatmul.mubr.bf16.gmra.mxu0 %v2395
      %v2603 = vpop.f32.mrf.mxu0
      %v2604 = vadd.f32 0.0, %v2603
      %v2605 = vpop.f32.mrf.mxu0
      %v2606 = vpop.f32.mrf.mxu0
      %v2607 = vadd.f32 0.0, %v2606
      %v2608 = vpop.f32.mrf.mxu0
      %2609 = vmatprep.mubr.bf16.mxu0 0
      %2610 = vmatmul.mubr.bf16.gmra.mxu0 %v2396
      %v2611 = vpop.f32.mrf.mxu0
      %v2612 = vadd.f32 0.0, %v2611
      %v2613 = vpop.f32.mrf.mxu0
      %v2614 = vpop.f32.mrf.mxu0
      %v2615 = vadd.f32 0.0, %v2614
      %v2616 = vpop.f32.mrf.mxu0
      %2617 = vmatprep.mubr.bf16.mxu0 0
      %2618 = vmatmul.mubr.bf16.gmra.mxu0 %v2397
      %v2619 = vpop.f32.mrf.mxu0
      %v2620 = vadd.f32 0.0, %v2619
      %v2621 = vpop.f32.mrf.mxu0
      %v2622 = vpop.f32.mrf.mxu0
      %v2623 = vadd.f32 0.0, %v2622
      %v2624 = vpop.f32.mrf.mxu0
      %2625 = vmatprep.mubr.bf16.mxu0 0
      %2626 = vmatmul.mubr.bf16.gmra.mxu0 %v2398
      %v2627 = vpop.f32.mrf.mxu0
      %v2628 = vadd.f32 0.0, %v2627
      %v2629 = vpop.f32.mrf.mxu0
      %v2630 = vpop.f32.mrf.mxu0
      %v2631 = vadd.f32 0.0, %v2630
      %v2632 = vpop.f32.mrf.mxu0
      %2633 = vmatprep.mubr.bf16.mxu0 0
      %2634 = vmatmul.mubr.bf16.gmra.mxu0 %v2399
      %v2635 = vpop.f32.mrf.mxu0
      %v2636 = vadd.f32 0.0, %v2635
      %v2637 = vpop.f32.mrf.mxu0
      %v2638 = vpop.f32.mrf.mxu0
      %v2639 = vadd.f32 0.0, %v2638
      %v2640 = vpop.f32.mrf.mxu0
      %2641 = vdwg.mxu0
      %v2642 = vadd.f32 %v2310, %v2500
      %v2643 = vadd.f32 %v2311, %v2503
      %v2644 = vadd.f32 %v2312, %v2508
      %v2645 = vadd.f32 %v2313, %v2511
      %v2646 = vadd.f32 %v2314, %v2516
      %v2647 = vadd.f32 %v2315, %v2519
      %v2648 = vadd.f32 %v2316, %v2524
      %v2649 = vadd.f32 %v2317, %v2527
      %v2650 = vadd.f32 %v2318, %v2532
      %v2651 = vadd.f32 %v2319, %v2535
      %v2652 = vadd.f32 %v2320, %v2540
      %v2653 = vadd.f32 %v2321, %v2543
      %v2654 = vadd.f32 %v2322, %v2548
      %v2655 = vadd.f32 %v2323, %v2551
      %v2656 = vadd.f32 %v2324, %v2556
      %v2657 = vadd.f32 %v2325, %v2559
      %v2658 = vadd.f32 %v2326, %v2564
      %v2659 = vadd.f32 %v2327, %v2567
      %v2660 = vadd.f32 %v2328, %v2572
      %v2661 = vadd.f32 %v2329, %v2575
      %v2662 = vadd.f32 %v2330, %v2580
      %v2663 = vadd.f32 %v2331, %v2583
      %v2664 = vadd.f32 %v2332, %v2588
      %v2665 = vadd.f32 %v2333, %v2591
      %v2666 = vadd.f32 %v2334, %v2596
      %v2667 = vadd.f32 %v2335, %v2599
      %v2668 = vadd.f32 %v2336, %v2604
      %v2669 = vadd.f32 %v2337, %v2607
      %v2670 = vadd.f32 %v2338, %v2612
      %v2671 = vadd.f32 %v2339, %v2615
      %v2672 = vadd.f32 %v2340, %v2620
      %v2673 = vadd.f32 %v2341, %v2623
      %v2674 = vadd.f32 %v2342, %v2628
      %v2675 = vadd.f32 %v2343, %v2631
      %v2676 = vadd.f32 %v2344, %v2636
      %v2677 = vadd.f32 %v2345, %v2639
      %v2678 = vld [vmem:[#allocation2 + $0x25] sm:$0xff]
      %v2679 = vld [vmem:[#allocation2 + $0x2d] sm:$0xff]
      %v2680 = vld [vmem:[#allocation2 + $0x35] sm:$0xff]
      %v2681 = vld [vmem:[#allocation2 + $0x3d] sm:$0xff]
      %v2682 = vld [vmem:[#allocation2 + $0x45] sm:$0xff]
      %v2683 = vld [vmem:[#allocation2 + $0x4d] sm:$0xff]
      %v2684 = vld [vmem:[#allocation2 + $0x55] sm:$0xff]
      %v2685 = vld [vmem:[#allocation2 + $0x5d] sm:$0xff]
      %v2686 = vld [vmem:[#allocation2 + $0x65] sm:$0xff]
      %v2687 = vld [vmem:[#allocation2 + $0x6d] sm:$0xff]
      %v2688 = vld [vmem:[#allocation2 + $0x75] sm:$0xff]
      %v2689 = vld [vmem:[#allocation2 + $0x7d] sm:$0xff]
      %v2690 = vld [vmem:[#allocation2 + $0x85] sm:$0xff]
      %v2691 = vld [vmem:[#allocation2 + $0x8d] sm:$0xff]
      %v2692 = vld [vmem:[#allocation2 + $0x95] sm:$0xff]
      %v2693 = vld [vmem:[#allocation2 + $0x9d] sm:$0xff]
      %v2694 = vld [vmem:[#allocation2 + $0xa5] sm:$0xff]
      %v2695 = vld [vmem:[#allocation2 + $0xad] sm:$0xff]
      %v2696 = vld [vmem:[#allocation2 + $0xb5] sm:$0xff]
      %v2697 = vld [vmem:[#allocation2 + $0xbd] sm:$0xff]
      %v2698 = vld [vmem:[#allocation2 + $0xc5] sm:$0xff]
      %v2699 = vld [vmem:[#allocation2 + $0xcd] sm:$0xff]
      %v2700 = vld [vmem:[#allocation2 + $0xd5] sm:$0xff]
      %v2701 = vld [vmem:[#allocation2 + $0xdd] sm:$0xff]
      %v2702 = vld [vmem:[#allocation2 + $0xe5] sm:$0xff]
      %v2703 = vld [vmem:[#allocation2 + $0xed] sm:$0xff]
      %v2704 = vld [vmem:[#allocation2 + $0xf5] sm:$0xff]
      %v2705 = vld [vmem:[#allocation2 + $0xfd] sm:$0xff]
      %v2706 = vld [vmem:[#allocation2 + $0x105] sm:$0xff]
      %v2707 = vld [vmem:[#allocation2 + $0x10d] sm:$0xff]
      %v2708 = vld [vmem:[#allocation2 + $0x115] sm:$0xff]
      %v2709 = vld [vmem:[#allocation2 + $0x11d] sm:$0xff]
      %v2710 = vld [vmem:[#allocation2 + $0x125] sm:$0xff]
      %v2711 = vld [vmem:[#allocation2 + $0x12d] sm:$0xff]
      %v2712 = vld [vmem:[#allocation2 + $0x135] sm:$0xff]
      %v2713 = vld [vmem:[#allocation2 + $0x13d] sm:$0xff]
      %v2714 = vpack.c.bf16 %v2679, %v2678
      %v2715 = vpack.c.bf16 %v2681, %v2680
      %v2716 = vpack.c.bf16 %v2683, %v2682
      %v2717 = vpack.c.bf16 %v2685, %v2684
      %v2718 = vpack.c.bf16 %v2687, %v2686
      %v2719 = vpack.c.bf16 %v2689, %v2688
      %v2720 = vpack.c.bf16 %v2691, %v2690
      %v2721 = vpack.c.bf16 %v2693, %v2692
      %v2722 = vpack.c.bf16 %v2695, %v2694
      %v2723 = vpack.c.bf16 %v2697, %v2696
      %v2724 = vpack.c.bf16 %v2699, %v2698
      %v2725 = vpack.c.bf16 %v2701, %v2700
      %v2726 = vpack.c.bf16 %v2703, %v2702
      %v2727 = vpack.c.bf16 %v2705, %v2704
      %v2728 = vpack.c.bf16 %v2707, %v2706
      %v2729 = vpack.c.bf16 %v2709, %v2708
      %v2730 = vpack.c.bf16 %v2711, %v2710
      %v2731 = vpack.c.bf16 %v2713, %v2712
      %s2732 = scalar_lea.vmem %s2, 448
      %v2733 = vld [vmem:[%s2732] sm:$0xf]
      %v2734 = vld [vmem:[%s2732 + $0x4] sm:$0xf]
      %v2735 = vld [vmem:[%s2732 + $0x8] sm:$0xf]
      %v2736 = vld [vmem:[%s2732 + $0xc] sm:$0xf]
      %v2737 = vld [vmem:[%s2732 + $0x10] sm:$0xf]
      %v2738 = vld [vmem:[%s2732 + $0x14] sm:$0xf]
      %v2739 = vld [vmem:[%s2732 + $0x18] sm:$0xf]
      %v2740 = vld [vmem:[%s2732 + $0x1c] sm:$0xf]
      %v2741 = vld [vmem:[%s2732 + $0x20] sm:$0xf]
      %v2742 = vld [vmem:[%s2732 + $0x24] sm:$0xf]
      %v2743 = vld [vmem:[%s2732 + $0x28] sm:$0xf]
      %v2744 = vld [vmem:[%s2732 + $0x2c] sm:$0xf]
      %v2745 = vld [vmem:[%s2732 + $0x30] sm:$0xf]
      %v2746 = vld [vmem:[%s2732 + $0x34] sm:$0xf]
      %v2747 = vld [vmem:[%s2732 + $0x38] sm:$0xf]
      %v2748 = vld [vmem:[%s2732 + $0x3c] sm:$0xf]
      %v2765 = vunpack.c.l.b16 %v2733
      %v2766 = vunpack.c.l.b16 %v2734
      %v2767 = vunpack.c.l.b16 %v2735
      %v2768 = vunpack.c.l.b16 %v2736
      %v2769 = vunpack.c.l.b16 %v2737
      %v2770 = vunpack.c.l.b16 %v2738
      %v2771 = vunpack.c.l.b16 %v2739
      %v2772 = vunpack.c.l.b16 %v2740
      %v2773 = vunpack.c.l.b16 %v2741
      %v2774 = vunpack.c.l.b16 %v2742
      %v2775 = vunpack.c.l.b16 %v2743
      %v2776 = vunpack.c.l.b16 %v2744
      %v2777 = vunpack.c.l.b16 %v2745
      %v2778 = vunpack.c.l.b16 %v2746
      %v2779 = vunpack.c.l.b16 %v2747
      %v2780 = vunpack.c.l.b16 %v2748
      %v2781 = vpack.c.b16 %v2766, %v2765
      %v2782 = vpack.c.b16 %v2768, %v2767
      %v2783 = vpack.c.b16 %v2770, %v2769
      %v2784 = vpack.c.b16 %v2772, %v2771
      %v2785 = vpack.c.b16 %v2774, %v2773
      %v2786 = vpack.c.b16 %v2776, %v2775
      %v2787 = vpack.c.b16 %v2778, %v2777
      %v2788 = vpack.c.b16 %v2780, %v2779
      %2797 = vmatprep.subr.bf16.mxu0 0
      %2798 = vmatpush1.bf16.msra.mxu0 %v2788
      %2799 = vmatprep.subr.bf16.mxu0 0
      %2800 = vmatpush1.bf16.msra.mxu0 %v2787
      %2801 = vmatprep.subr.bf16.mxu0 0
      %2802 = vmatpush1.bf16.msra.mxu0 %v2786
      %2803 = vmatprep.subr.bf16.mxu0 0
      %2804 = vmatpush1.bf16.msra.mxu0 %v2785
      %2805 = vmatprep.subr.bf16.mxu0 0
      %2806 = vmatpush1.bf16.msra.mxu0 %v2784
      %2807 = vmatprep.subr.bf16.mxu0 0
      %2808 = vmatpush1.bf16.msra.mxu0 %v2783
      %2809 = vmatprep.subr.bf16.mxu0 0
      %2810 = vmatpush1.bf16.msra.mxu0 %v2782
      %2811 = vmatprep.subr.bf16.mxu0 0
      %2812 = vmatpush1.bf16.msra.mxu0 %v2781
      %2813 = vmatprep.subr.bf16.mxu0 0
      %2814 = vmatpush2.bf16.msra.mxu0 0
      %2815 = vmatprep.subr.bf16.mxu0 0
      %2816 = vmatpush2.bf16.msra.mxu0 0
      %2817 = vmatprep.subr.bf16.mxu0 0
      %2818 = vmatpush2.bf16.msra.mxu0 0
      %2819 = vmatprep.subr.bf16.mxu0 0
      %2820 = vmatpush2.bf16.msra.mxu0 0
      %2821 = vmatprep.subr.bf16.mxu0 0
      %2822 = vmatpush2.bf16.msra.mxu0 0
      %2823 = vmatprep.subr.bf16.mxu0 0
      %2824 = vmatpush2.bf16.msra.mxu0 0
      %2825 = vmatprep.subr.bf16.mxu0 0
      %2826 = vmatpush2.bf16.msra.mxu0 0
      %2827 = vmatprep.subr.bf16.mxu0 0
      %2828 = vmatpush2.bf16.msra.mxu0 0
      %2829 = vmatprep.mubr.bf16.mxu0 0
      %2830 = vmatmul.mubr.bf16.gmra.mxu0 %v2714
      %v2831 = vpop.f32.mrf.mxu0
      %v2832 = vadd.f32 0.0, %v2831
      %v2833 = vpop.f32.mrf.mxu0
      %v2834 = vpop.f32.mrf.mxu0
      %v2835 = vadd.f32 0.0, %v2834
      %v2836 = vpop.f32.mrf.mxu0
      %2837 = vmatprep.mubr.bf16.mxu0 0
      %2838 = vmatmul.mubr.bf16.gmra.mxu0 %v2715
      %v2839 = vpop.f32.mrf.mxu0
      %v2840 = vadd.f32 0.0, %v2839
      %v2841 = vpop.f32.mrf.mxu0
      %v2842 = vpop.f32.mrf.mxu0
      %v2843 = vadd.f32 0.0, %v2842
      %v2844 = vpop.f32.mrf.mxu0
      %2845 = vmatprep.mubr.bf16.mxu0 0
      %2846 = vmatmul.mubr.bf16.gmra.mxu0 %v2716
      %v2847 = vpop.f32.mrf.mxu0
      %v2848 = vadd.f32 0.0, %v2847
      %v2849 = vpop.f32.mrf.mxu0
      %v2850 = vpop.f32.mrf.mxu0
      %v2851 = vadd.f32 0.0, %v2850
      %v2852 = vpop.f32.mrf.mxu0
      %2853 = vmatprep.mubr.bf16.mxu0 0
      %2854 = vmatmul.mubr.bf16.gmra.mxu0 %v2717
      %v2855 = vpop.f32.mrf.mxu0
      %v2856 = vadd.f32 0.0, %v2855
      %v2857 = vpop.f32.mrf.mxu0
      %v2858 = vpop.f32.mrf.mxu0
      %v2859 = vadd.f32 0.0, %v2858
      %v2860 = vpop.f32.mrf.mxu0
      %2861 = vmatprep.mubr.bf16.mxu0 0
      %2862 = vmatmul.mubr.bf16.gmra.mxu0 %v2718
      %v2863 = vpop.f32.mrf.mxu0
      %v2864 = vadd.f32 0.0, %v2863
      %v2865 = vpop.f32.mrf.mxu0
      %v2866 = vpop.f32.mrf.mxu0
      %v2867 = vadd.f32 0.0, %v2866
      %v2868 = vpop.f32.mrf.mxu0
      %2869 = vmatprep.mubr.bf16.mxu0 0
      %2870 = vmatmul.mubr.bf16.gmra.mxu0 %v2719
      %v2871 = vpop.f32.mrf.mxu0
      %v2872 = vadd.f32 0.0, %v2871
      %v2873 = vpop.f32.mrf.mxu0
      %v2874 = vpop.f32.mrf.mxu0
      %v2875 = vadd.f32 0.0, %v2874
      %v2876 = vpop.f32.mrf.mxu0
      %2877 = vmatprep.mubr.bf16.mxu0 0
      %2878 = vmatmul.mubr.bf16.gmra.mxu0 %v2720
      %v2879 = vpop.f32.mrf.mxu0
      %v2880 = vadd.f32 0.0, %v2879
      %v2881 = vpop.f32.mrf.mxu0
      %v2882 = vpop.f32.mrf.mxu0
      %v2883 = vadd.f32 0.0, %v2882
      %v2884 = vpop.f32.mrf.mxu0
      %2885 = vmatprep.mubr.bf16.mxu0 0
      %2886 = vmatmul.mubr.bf16.gmra.mxu0 %v2721
      %v2887 = vpop.f32.mrf.mxu0
      %v2888 = vadd.f32 0.0, %v2887
      %v2889 = vpop.f32.mrf.mxu0
      %v2890 = vpop.f32.mrf.mxu0
      %v2891 = vadd.f32 0.0, %v2890
      %v2892 = vpop.f32.mrf.mxu0
      %2893 = vmatprep.mubr.bf16.mxu0 0
      %2894 = vmatmul.mubr.bf16.gmra.mxu0 %v2722
      %v2895 = vpop.f32.mrf.mxu0
      %v2896 = vadd.f32 0.0, %v2895
      %v2897 = vpop.f32.mrf.mxu0
      %v2898 = vpop.f32.mrf.mxu0
      %v2899 = vadd.f32 0.0, %v2898
      %v2900 = vpop.f32.mrf.mxu0
      %2901 = vmatprep.mubr.bf16.mxu0 0
      %2902 = vmatmul.mubr.bf16.gmra.mxu0 %v2723
      %v2903 = vpop.f32.mrf.mxu0
      %v2904 = vadd.f32 0.0, %v2903
      %v2905 = vpop.f32.mrf.mxu0
      %v2906 = vpop.f32.mrf.mxu0
      %v2907 = vadd.f32 0.0, %v2906
      %v2908 = vpop.f32.mrf.mxu0
      %2909 = vmatprep.mubr.bf16.mxu0 0
      %2910 = vmatmul.mubr.bf16.gmra.mxu0 %v2724
      %v2911 = vpop.f32.mrf.mxu0
      %v2912 = vadd.f32 0.0, %v2911
      %v2913 = vpop.f32.mrf.mxu0
      %v2914 = vpop.f32.mrf.mxu0
      %v2915 = vadd.f32 0.0, %v2914
      %v2916 = vpop.f32.mrf.mxu0
      %2917 = vmatprep.mubr.bf16.mxu0 0
      %2918 = vmatmul.mubr.bf16.gmra.mxu0 %v2725
      %v2919 = vpop.f32.mrf.mxu0
      %v2920 = vadd.f32 0.0, %v2919
      %v2921 = vpop.f32.mrf.mxu0
      %v2922 = vpop.f32.mrf.mxu0
      %v2923 = vadd.f32 0.0, %v2922
      %v2924 = vpop.f32.mrf.mxu0
      %2925 = vmatprep.mubr.bf16.mxu0 0
      %2926 = vmatmul.mubr.bf16.gmra.mxu0 %v2726
      %v2927 = vpop.f32.mrf.mxu0
      %v2928 = vadd.f32 0.0, %v2927
      %v2929 = vpop.f32.mrf.mxu0
      %v2930 = vpop.f32.mrf.mxu0
      %v2931 = vadd.f32 0.0, %v2930
      %v2932 = vpop.f32.mrf.mxu0
      %2933 = vmatprep.mubr.bf16.mxu0 0
      %2934 = vmatmul.mubr.bf16.gmra.mxu0 %v2727
      %v2935 = vpop.f32.mrf.mxu0
      %v2936 = vadd.f32 0.0, %v2935
      %v2937 = vpop.f32.mrf.mxu0
      %v2938 = vpop.f32.mrf.mxu0
      %v2939 = vadd.f32 0.0, %v2938
      %v2940 = vpop.f32.mrf.mxu0
      %2941 = vmatprep.mubr.bf16.mxu0 0
      %2942 = vmatmul.mubr.bf16.gmra.mxu0 %v2728
      %v2943 = vpop.f32.mrf.mxu0
      %v2944 = vadd.f32 0.0, %v2943
      %v2945 = vpop.f32.mrf.mxu0
      %v2946 = vpop.f32.mrf.mxu0
      %v2947 = vadd.f32 0.0, %v2946
      %v2948 = vpop.f32.mrf.mxu0
      %2949 = vmatprep.mubr.bf16.mxu0 0
      %2950 = vmatmul.mubr.bf16.gmra.mxu0 %v2729
      %v2951 = vpop.f32.mrf.mxu0
      %v2952 = vadd.f32 0.0, %v2951
      %v2953 = vpop.f32.mrf.mxu0
      %v2954 = vpop.f32.mrf.mxu0
      %v2955 = vadd.f32 0.0, %v2954
      %v2956 = vpop.f32.mrf.mxu0
      %2957 = vmatprep.mubr.bf16.mxu0 0
      %2958 = vmatmul.mubr.bf16.gmra.mxu0 %v2730
      %v2959 = vpop.f32.mrf.mxu0
      %v2960 = vadd.f32 0.0, %v2959
      %v2961 = vpop.f32.mrf.mxu0
      %v2962 = vpop.f32.mrf.mxu0
      %v2963 = vadd.f32 0.0, %v2962
      %v2964 = vpop.f32.mrf.mxu0
      %2965 = vmatprep.mubr.bf16.mxu0 0
      %2966 = vmatmul.mubr.bf16.gmra.mxu0 %v2731
      %v2967 = vpop.f32.mrf.mxu0
      %v2968 = vadd.f32 0.0, %v2967
      %v2969 = vpop.f32.mrf.mxu0
      %v2970 = vpop.f32.mrf.mxu0
      %v2971 = vadd.f32 0.0, %v2970
      %v2972 = vpop.f32.mrf.mxu0
      %2973 = vdwg.mxu0
      %v2974 = vadd.f32 %v2642, %v2832
      %v2975 = vadd.f32 %v2643, %v2835
      %v2976 = vadd.f32 %v2644, %v2840
      %v2977 = vadd.f32 %v2645, %v2843
      %v2978 = vadd.f32 %v2646, %v2848
      %v2979 = vadd.f32 %v2647, %v2851
      %v2980 = vadd.f32 %v2648, %v2856
      %v2981 = vadd.f32 %v2649, %v2859
      %v2982 = vadd.f32 %v2650, %v2864
      %v2983 = vadd.f32 %v2651, %v2867
      %v2984 = vadd.f32 %v2652, %v2872
      %v2985 = vadd.f32 %v2653, %v2875
      %v2986 = vadd.f32 %v2654, %v2880
      %v2987 = vadd.f32 %v2655, %v2883
      %v2988 = vadd.f32 %v2656, %v2888
      %v2989 = vadd.f32 %v2657, %v2891
      %v2990 = vadd.f32 %v2658, %v2896
      %v2991 = vadd.f32 %v2659, %v2899
      %v2992 = vadd.f32 %v2660, %v2904
      %v2993 = vadd.f32 %v2661, %v2907
      %v2994 = vadd.f32 %v2662, %v2912
      %v2995 = vadd.f32 %v2663, %v2915
      %v2996 = vadd.f32 %v2664, %v2920
      %v2997 = vadd.f32 %v2665, %v2923
      %v2998 = vadd.f32 %v2666, %v2928
      %v2999 = vadd.f32 %v2667, %v2931
      %v3000 = vadd.f32 %v2668, %v2936
      %v3001 = vadd.f32 %v2669, %v2939
      %v3002 = vadd.f32 %v2670, %v2944
      %v3003 = vadd.f32 %v2671, %v2947
      %v3004 = vadd.f32 %v2672, %v2952
      %v3005 = vadd.f32 %v2673, %v2955
      %v3006 = vadd.f32 %v2674, %v2960
      %v3007 = vadd.f32 %v2675, %v2963
      %v3008 = vadd.f32 %v2676, %v2968
      %v3009 = vadd.f32 %v2677, %v2971
      %v3010 = vld [vmem:[#allocation2 + $0x26] sm:$0xff]
      %v3011 = vld [vmem:[#allocation2 + $0x2e] sm:$0xff]
      %v3012 = vld [vmem:[#allocation2 + $0x36] sm:$0xff]
      %v3013 = vld [vmem:[#allocation2 + $0x3e] sm:$0xff]
      %v3014 = vld [vmem:[#allocation2 + $0x46] sm:$0xff]
      %v3015 = vld [vmem:[#allocation2 + $0x4e] sm:$0xff]
      %v3016 = vld [vmem:[#allocation2 + $0x56] sm:$0xff]
      %v3017 = vld [vmem:[#allocation2 + $0x5e] sm:$0xff]
      %v3018 = vld [vmem:[#allocation2 + $0x66] sm:$0xff]
      %v3019 = vld [vmem:[#allocation2 + $0x6e] sm:$0xff]
      %v3020 = vld [vmem:[#allocation2 + $0x76] sm:$0xff]
      %v3021 = vld [vmem:[#allocation2 + $0x7e] sm:$0xff]
      %v3022 = vld [vmem:[#allocation2 + $0x86] sm:$0xff]
      %v3023 = vld [vmem:[#allocation2 + $0x8e] sm:$0xff]
      %v3024 = vld [vmem:[#allocation2 + $0x96] sm:$0xff]
      %v3025 = vld [vmem:[#allocation2 + $0x9e] sm:$0xff]
      %v3026 = vld [vmem:[#allocation2 + $0xa6] sm:$0xff]
      %v3027 = vld [vmem:[#allocation2 + $0xae] sm:$0xff]
      %v3028 = vld [vmem:[#allocation2 + $0xb6] sm:$0xff]
      %v3029 = vld [vmem:[#allocation2 + $0xbe] sm:$0xff]
      %v3030 = vld [vmem:[#allocation2 + $0xc6] sm:$0xff]
      %v3031 = vld [vmem:[#allocation2 + $0xce] sm:$0xff]
      %v3032 = vld [vmem:[#allocation2 + $0xd6] sm:$0xff]
      %v3033 = vld [vmem:[#allocation2 + $0xde] sm:$0xff]
      %v3034 = vld [vmem:[#allocation2 + $0xe6] sm:$0xff]
      %v3035 = vld [vmem:[#allocation2 + $0xee] sm:$0xff]
      %v3036 = vld [vmem:[#allocation2 + $0xf6] sm:$0xff]
      %v3037 = vld [vmem:[#allocation2 + $0xfe] sm:$0xff]
      %v3038 = vld [vmem:[#allocation2 + $0x106] sm:$0xff]
      %v3039 = vld [vmem:[#allocation2 + $0x10e] sm:$0xff]
      %v3040 = vld [vmem:[#allocation2 + $0x116] sm:$0xff]
      %v3041 = vld [vmem:[#allocation2 + $0x11e] sm:$0xff]
      %v3042 = vld [vmem:[#allocation2 + $0x126] sm:$0xff]
      %v3043 = vld [vmem:[#allocation2 + $0x12e] sm:$0xff]
      %v3044 = vld [vmem:[#allocation2 + $0x136] sm:$0xff]
      %v3045 = vld [vmem:[#allocation2 + $0x13e] sm:$0xff]
      %v3046 = vpack.c.bf16 %v3011, %v3010
      %v3047 = vpack.c.bf16 %v3013, %v3012
      %v3048 = vpack.c.bf16 %v3015, %v3014
      %v3049 = vpack.c.bf16 %v3017, %v3016
      %v3050 = vpack.c.bf16 %v3019, %v3018
      %v3051 = vpack.c.bf16 %v3021, %v3020
      %v3052 = vpack.c.bf16 %v3023, %v3022
      %v3053 = vpack.c.bf16 %v3025, %v3024
      %v3054 = vpack.c.bf16 %v3027, %v3026
      %v3055 = vpack.c.bf16 %v3029, %v3028
      %v3056 = vpack.c.bf16 %v3031, %v3030
      %v3057 = vpack.c.bf16 %v3033, %v3032
      %v3058 = vpack.c.bf16 %v3035, %v3034
      %v3059 = vpack.c.bf16 %v3037, %v3036
      %v3060 = vpack.c.bf16 %v3039, %v3038
      %v3061 = vpack.c.bf16 %v3041, %v3040
      %v3062 = vpack.c.bf16 %v3043, %v3042
      %v3063 = vpack.c.bf16 %v3045, %v3044
      %s3064 = scalar_lea.vmem %s2, 512
      %v3065 = vld [vmem:[%s3064] sm:$0xf]
      %v3066 = vld [vmem:[%s3064 + $0x4] sm:$0xf]
      %v3067 = vld [vmem:[%s3064 + $0x8] sm:$0xf]
      %v3068 = vld [vmem:[%s3064 + $0xc] sm:$0xf]
      %v3069 = vld [vmem:[%s3064 + $0x10] sm:$0xf]
      %v3070 = vld [vmem:[%s3064 + $0x14] sm:$0xf]
      %v3071 = vld [vmem:[%s3064 + $0x18] sm:$0xf]
      %v3072 = vld [vmem:[%s3064 + $0x1c] sm:$0xf]
      %v3073 = vld [vmem:[%s3064 + $0x20] sm:$0xf]
      %v3074 = vld [vmem:[%s3064 + $0x24] sm:$0xf]
      %v3075 = vld [vmem:[%s3064 + $0x28] sm:$0xf]
      %v3076 = vld [vmem:[%s3064 + $0x2c] sm:$0xf]
      %v3077 = vld [vmem:[%s3064 + $0x30] sm:$0xf]
      %v3078 = vld [vmem:[%s3064 + $0x34] sm:$0xf]
      %v3079 = vld [vmem:[%s3064 + $0x38] sm:$0xf]
      %v3080 = vld [vmem:[%s3064 + $0x3c] sm:$0xf]
      %v3097 = vunpack.c.l.b16 %v3065
      %v3098 = vunpack.c.l.b16 %v3066
      %v3099 = vunpack.c.l.b16 %v3067
      %v3100 = vunpack.c.l.b16 %v3068
      %v3101 = vunpack.c.l.b16 %v3069
      %v3102 = vunpack.c.l.b16 %v3070
      %v3103 = vunpack.c.l.b16 %v3071
      %v3104 = vunpack.c.l.b16 %v3072
      %v3105 = vunpack.c.l.b16 %v3073
      %v3106 = vunpack.c.l.b16 %v3074
      %v3107 = vunpack.c.l.b16 %v3075
      %v3108 = vunpack.c.l.b16 %v3076
      %v3109 = vunpack.c.l.b16 %v3077
      %v3110 = vunpack.c.l.b16 %v3078
      %v3111 = vunpack.c.l.b16 %v3079
      %v3112 = vunpack.c.l.b16 %v3080
      %v3113 = vpack.c.b16 %v3098, %v3097
      %v3114 = vpack.c.b16 %v3100, %v3099
      %v3115 = vpack.c.b16 %v3102, %v3101
      %v3116 = vpack.c.b16 %v3104, %v3103
      %v3117 = vpack.c.b16 %v3106, %v3105
      %v3118 = vpack.c.b16 %v3108, %v3107
      %v3119 = vpack.c.b16 %v3110, %v3109
      %v3120 = vpack.c.b16 %v3112, %v3111
      %3129 = vmatprep.subr.bf16.mxu0 0
      %3130 = vmatpush1.bf16.msra.mxu0 %v3120
      %3131 = vmatprep.subr.bf16.mxu0 0
      %3132 = vmatpush1.bf16.msra.mxu0 %v3119
      %3133 = vmatprep.subr.bf16.mxu0 0
      %3134 = vmatpush1.bf16.msra.mxu0 %v3118
      %3135 = vmatprep.subr.bf16.mxu0 0
      %3136 = vmatpush1.bf16.msra.mxu0 %v3117
      %3137 = vmatprep.subr.bf16.mxu0 0
      %3138 = vmatpush1.bf16.msra.mxu0 %v3116
      %3139 = vmatprep.subr.bf16.mxu0 0
      %3140 = vmatpush1.bf16.msra.mxu0 %v3115
      %3141 = vmatprep.subr.bf16.mxu0 0
      %3142 = vmatpush1.bf16.msra.mxu0 %v3114
      %3143 = vmatprep.subr.bf16.mxu0 0
      %3144 = vmatpush1.bf16.msra.mxu0 %v3113
      %3145 = vmatprep.subr.bf16.mxu0 0
      %3146 = vmatpush2.bf16.msra.mxu0 0
      %3147 = vmatprep.subr.bf16.mxu0 0
      %3148 = vmatpush2.bf16.msra.mxu0 0
      %3149 = vmatprep.subr.bf16.mxu0 0
      %3150 = vmatpush2.bf16.msra.mxu0 0
      %3151 = vmatprep.subr.bf16.mxu0 0
      %3152 = vmatpush2.bf16.msra.mxu0 0
      %3153 = vmatprep.subr.bf16.mxu0 0
      %3154 = vmatpush2.bf16.msra.mxu0 0
      %3155 = vmatprep.subr.bf16.mxu0 0
      %3156 = vmatpush2.bf16.msra.mxu0 0
      %3157 = vmatprep.subr.bf16.mxu0 0
      %3158 = vmatpush2.bf16.msra.mxu0 0
      %3159 = vmatprep.subr.bf16.mxu0 0
      %3160 = vmatpush2.bf16.msra.mxu0 0
      %3161 = vmatprep.mubr.bf16.mxu0 0
      %3162 = vmatmul.mubr.bf16.gmra.mxu0 %v3046
      %v3163 = vpop.f32.mrf.mxu0
      %v3164 = vadd.f32 0.0, %v3163
      %v3165 = vpop.f32.mrf.mxu0
      %v3166 = vpop.f32.mrf.mxu0
      %v3167 = vadd.f32 0.0, %v3166
      %v3168 = vpop.f32.mrf.mxu0
      %3169 = vmatprep.mubr.bf16.mxu0 0
      %3170 = vmatmul.mubr.bf16.gmra.mxu0 %v3047
      %v3171 = vpop.f32.mrf.mxu0
      %v3172 = vadd.f32 0.0, %v3171
      %v3173 = vpop.f32.mrf.mxu0
      %v3174 = vpop.f32.mrf.mxu0
      %v3175 = vadd.f32 0.0, %v3174
      %v3176 = vpop.f32.mrf.mxu0
      %3177 = vmatprep.mubr.bf16.mxu0 0
      %3178 = vmatmul.mubr.bf16.gmra.mxu0 %v3048
      %v3179 = vpop.f32.mrf.mxu0
      %v3180 = vadd.f32 0.0, %v3179
      %v3181 = vpop.f32.mrf.mxu0
      %v3182 = vpop.f32.mrf.mxu0
      %v3183 = vadd.f32 0.0, %v3182
      %v3184 = vpop.f32.mrf.mxu0
      %3185 = vmatprep.mubr.bf16.mxu0 0
      %3186 = vmatmul.mubr.bf16.gmra.mxu0 %v3049
      %v3187 = vpop.f32.mrf.mxu0
      %v3188 = vadd.f32 0.0, %v3187
      %v3189 = vpop.f32.mrf.mxu0
      %v3190 = vpop.f32.mrf.mxu0
      %v3191 = vadd.f32 0.0, %v3190
      %v3192 = vpop.f32.mrf.mxu0
      %3193 = vmatprep.mubr.bf16.mxu0 0
      %3194 = vmatmul.mubr.bf16.gmra.mxu0 %v3050
      %v3195 = vpop.f32.mrf.mxu0
      %v3196 = vadd.f32 0.0, %v3195
      %v3197 = vpop.f32.mrf.mxu0
      %v3198 = vpop.f32.mrf.mxu0
      %v3199 = vadd.f32 0.0, %v3198
      %v3200 = vpop.f32.mrf.mxu0
      %3201 = vmatprep.mubr.bf16.mxu0 0
      %3202 = vmatmul.mubr.bf16.gmra.mxu0 %v3051
      %v3203 = vpop.f32.mrf.mxu0
      %v3204 = vadd.f32 0.0, %v3203
      %v3205 = vpop.f32.mrf.mxu0
      %v3206 = vpop.f32.mrf.mxu0
      %v3207 = vadd.f32 0.0, %v3206
      %v3208 = vpop.f32.mrf.mxu0
      %3209 = vmatprep.mubr.bf16.mxu0 0
      %3210 = vmatmul.mubr.bf16.gmra.mxu0 %v3052
      %v3211 = vpop.f32.mrf.mxu0
      %v3212 = vadd.f32 0.0, %v3211
      %v3213 = vpop.f32.mrf.mxu0
      %v3214 = vpop.f32.mrf.mxu0
      %v3215 = vadd.f32 0.0, %v3214
      %v3216 = vpop.f32.mrf.mxu0
      %3217 = vmatprep.mubr.bf16.mxu0 0
      %3218 = vmatmul.mubr.bf16.gmra.mxu0 %v3053
      %v3219 = vpop.f32.mrf.mxu0
      %v3220 = vadd.f32 0.0, %v3219
      %v3221 = vpop.f32.mrf.mxu0
      %v3222 = vpop.f32.mrf.mxu0
      %v3223 = vadd.f32 0.0, %v3222
      %v3224 = vpop.f32.mrf.mxu0
      %3225 = vmatprep.mubr.bf16.mxu0 0
      %3226 = vmatmul.mubr.bf16.gmra.mxu0 %v3054
      %v3227 = vpop.f32.mrf.mxu0
      %v3228 = vadd.f32 0.0, %v3227
      %v3229 = vpop.f32.mrf.mxu0
      %v3230 = vpop.f32.mrf.mxu0
      %v3231 = vadd.f32 0.0, %v3230
      %v3232 = vpop.f32.mrf.mxu0
      %3233 = vmatprep.mubr.bf16.mxu0 0
      %3234 = vmatmul.mubr.bf16.gmra.mxu0 %v3055
      %v3235 = vpop.f32.mrf.mxu0
      %v3236 = vadd.f32 0.0, %v3235
      %v3237 = vpop.f32.mrf.mxu0
      %v3238 = vpop.f32.mrf.mxu0
      %v3239 = vadd.f32 0.0, %v3238
      %v3240 = vpop.f32.mrf.mxu0
      %3241 = vmatprep.mubr.bf16.mxu0 0
      %3242 = vmatmul.mubr.bf16.gmra.mxu0 %v3056
      %v3243 = vpop.f32.mrf.mxu0
      %v3244 = vadd.f32 0.0, %v3243
      %v3245 = vpop.f32.mrf.mxu0
      %v3246 = vpop.f32.mrf.mxu0
      %v3247 = vadd.f32 0.0, %v3246
      %v3248 = vpop.f32.mrf.mxu0
      %3249 = vmatprep.mubr.bf16.mxu0 0
      %3250 = vmatmul.mubr.bf16.gmra.mxu0 %v3057
      %v3251 = vpop.f32.mrf.mxu0
      %v3252 = vadd.f32 0.0, %v3251
      %v3253 = vpop.f32.mrf.mxu0
      %v3254 = vpop.f32.mrf.mxu0
      %v3255 = vadd.f32 0.0, %v3254
      %v3256 = vpop.f32.mrf.mxu0
      %3257 = vmatprep.mubr.bf16.mxu0 0
      %3258 = vmatmul.mubr.bf16.gmra.mxu0 %v3058
      %v3259 = vpop.f32.mrf.mxu0
      %v3260 = vadd.f32 0.0, %v3259
      %v3261 = vpop.f32.mrf.mxu0
      %v3262 = vpop.f32.mrf.mxu0
      %v3263 = vadd.f32 0.0, %v3262
      %v3264 = vpop.f32.mrf.mxu0
      %3265 = vmatprep.mubr.bf16.mxu0 0
      %3266 = vmatmul.mubr.bf16.gmra.mxu0 %v3059
      %v3267 = vpop.f32.mrf.mxu0
      %v3268 = vadd.f32 0.0, %v3267
      %v3269 = vpop.f32.mrf.mxu0
      %v3270 = vpop.f32.mrf.mxu0
      %v3271 = vadd.f32 0.0, %v3270
      %v3272 = vpop.f32.mrf.mxu0
      %3273 = vmatprep.mubr.bf16.mxu0 0
      %3274 = vmatmul.mubr.bf16.gmra.mxu0 %v3060
      %v3275 = vpop.f32.mrf.mxu0
      %v3276 = vadd.f32 0.0, %v3275
      %v3277 = vpop.f32.mrf.mxu0
      %v3278 = vpop.f32.mrf.mxu0
      %v3279 = vadd.f32 0.0, %v3278
      %v3280 = vpop.f32.mrf.mxu0
      %3281 = vmatprep.mubr.bf16.mxu0 0
      %3282 = vmatmul.mubr.bf16.gmra.mxu0 %v3061
      %v3283 = vpop.f32.mrf.mxu0
      %v3284 = vadd.f32 0.0, %v3283
      %v3285 = vpop.f32.mrf.mxu0
      %v3286 = vpop.f32.mrf.mxu0
      %v3287 = vadd.f32 0.0, %v3286
      %v3288 = vpop.f32.mrf.mxu0
      %3289 = vmatprep.mubr.bf16.mxu0 0
      %3290 = vmatmul.mubr.bf16.gmra.mxu0 %v3062
      %v3291 = vpop.f32.mrf.mxu0
      %v3292 = vadd.f32 0.0, %v3291
      %v3293 = vpop.f32.mrf.mxu0
      %v3294 = vpop.f32.mrf.mxu0
      %v3295 = vadd.f32 0.0, %v3294
      %v3296 = vpop.f32.mrf.mxu0
      %3297 = vmatprep.mubr.bf16.mxu0 0
      %3298 = vmatmul.mubr.bf16.gmra.mxu0 %v3063
      %v3299 = vpop.f32.mrf.mxu0
      %v3300 = vadd.f32 0.0, %v3299
      %v3301 = vpop.f32.mrf.mxu0
      %v3302 = vpop.f32.mrf.mxu0
      %v3303 = vadd.f32 0.0, %v3302
      %v3304 = vpop.f32.mrf.mxu0
      %3305 = vdwg.mxu0
      %v3306 = vadd.f32 %v2974, %v3164
      %v3307 = vadd.f32 %v2975, %v3167
      %v3308 = vadd.f32 %v2976, %v3172
      %v3309 = vadd.f32 %v2977, %v3175
      %v3310 = vadd.f32 %v2978, %v3180
      %v3311 = vadd.f32 %v2979, %v3183
      %v3312 = vadd.f32 %v2980, %v3188
      %v3313 = vadd.f32 %v2981, %v3191
      %v3314 = vadd.f32 %v2982, %v3196
      %v3315 = vadd.f32 %v2983, %v3199
      %v3316 = vadd.f32 %v2984, %v3204
      %v3317 = vadd.f32 %v2985, %v3207
      %v3318 = vadd.f32 %v2986, %v3212
      %v3319 = vadd.f32 %v2987, %v3215
      %v3320 = vadd.f32 %v2988, %v3220
      %v3321 = vadd.f32 %v2989, %v3223
      %v3322 = vadd.f32 %v2990, %v3228
      %v3323 = vadd.f32 %v2991, %v3231
      %v3324 = vadd.f32 %v2992, %v3236
      %v3325 = vadd.f32 %v2993, %v3239
      %v3326 = vadd.f32 %v2994, %v3244
      %v3327 = vadd.f32 %v2995, %v3247
      %v3328 = vadd.f32 %v2996, %v3252
      %v3329 = vadd.f32 %v2997, %v3255
      %v3330 = vadd.f32 %v2998, %v3260
      %v3331 = vadd.f32 %v2999, %v3263
      %v3332 = vadd.f32 %v3000, %v3268
      %v3333 = vadd.f32 %v3001, %v3271
      %v3334 = vadd.f32 %v3002, %v3276
      %v3335 = vadd.f32 %v3003, %v3279
      %v3336 = vadd.f32 %v3004, %v3284
      %v3337 = vadd.f32 %v3005, %v3287
      %v3338 = vadd.f32 %v3006, %v3292
      %v3339 = vadd.f32 %v3007, %v3295
      %v3340 = vadd.f32 %v3008, %v3300
      %v3341 = vadd.f32 %v3009, %v3303
      %v3342 = vld [vmem:[%s3] sm:$0x1]
      %v3344 = vlaneseq
      %v3345 = vshrl.u32 %v3344, 7
      %v3346 = vsub.s32 0, %v3345
      %v3347 = vrot.slane %v3342, %v3346
      %v3349 = vadd.f32 %v3306, %v3347
      %v3350 = vadd.f32 %v3307, %v3347
      %v3351 = vadd.f32 %v3308, %v3347
      %v3352 = vadd.f32 %v3309, %v3347
      %v3353 = vadd.f32 %v3310, %v3347
      %v3354 = vadd.f32 %v3311, %v3347
      %v3355 = vadd.f32 %v3312, %v3347
      %v3356 = vadd.f32 %v3313, %v3347
      %v3357 = vadd.f32 %v3314, %v3347
      %v3358 = vadd.f32 %v3315, %v3347
      %v3359 = vadd.f32 %v3316, %v3347
      %v3360 = vadd.f32 %v3317, %v3347
      %v3361 = vadd.f32 %v3318, %v3347
      %v3362 = vadd.f32 %v3319, %v3347
      %v3363 = vadd.f32 %v3320, %v3347
      %v3364 = vadd.f32 %v3321, %v3347
      %v3365 = vadd.f32 %v3322, %v3347
      %v3366 = vadd.f32 %v3323, %v3347
      %v3367 = vadd.f32 %v3324, %v3347
      %v3368 = vadd.f32 %v3325, %v3347
      %v3369 = vadd.f32 %v3326, %v3347
      %v3370 = vadd.f32 %v3327, %v3347
      %v3371 = vadd.f32 %v3328, %v3347
      %v3372 = vadd.f32 %v3329, %v3347
      %v3373 = vadd.f32 %v3330, %v3347
      %v3374 = vadd.f32 %v3331, %v3347
      %v3375 = vadd.f32 %v3332, %v3347
      %v3376 = vadd.f32 %v3333, %v3347
      %v3377 = vadd.f32 %v3334, %v3347
      %v3378 = vadd.f32 %v3335, %v3347
      %v3379 = vadd.f32 %v3336, %v3347
      %v3380 = vadd.f32 %v3337, %v3347
      %v3381 = vadd.f32 %v3338, %v3347
      %v3382 = vadd.f32 %v3339, %v3347
      %v3383 = vadd.f32 %v3340, %v3347
      %v3384 = vadd.f32 %v3341, %v3347
      %3385 = vxpose.xlu0.b32.start [1/16] %v3349, 128
      %3386 = vxpose.xlu0.b32.cont [2/16] %v3350, 128
      %3387 = vxpose.xlu0.b32.cont [3/16] %v3351, 128
      %3388 = vxpose.xlu0.b32.cont [4/16] %v3352, 128
      %3389 = vxpose.xlu0.b32.cont [5/16] %v3353, 128
      %3390 = vxpose.xlu0.b32.cont [6/16] %v3354, 128
      %3391 = vxpose.xlu0.b32.cont [7/16] %v3355, 128
      %3392 = vxpose.xlu0.b32.cont [8/16] %v3356, 128
      %3393 = vxpose.xlu0.b32.cont [9/16] %v3357, 128
      %3394 = vxpose.xlu0.b32.cont [10/16] %v3358, 128
      %3395 = vxpose.xlu0.b32.cont [11/16] %v3359, 128
      %3396 = vxpose.xlu0.b32.cont [12/16] %v3360, 128
      %3397 = vxpose.xlu0.b32.cont [13/16] %v3361, 128
      %3398 = vxpose.xlu0.b32.cont [14/16] %v3362, 128
      %3399 = vxpose.xlu0.b32.cont [15/16] %v3363, 128
      %3400 = vxpose.xlu0.b32.end [16/16] %v3364, 128
      %v3401 = vpop.trf.xlu0
      %v3402 = vpop.trf.xlu0
      %v3403 = vpop.trf.xlu0
      %v3404 = vpop.trf.xlu0
      %v3405 = vpop.trf.xlu0
      %v3406 = vpop.trf.xlu0
      %v3407 = vpop.trf.xlu0
      %v3408 = vpop.trf.xlu0
      %v3409 = vpop.trf.xlu0
      %v3410 = vpop.trf.xlu0
      %v3411 = vpop.trf.xlu0
      %v3412 = vpop.trf.xlu0
      %v3413 = vpop.trf.xlu0
      %v3414 = vpop.trf.xlu0
      %v3415 = vpop.trf.xlu0
      %v3416 = vpop.trf.xlu0
      %3417 = vxpose.xlu0.b32.start [1/16] %v3365, 128
      %3418 = vxpose.xlu0.b32.cont [2/16] %v3366, 128
      %3419 = vxpose.xlu0.b32.cont [3/16] %v3367, 128
      %3420 = vxpose.xlu0.b32.cont [4/16] %v3368, 128
      %3421 = vxpose.xlu0.b32.cont [5/16] %v3369, 128
      %3422 = vxpose.xlu0.b32.cont [6/16] %v3370, 128
      %3423 = vxpose.xlu0.b32.cont [7/16] %v3371, 128
      %3424 = vxpose.xlu0.b32.cont [8/16] %v3372, 128
      %3425 = vxpose.xlu0.b32.cont [9/16] %v3373, 128
      %3426 = vxpose.xlu0.b32.cont [10/16] %v3374, 128
      %3427 = vxpose.xlu0.b32.cont [11/16] %v3375, 128
      %3428 = vxpose.xlu0.b32.cont [12/16] %v3376, 128
      %3429 = vxpose.xlu0.b32.cont [13/16] %v3377, 128
      %3430 = vxpose.xlu0.b32.cont [14/16] %v3378, 128
      %3431 = vxpose.xlu0.b32.cont [15/16] %v3379, 128
      %3432 = vxpose.xlu0.b32.end [16/16] %v3380, 128
      %v3433 = vpop.trf.xlu0
      %v3434 = vpop.trf.xlu0
      %v3435 = vpop.trf.xlu0
      %v3436 = vpop.trf.xlu0
      %v3437 = vpop.trf.xlu0
      %v3438 = vpop.trf.xlu0
      %v3439 = vpop.trf.xlu0
      %v3440 = vpop.trf.xlu0
      %v3441 = vpop.trf.xlu0
      %v3442 = vpop.trf.xlu0
      %v3443 = vpop.trf.xlu0
      %v3444 = vpop.trf.xlu0
      %v3445 = vpop.trf.xlu0
      %v3446 = vpop.trf.xlu0
      %v3447 = vpop.trf.xlu0
      %v3448 = vpop.trf.xlu0
      %3449 = vxpose.xlu0.b32.start [1/16] %v3381, 128
      %3450 = vxpose.xlu0.b32.cont [2/16] %v3382, 128
      %3451 = vxpose.xlu0.b32.cont [3/16] %v3383, 128
      %3452 = vxpose.xlu0.b32.cont [4/16] %v3384, 128
      %3453 = vxpose.xlu0.b32.cont [5/16] 0.0, 128
      %3454 = vxpose.xlu0.b32.cont [6/16] 0.0, 128
      %3455 = vxpose.xlu0.b32.cont [7/16] 0.0, 128
      %3456 = vxpose.xlu0.b32.cont [8/16] 0.0, 128
      %3457 = vxpose.xlu0.b32.cont [9/16] 0.0, 128
      %3458 = vxpose.xlu0.b32.cont [10/16] 0.0, 128
      %3459 = vxpose.xlu0.b32.cont [11/16] 0.0, 128
      %3460 = vxpose.xlu0.b32.cont [12/16] 0.0, 128
      %3461 = vxpose.xlu0.b32.cont [13/16] 0.0, 128
      %3462 = vxpose.xlu0.b32.cont [14/16] 0.0, 128
      %3463 = vxpose.xlu0.b32.cont [15/16] 0.0, 128
      %3464 = vxpose.xlu0.b32.end [16/16] 0.0, 128
      %v3465 = vpop.trf.xlu0
      %v3466 = vpop.trf.xlu0
      %v3467 = vpop.trf.xlu0
      %v3468 = vpop.trf.xlu0
      %v3469 = vpop.trf.xlu0
      %v3470 = vpop.trf.xlu0
      %v3471 = vpop.trf.xlu0
      %v3472 = vpop.trf.xlu0
      %v3473 = vpop.trf.xlu0
      %v3474 = vpop.trf.xlu0
      %v3475 = vpop.trf.xlu0
      %v3476 = vpop.trf.xlu0
      %v3477 = vpop.trf.xlu0
      %v3478 = vpop.trf.xlu0
      %v3479 = vpop.trf.xlu0
      %v3480 = vpop.trf.xlu0
      %v3481 = vadd.f32 %v3401, 1.0
      %v3482 = vadd.f32 %v3433, 1.0
      %v3483 = vadd.f32 %v3465, 1.0
      %v3486 = vcombine.low %v3481, %v3482
      %v3488 = vmul.f32 %v425, %v3486
      %v3489 = vmul.f32 %v426, %v3483
      %v3493 = vcombine.high %v3401, %v3433
      %v3494 = vcombine.high %v3465, %v3465
      %v3497 = vadd.f32 %v3488, %v3493
      %v3498 = vadd.f32 %v3489, %v3494
      %3499 = vst [vmem:[%s217] sm:$0xff] %v3497
      %3500 = vst.msk [vmem:[%s217 + $0x8] sm:$0xf] %vm380, %v3498
      %p3501 = scmp.lt.s32.totalorder %s15, 1
      %s3502 = scalar_select %p3501, %s15, 1
      %s3503 = smul.addr %s3502, 3
      %s3504 = smul.addr %s3503, 4
      %s3505 = scalar_lea.vmem %s4, %s3504
      // Predicated region
      $region37: #{spade_forward.3} parent=35 // pred_check
        %p3506 = pneg %p127
      $region38: #{spade_forward.3} parent=35 // pred_check_branch
        %3508 = sbr.rel (%p3506) target = $region40
      $region39: #{spade_forward.3} parent=35 // pred_region
        _
      $region40: #{spade_forward.3} parent=35 // pred_fallthru
        _
    $region36: #{spade_forward.3} parent=5 // pred_fallthru
      _
    %p3509 = scmp.le.s32.totalorder 2, %s10
    // Predicated region
    $region41: #{spade_forward.3} parent=5 // pred_check
      %p3510 = pneg %p3509
    $region42: #{spade_forward.3} parent=5 // pred_check_branch
      %3512 = sbr.rel (%p3510) target = $region44
    $region43: #{spade_forward.3} parent=5 // pred_region
      %s3513 = ssub.s32 %s10, 2
      // Predicated region
      $region45: #{spade_forward.3} parent=43 // pred_check
        %p3514 = pneg %p133
      $region46: #{spade_forward.3} parent=43 // pred_check_branch
        %3516 = sbr.rel (%p3514) target = $region48
      $region47: #{spade_forward.3} parent=43 // pred_region
        %p3517 = scmp.lt.s32.totalorder %s16, 1
        %s3518 = scalar_select %p3517, %s16, 1
        %s3519 = smul.addr %s3518, 3
        %s3520 = smul.addr %s3519, 4
        %s3521 = scalar_lea.vmem %s4, %s3520
      $region48: #{spade_forward.3} parent=43 // pred_fallthru
        _
    $region44: #{spade_forward.3} parent=5 // pred_fallthru
      _
  $region6: #{spade_forward.3} parent=0 // loop_footer
    %s14 = sadd.s32 1, %s10
  $region7: #{spade_forward.3} parent=0 // loop_footer_branch
    %9 = sbr.rel target = $region3
  $region8: #{spade_forward.3} parent=0 // loop_exit
    _

</llo_original>
